<compile_context>
chip_gen: v7x
topology: tpu7x:2x2x1
jax: 0.10.0
libtpu: 0.0.40
codegen_flags: <defaults>
</compile_context>

<pallas_src>
import functools

import jax
import jax.numpy as jnp
from jax.experimental import pallas as pl
from jax.experimental.pallas import tpu as pltpu


def conv_relu_kernel(x_ref, w_ref, b_ref, o_ref, *, n_batch, k, img_w, chunk,
                     multi_step):
    # x_ref: (N, Ppad, Cin)   float32  -- NHWC-flattened input, zero-padded rows
    # w_ref: (K*K, Cin, Cout) bfloat16 -- per-tap weight matrices
    # b_ref: (1, Cout)        float32
    # o_ref: (N, chunk, Cout) float32  -- this grid step's slice of flat positions
    if multi_step:
        base = pl.multiple_of(pl.program_id(0) * chunk, chunk)
    else:
        base = 0                                    # single step: static indexing
    cout = o_ref.shape[-1]
    bias = b_ref[...]                               # (1, Cout) f32
    for n in range(n_batch):                        # small static batch
        acc = jnp.zeros((chunk, cout), jnp.float32)
        for kh in range(k):
            for kw in range(k):
                t = kh * k + kw
                off = kh * img_w + kw               # flat tap offset
                xs = x_ref[n, pl.ds(base + off, chunk), :]   # (chunk, Cin) f32
                acc += jnp.dot(xs.astype(jnp.bfloat16), w_ref[t],
                               preferred_element_type=jnp.float32)
        o_ref[n] = jnp.maximum(acc + bias, 0.0).astype(o_ref.dtype)


def _tensorcores_per_chip() -> int:
    # 7th-gen parts ("TPU7x", "TPU v7x", ...) have 2 TensorCores per chip;
    # v5e / v6e have 1.  Match the generation digit, not a fixed "v7" prefix.
    try:
        kind = jax.devices()[0].device_kind.lower()
    except Exception:
        return 1
    return 2 if "7" in kind else 1


def conv_relu(x, weight_oihw, bias, *, stride=1, padding=0):
    # Module defaults: kernel_size=3, stride=1, padding=0 (VALID conv).
    assert stride == 1 and padding == 0
    n, cin, h, w = x.shape
    cout, cin_w, kh_, kw_ = weight_oihw.shape
    assert cin == cin_w and kh_ == kw_
    k = kh_
    ho, wo = h - k + 1, w - k + 1
    p_img = h * w                                   # flat spatial positions / image

    # Split the flat-position axis across TensorCores on dual-TC chips;
    # single-TC chips keep everything in one grid step (minimum overhead).
    num_steps = _tensorcores_per_chip()
    if p_img % (8 * num_steps) != 0:
        num_steps = 1
    chunk = p_img // num_steps

    # Zero-pad the position axis by the largest tap offset so every in-kernel
    # window load stays in bounds (padded/invalid positions are sliced off).
    max_off = (k - 1) * w + (k - 1)
    p_pad = ((p_img + max_off + 7) // 8) * 8

    # --- wrapper-side packing: tiny and expansion-free (im2col is in-kernel) ---
    x_npc = jnp.transpose(x, (0, 2, 3, 1)).reshape(n, p_img, cin)   # NCHW -> N,(H*W),C
    x_npc = jnp.pad(x_npc, ((0, 0), (0, p_pad - p_img), (0, 0)))
    # weights: (Cout, Cin, K, K) -> (K*K, Cin, Cout), bf16 for the native MXU path.
    w_pack = jnp.transpose(weight_oihw, (2, 3, 1, 0)).reshape(k * k, cin, cout)
    w_pack = w_pack.astype(jnp.bfloat16)
    b2 = bias.reshape(1, cout).astype(jnp.float32)

    kernel = functools.partial(conv_relu_kernel, n_batch=n, k=k, img_w=w,
                               chunk=chunk, multi_step=num_steps > 1)

    out_flat = pl.pallas_call(
        kernel,
        out_shape=jax.ShapeDtypeStruct((n, p_img, cout), x.dtype),
        grid_spec=pltpu.PrefetchScalarGridSpec(
            num_scalar_prefetch=0,
            grid=(num_steps,),
            in_specs=[
                pl.BlockSpec((n, p_pad, cin), lambda j: (0, 0, 0)),
                pl.BlockSpec((k * k, cin, cout), lambda j: (0, 0, 0)),
                pl.BlockSpec((1, cout), lambda j: (0, 0)),
            ],
            out_specs=pl.BlockSpec((n, chunk, cout), lambda j: (0, j, 0)),
        ),
        compiler_params=pltpu.CompilerParams(
            dimension_semantics=("parallel",)),
    )(x_npc, w_pack, b2)

    # (N, H*W, Cout) -> (N, Cout, Ho, Wo): one small fused slice + transpose.
    out = out_flat.reshape(n, h, w, cout)[:, :ho, :wo, :]
    return jnp.transpose(out, (0, 3, 1, 2))


if __name__ == "__main__":
    key = jax.random.PRNGKey(0)
    kx, kw_, kb = jax.random.split(key, 3)

    N, CIN, COUT, H, W, K = 2, 4, 8, 16, 16, 3
    x = jax.random.normal(kx, (N, CIN, H, W), dtype=jnp.float32)

    # Deterministic parameter init (PyTorch Conv2d-style uniform bounds).
    fan_in = CIN * K * K
    bound = 1.0 / (fan_in ** 0.5)
    weight = jax.random.uniform(kw_, (COUT, CIN, K, K), jnp.float32, -bound, bound)
    bias = jax.random.uniform(kb, (COUT,), jnp.float32, -bound, bound)

    out = jax.block_until_ready(conv_relu(x, weight, bias))

    # Reference check (plain XLA conv + relu, full f32).
    ref = jax.nn.relu(
        jax.lax.conv_general_dilated(
            x, weight, window_strides=(1, 1), padding="VALID",
            dimension_numbers=("NCHW", "OIHW", "NCHW"),
        ) + bias.reshape(1, COUT, 1, 1)
    )
    assert out.shape == (N, COUT, H - K + 1, W - K + 1)
    # bf16 MXU operands with f32 accumulation -> relaxed tolerance vs the f32 ref.
    assert jnp.allclose(out, ref, rtol=5e-2, atol=5e-2), \
        float(jnp.max(jnp.abs(out - ref)))
    print("KERNEL_OK")
</pallas_src>

<mosaic_0001>
module attributes {stable_mosaic.version = 11 : i64} {
  func.func @conv_relu_kernel(%arg0: i32, %arg1: memref<2x296x4xf32, #tpu.memory_space<vmem>>, %arg2: memref<9x4x8xbf16, #tpu.memory_space<vmem>>, %arg3: memref<1x8xf32, #tpu.memory_space<vmem>>, %arg4: memref<2x256x8xf32, #tpu.memory_space<vmem>>) attributes {dimension_semantics = [#tpu.dimension_semantics<parallel>], iteration_bounds = array<i64: 1>, scalar_prefetch = 0 : i64, scratch_operands = 0 : i64, tpu.core_type = #tpu.core_type<tc>, window_params = [{pipeline_mode = #tpu.pipeline_mode<synchronous>, transform_indices = @transform_0, window_bounds = array<i64: 2, 296, 4>}, {pipeline_mode = #tpu.pipeline_mode<synchronous>, transform_indices = @transform_1, window_bounds = array<i64: 9, 4, 8>}, {pipeline_mode = #tpu.pipeline_mode<synchronous>, transform_indices = @transform_2, window_bounds = array<i64: 1, 8>}, {transform_indices = @transform_3, window_bounds = array<i64: 2, 256, 8>}]} {
    %c0 = arith.constant 0 : index
    %c0_0 = arith.constant 0 : index
    %0 = vector.load %arg3[%c0, %c0_0] : memref<1x8xf32, #tpu.memory_space<vmem>>, vector<1x8xf32>
    %cst = arith.constant 0.000000e+00 : f32
    %1 = vector.broadcast %cst : f32 to vector<256x8xf32>
    %c0_1 = arith.constant 0 : index
    %c0_2 = arith.constant 0 : index
    %c0_3 = arith.constant 0 : index
    %2 = vector.load %arg1[%c0_1, %c0_2, %c0_3] : memref<2x296x4xf32, #tpu.memory_space<vmem>>, vector<1x256x4xf32>
    %3 = vector.shape_cast %2 : vector<1x256x4xf32> to vector<256x4xf32>
    %4 = arith.truncf %3 : vector<256x4xf32> to vector<256x4xbf16>
    %c0_4 = arith.constant 0 : index
    %c0_5 = arith.constant 0 : index
    %c0_6 = arith.constant 0 : index
    %5 = vector.load %arg2[%c0_4, %c0_5, %c0_6] : memref<9x4x8xbf16, #tpu.memory_space<vmem>>, vector<1x4x8xbf16>
    %6 = vector.shape_cast %5 : vector<1x4x8xbf16> to vector<4x8xbf16>
    %cst_7 = arith.constant dense<0.000000e+00> : vector<256x8xf32>
    %7 = tpu.matmul %4, %6, %cst_7 {dimension_numbers = #tpu.dot_dimension_numbers<[1], [0], [0], [1], [0, 0, 1, 1], [], []>} : vector<256x4xbf16>, vector<4x8xbf16>, vector<256x8xf32> -> vector<256x8xf32>
    %8 = arith.addf %1, %7 : vector<256x8xf32>
    %c0_8 = arith.constant 0 : index
    %c1 = arith.constant 1 : index
    %c0_9 = arith.constant 0 : index
    %9 = vector.load %arg1[%c0_8, %c1, %c0_9] : memref<2x296x4xf32, #tpu.memory_space<vmem>>, vector<1x256x4xf32>
    %10 = vector.shape_cast %9 : vector<1x256x4xf32> to vector<256x4xf32>
    %11 = arith.truncf %10 : vector<256x4xf32> to vector<256x4xbf16>
    %c1_10 = arith.constant 1 : index
    %c0_11 = arith.constant 0 : index
    %c0_12 = arith.constant 0 : index
    %12 = vector.load %arg2[%c1_10, %c0_11, %c0_12] : memref<9x4x8xbf16, #tpu.memory_space<vmem>>, vector<1x4x8xbf16>
    %13 = vector.shape_cast %12 : vector<1x4x8xbf16> to vector<4x8xbf16>
    %cst_13 = arith.constant dense<0.000000e+00> : vector<256x8xf32>
    %14 = tpu.matmul %11, %13, %cst_13 {dimension_numbers = #tpu.dot_dimension_numbers<[1], [0], [0], [1], [0, 0, 1, 1], [], []>} : vector<256x4xbf16>, vector<4x8xbf16>, vector<256x8xf32> -> vector<256x8xf32>
    %15 = arith.addf %8, %14 : vector<256x8xf32>
    %c0_14 = arith.constant 0 : index
    %c2 = arith.constant 2 : index
    %c0_15 = arith.constant 0 : index
    %16 = vector.load %arg1[%c0_14, %c2, %c0_15] : memref<2x296x4xf32, #tpu.memory_space<vmem>>, vector<1x256x4xf32>
    %17 = vector.shape_cast %16 : vector<1x256x4xf32> to vector<256x4xf32>
    %18 = arith.truncf %17 : vector<256x4xf32> to vector<256x4xbf16>
    %c2_16 = arith.constant 2 : index
    %c0_17 = arith.constant 0 : index
    %c0_18 = arith.constant 0 : index
    %19 = vector.load %arg2[%c2_16, %c0_17, %c0_18] : memref<9x4x8xbf16, #tpu.memory_space<vmem>>, vector<1x4x8xbf16>
    %20 = vector.shape_cast %19 : vector<1x4x8xbf16> to vector<4x8xbf16>
    %cst_19 = arith.constant dense<0.000000e+00> : vector<256x8xf32>
    %21 = tpu.matmul %18, %20, %cst_19 {dimension_numbers = #tpu.dot_dimension_numbers<[1], [0], [0], [1], [0, 0, 1, 1], [], []>} : vector<256x4xbf16>, vector<4x8xbf16>, vector<256x8xf32> -> vector<256x8xf32>
    %22 = arith.addf %15, %21 : vector<256x8xf32>
    %c0_20 = arith.constant 0 : index
    %c16 = arith.constant 16 : index
    %c0_21 = arith.constant 0 : index
    %23 = vector.load %arg1[%c0_20, %c16, %c0_21] : memref<2x296x4xf32, #tpu.memory_space<vmem>>, vector<1x256x4xf32>
    %24 = vector.shape_cast %23 : vector<1x256x4xf32> to vector<256x4xf32>
    %25 = arith.truncf %24 : vector<256x4xf32> to vector<256x4xbf16>
    %c3 = arith.constant 3 : index
    %c0_22 = arith.constant 0 : index
    %c0_23 = arith.constant 0 : index
    %26 = vector.load %arg2[%c3, %c0_22, %c0_23] : memref<9x4x8xbf16, #tpu.memory_space<vmem>>, vector<1x4x8xbf16>
    %27 = vector.shape_cast %26 : vector<1x4x8xbf16> to vector<4x8xbf16>
    %cst_24 = arith.constant dense<0.000000e+00> : vector<256x8xf32>
    %28 = tpu.matmul %25, %27, %cst_24 {dimension_numbers = #tpu.dot_dimension_numbers<[1], [0], [0], [1], [0, 0, 1, 1], [], []>} : vector<256x4xbf16>, vector<4x8xbf16>, vector<256x8xf32> -> vector<256x8xf32>
    %29 = arith.addf %22, %28 : vector<256x8xf32>
    %c0_25 = arith.constant 0 : index
    %c17 = arith.constant 17 : index
    %c0_26 = arith.constant 0 : index
    %30 = vector.load %arg1[%c0_25, %c17, %c0_26] : memref<2x296x4xf32, #tpu.memory_space<vmem>>, vector<1x256x4xf32>
    %31 = vector.shape_cast %30 : vector<1x256x4xf32> to vector<256x4xf32>
    %32 = arith.truncf %31 : vector<256x4xf32> to vector<256x4xbf16>
    %c4 = arith.constant 4 : index
    %c0_27 = arith.constant 0 : index
    %c0_28 = arith.constant 0 : index
    %33 = vector.load %arg2[%c4, %c0_27, %c0_28] : memref<9x4x8xbf16, #tpu.memory_space<vmem>>, vector<1x4x8xbf16>
    %34 = vector.shape_cast %33 : vector<1x4x8xbf16> to vector<4x8xbf16>
    %cst_29 = arith.constant dense<0.000000e+00> : vector<256x8xf32>
    %35 = tpu.matmul %32, %34, %cst_29 {dimension_numbers = #tpu.dot_dimension_numbers<[1], [0], [0], [1], [0, 0, 1, 1], [], []>} : vector<256x4xbf16>, vector<4x8xbf16>, vector<256x8xf32> -> vector<256x8xf32>
    %36 = arith.addf %29, %35 : vector<256x8xf32>
    %c0_30 = arith.constant 0 : index
    %c18 = arith.constant 18 : index
    %c0_31 = arith.constant 0 : index
    %37 = vector.load %arg1[%c0_30, %c18, %c0_31] : memref<2x296x4xf32, #tpu.memory_space<vmem>>, vector<1x256x4xf32>
    %38 = vector.shape_cast %37 : vector<1x256x4xf32> to vector<256x4xf32>
    %39 = arith.truncf %38 : vector<256x4xf32> to vector<256x4xbf16>
    %c5 = arith.constant 5 : index
    %c0_32 = arith.constant 0 : index
    %c0_33 = arith.constant 0 : index
    %40 = vector.load %arg2[%c5, %c0_32, %c0_33] : memref<9x4x8xbf16, #tpu.memory_space<vmem>>, vector<1x4x8xbf16>
    %41 = vector.shape_cast %40 : vector<1x4x8xbf16> to vector<4x8xbf16>
    %cst_34 = arith.constant dense<0.000000e+00> : vector<256x8xf32>
    %42 = tpu.matmul %39, %41, %cst_34 {dimension_numbers = #tpu.dot_dimension_numbers<[1], [0], [0], [1], [0, 0, 1, 1], [], []>} : vector<256x4xbf16>, vector<4x8xbf16>, vector<256x8xf32> -> vector<256x8xf32>
    %43 = arith.addf %36, %42 : vector<256x8xf32>
    %c0_35 = arith.constant 0 : index
    %c32 = arith.constant 32 : index
    %c0_36 = arith.constant 0 : index
    %44 = vector.load %arg1[%c0_35, %c32, %c0_36] : memref<2x296x4xf32, #tpu.memory_space<vmem>>, vector<1x256x4xf32>
    %45 = vector.shape_cast %44 : vector<1x256x4xf32> to vector<256x4xf32>
    %46 = arith.truncf %45 : vector<256x4xf32> to vector<256x4xbf16>
    %c6 = arith.constant 6 : index
    %c0_37 = arith.constant 0 : index
    %c0_38 = arith.constant 0 : index
    %47 = vector.load %arg2[%c6, %c0_37, %c0_38] : memref<9x4x8xbf16, #tpu.memory_space<vmem>>, vector<1x4x8xbf16>
    %48 = vector.shape_cast %47 : vector<1x4x8xbf16> to vector<4x8xbf16>
    %cst_39 = arith.constant dense<0.000000e+00> : vector<256x8xf32>
    %49 = tpu.matmul %46, %48, %cst_39 {dimension_numbers = #tpu.dot_dimension_numbers<[1], [0], [0], [1], [0, 0, 1, 1], [], []>} : vector<256x4xbf16>, vector<4x8xbf16>, vector<256x8xf32> -> vector<256x8xf32>
    %50 = arith.addf %43, %49 : vector<256x8xf32>
    %c0_40 = arith.constant 0 : index
    %c33 = arith.constant 33 : index
    %c0_41 = arith.constant 0 : index
    %51 = vector.load %arg1[%c0_40, %c33, %c0_41] : memref<2x296x4xf32, #tpu.memory_space<vmem>>, vector<1x256x4xf32>
    %52 = vector.shape_cast %51 : vector<1x256x4xf32> to vector<256x4xf32>
    %53 = arith.truncf %52 : vector<256x4xf32> to vector<256x4xbf16>
    %c7 = arith.constant 7 : index
    %c0_42 = arith.constant 0 : index
    %c0_43 = arith.constant 0 : index
    %54 = vector.load %arg2[%c7, %c0_42, %c0_43] : memref<9x4x8xbf16, #tpu.memory_space<vmem>>, vector<1x4x8xbf16>
    %55 = vector.shape_cast %54 : vector<1x4x8xbf16> to vector<4x8xbf16>
    %cst_44 = arith.constant dense<0.000000e+00> : vector<256x8xf32>
    %56 = tpu.matmul %53, %55, %cst_44 {dimension_numbers = #tpu.dot_dimension_numbers<[1], [0], [0], [1], [0, 0, 1, 1], [], []>} : vector<256x4xbf16>, vector<4x8xbf16>, vector<256x8xf32> -> vector<256x8xf32>
    %57 = arith.addf %50, %56 : vector<256x8xf32>
    %c0_45 = arith.constant 0 : index
    %c34 = arith.constant 34 : index
    %c0_46 = arith.constant 0 : index
    %58 = vector.load %arg1[%c0_45, %c34, %c0_46] : memref<2x296x4xf32, #tpu.memory_space<vmem>>, vector<1x256x4xf32>
    %59 = vector.shape_cast %58 : vector<1x256x4xf32> to vector<256x4xf32>
    %60 = arith.truncf %59 : vector<256x4xf32> to vector<256x4xbf16>
    %c8 = arith.constant 8 : index
    %c0_47 = arith.constant 0 : index
    %c0_48 = arith.constant 0 : index
    %61 = vector.load %arg2[%c8, %c0_47, %c0_48] : memref<9x4x8xbf16, #tpu.memory_space<vmem>>, vector<1x4x8xbf16>
    %62 = vector.shape_cast %61 : vector<1x4x8xbf16> to vector<4x8xbf16>
    %cst_49 = arith.constant dense<0.000000e+00> : vector<256x8xf32>
    %63 = tpu.matmul %60, %62, %cst_49 {dimension_numbers = #tpu.dot_dimension_numbers<[1], [0], [0], [1], [0, 0, 1, 1], [], []>} : vector<256x4xbf16>, vector<4x8xbf16>, vector<256x8xf32> -> vector<256x8xf32>
    %64 = arith.addf %57, %63 : vector<256x8xf32>
    %65 = vector.broadcast %0 : vector<1x8xf32> to vector<256x8xf32>
    %66 = arith.addf %64, %65 : vector<256x8xf32>
    %cst_50 = arith.constant 0.000000e+00 : f32
    %67 = vector.broadcast %cst_50 : f32 to vector<256x8xf32>
    %68 = arith.maximumf %66, %67 : vector<256x8xf32>
    %c0_51 = arith.constant 0 : index
    %c0_52 = arith.constant 0 : index
    %c0_53 = arith.constant 0 : index
    %69 = vector.load %arg4[%c0_51, %c0_52, %c0_53] : memref<2x256x8xf32, #tpu.memory_space<vmem>>, vector<1x256x8xf32>
    %70 = vector.shape_cast %69 : vector<1x256x8xf32> to vector<256x8xf32>
    %71 = vector.shape_cast %68 : vector<256x8xf32> to vector<1x256x8xf32>
    tpu.vector_store %arg4[%c0_51, %c0_52, %c0_53], %71 {strides = array<i32>} : memref<2x256x8xf32, #tpu.memory_space<vmem>>, vector<1x256x8xf32>,
    %cst_54 = arith.constant 0.000000e+00 : f32
    %72 = vector.broadcast %cst_54 : f32 to vector<256x8xf32>
    %c1_55 = arith.constant 1 : index
    %c0_56 = arith.constant 0 : index
    %c0_57 = arith.constant 0 : index
    %73 = vector.load %arg1[%c1_55, %c0_56, %c0_57] : memref<2x296x4xf32, #tpu.memory_space<vmem>>, vector<1x256x4xf32>
    %74 = vector.shape_cast %73 : vector<1x256x4xf32> to vector<256x4xf32>
    %75 = arith.truncf %74 : vector<256x4xf32> to vector<256x4xbf16>
    %c0_58 = arith.constant 0 : index
    %c0_59 = arith.constant 0 : index
    %c0_60 = arith.constant 0 : index
    %76 = vector.load %arg2[%c0_58, %c0_59, %c0_60] : memref<9x4x8xbf16, #tpu.memory_space<vmem>>, vector<1x4x8xbf16>
    %77 = vector.shape_cast %76 : vector<1x4x8xbf16> to vector<4x8xbf16>
    %cst_61 = arith.constant dense<0.000000e+00> : vector<256x8xf32>
    %78 = tpu.matmul %75, %77, %cst_61 {dimension_numbers = #tpu.dot_dimension_numbers<[1], [0], [0], [1], [0, 0, 1, 1], [], []>} : vector<256x4xbf16>, vector<4x8xbf16>, vector<256x8xf32> -> vector<256x8xf32>
    %79 = arith.addf %72, %78 : vector<256x8xf32>
    %c1_62 = arith.constant 1 : index
    %c1_63 = arith.constant 1 : index
    %c0_64 = arith.constant 0 : index
    %80 = vector.load %arg1[%c1_62, %c1_63, %c0_64] : memref<2x296x4xf32, #tpu.memory_space<vmem>>, vector<1x256x4xf32>
    %81 = vector.shape_cast %80 : vector<1x256x4xf32> to vector<256x4xf32>
    %82 = arith.truncf %81 : vector<256x4xf32> to vector<256x4xbf16>
    %c1_65 = arith.constant 1 : index
    %c0_66 = arith.constant 0 : index
    %c0_67 = arith.constant 0 : index
    %83 = vector.load %arg2[%c1_65, %c0_66, %c0_67] : memref<9x4x8xbf16, #tpu.memory_space<vmem>>, vector<1x4x8xbf16>
    %84 = vector.shape_cast %83 : vector<1x4x8xbf16> to vector<4x8xbf16>
    %cst_68 = arith.constant dense<0.000000e+00> : vector<256x8xf32>
    %85 = tpu.matmul %82, %84, %cst_68 {dimension_numbers = #tpu.dot_dimension_numbers<[1], [0], [0], [1], [0, 0, 1, 1], [], []>} : vector<256x4xbf16>, vector<4x8xbf16>, vector<256x8xf32> -> vector<256x8xf32>
    %86 = arith.addf %79, %85 : vector<256x8xf32>
    %c1_69 = arith.constant 1 : index
    %c2_70 = arith.constant 2 : index
    %c0_71 = arith.constant 0 : index
    %87 = vector.load %arg1[%c1_69, %c2_70, %c0_71] : memref<2x296x4xf32, #tpu.memory_space<vmem>>, vector<1x256x4xf32>
    %88 = vector.shape_cast %87 : vector<1x256x4xf32> to vector<256x4xf32>
    %89 = arith.truncf %88 : vector<256x4xf32> to vector<256x4xbf16>
    %c2_72 = arith.constant 2 : index
    %c0_73 = arith.constant 0 : index
    %c0_74 = arith.constant 0 : index
    %90 = vector.load %arg2[%c2_72, %c0_73, %c0_74] : memref<9x4x8xbf16, #tpu.memory_space<vmem>>, vector<1x4x8xbf16>
    %91 = vector.shape_cast %90 : vector<1x4x8xbf16> to vector<4x8xbf16>
    %cst_75 = arith.constant dense<0.000000e+00> : vector<256x8xf32>
    %92 = tpu.matmul %89, %91, %cst_75 {dimension_numbers = #tpu.dot_dimension_numbers<[1], [0], [0], [1], [0, 0, 1, 1], [], []>} : vector<256x4xbf16>, vector<4x8xbf16>, vector<256x8xf32> -> vector<256x8xf32>
    %93 = arith.addf %86, %92 : vector<256x8xf32>
    %c1_76 = arith.constant 1 : index
    %c16_77 = arith.constant 16 : index
    %c0_78 = arith.constant 0 : index
    %94 = vector.load %arg1[%c1_76, %c16_77, %c0_78] : memref<2x296x4xf32, #tpu.memory_space<vmem>>, vector<1x256x4xf32>
    %95 = vector.shape_cast %94 : vector<1x256x4xf32> to vector<256x4xf32>
    %96 = arith.truncf %95 : vector<256x4xf32> to vector<256x4xbf16>
    %c3_79 = arith.constant 3 : index
    %c0_80 = arith.constant 0 : index
    %c0_81 = arith.constant 0 : index
    %97 = vector.load %arg2[%c3_79, %c0_80, %c0_81] : memref<9x4x8xbf16, #tpu.memory_space<vmem>>, vector<1x4x8xbf16>
    %98 = vector.shape_cast %97 : vector<1x4x8xbf16> to vector<4x8xbf16>
    %cst_82 = arith.constant dense<0.000000e+00> : vector<256x8xf32>
    %99 = tpu.matmul %96, %98, %cst_82 {dimension_numbers = #tpu.dot_dimension_numbers<[1], [0], [0], [1], [0, 0, 1, 1], [], []>} : vector<256x4xbf16>, vector<4x8xbf16>, vector<256x8xf32> -> vector<256x8xf32>
    %100 = arith.addf %93, %99 : vector<256x8xf32>
    %c1_83 = arith.constant 1 : index
    %c17_84 = arith.constant 17 : index
    %c0_85 = arith.constant 0 : index
    %101 = vector.load %arg1[%c1_83, %c17_84, %c0_85] : memref<2x296x4xf32, #tpu.memory_space<vmem>>, vector<1x256x4xf32>
    %102 = vector.shape_cast %101 : vector<1x256x4xf32> to vector<256x4xf32>
    %103 = arith.truncf %102 : vector<256x4xf32> to vector<256x4xbf16>
    %c4_86 = arith.constant 4 : index
    %c0_87 = arith.constant 0 : index
    %c0_88 = arith.constant 0 : index
    %104 = vector.load %arg2[%c4_86, %c0_87, %c0_88] : memref<9x4x8xbf16, #tpu.memory_space<vmem>>, vector<1x4x8xbf16>
    %105 = vector.shape_cast %104 : vector<1x4x8xbf16> to vector<4x8xbf16>
    %cst_89 = arith.constant dense<0.000000e+00> : vector<256x8xf32>
    %106 = tpu.matmul %103, %105, %cst_89 {dimension_numbers = #tpu.dot_dimension_numbers<[1], [0], [0], [1], [0, 0, 1, 1], [], []>} : vector<256x4xbf16>, vector<4x8xbf16>, vector<256x8xf32> -> vector<256x8xf32>
    %107 = arith.addf %100, %106 : vector<256x8xf32>
    %c1_90 = arith.constant 1 : index
    %c18_91 = arith.constant 18 : index
    %c0_92 = arith.constant 0 : index
    %108 = vector.load %arg1[%c1_90, %c18_91, %c0_92] : memref<2x296x4xf32, #tpu.memory_space<vmem>>, vector<1x256x4xf32>
    %109 = vector.shape_cast %108 : vector<1x256x4xf32> to vector<256x4xf32>
    %110 = arith.truncf %109 : vector<256x4xf32> to vector<256x4xbf16>
    %c5_93 = arith.constant 5 : index
    %c0_94 = arith.constant 0 : index
    %c0_95 = arith.constant 0 : index
    %111 = vector.load %arg2[%c5_93, %c0_94, %c0_95] : memref<9x4x8xbf16, #tpu.memory_space<vmem>>, vector<1x4x8xbf16>
    %112 = vector.shape_cast %111 : vector<1x4x8xbf16> to vector<4x8xbf16>
    %cst_96 = arith.constant dense<0.000000e+00> : vector<256x8xf32>
    %113 = tpu.matmul %110, %112, %cst_96 {dimension_numbers = #tpu.dot_dimension_numbers<[1], [0], [0], [1], [0, 0, 1, 1], [], []>} : vector<256x4xbf16>, vector<4x8xbf16>, vector<256x8xf32> -> vector<256x8xf32>
    %114 = arith.addf %107, %113 : vector<256x8xf32>
    %c1_97 = arith.constant 1 : index
    %c32_98 = arith.constant 32 : index
    %c0_99 = arith.constant 0 : index
    %115 = vector.load %arg1[%c1_97, %c32_98, %c0_99] : memref<2x296x4xf32, #tpu.memory_space<vmem>>, vector<1x256x4xf32>
    %116 = vector.shape_cast %115 : vector<1x256x4xf32> to vector<256x4xf32>
    %117 = arith.truncf %116 : vector<256x4xf32> to vector<256x4xbf16>
    %c6_100 = arith.constant 6 : index
    %c0_101 = arith.constant 0 : index
    %c0_102 = arith.constant 0 : index
    %118 = vector.load %arg2[%c6_100, %c0_101, %c0_102] : memref<9x4x8xbf16, #tpu.memory_space<vmem>>, vector<1x4x8xbf16>
    %119 = vector.shape_cast %118 : vector<1x4x8xbf16> to vector<4x8xbf16>
    %cst_103 = arith.constant dense<0.000000e+00> : vector<256x8xf32>
    %120 = tpu.matmul %117, %119, %cst_103 {dimension_numbers = #tpu.dot_dimension_numbers<[1], [0], [0], [1], [0, 0, 1, 1], [], []>} : vector<256x4xbf16>, vector<4x8xbf16>, vector<256x8xf32> -> vector<256x8xf32>
    %121 = arith.addf %114, %120 : vector<256x8xf32>
    %c1_104 = arith.constant 1 : index
    %c33_105 = arith.constant 33 : index
    %c0_106 = arith.constant 0 : index
    %122 = vector.load %arg1[%c1_104, %c33_105, %c0_106] : memref<2x296x4xf32, #tpu.memory_space<vmem>>, vector<1x256x4xf32>
    %123 = vector.shape_cast %122 : vector<1x256x4xf32> to vector<256x4xf32>
    %124 = arith.truncf %123 : vector<256x4xf32> to vector<256x4xbf16>
    %c7_107 = arith.constant 7 : index
    %c0_108 = arith.constant 0 : index
    %c0_109 = arith.constant 0 : index
    %125 = vector.load %arg2[%c7_107, %c0_108, %c0_109] : memref<9x4x8xbf16, #tpu.memory_space<vmem>>, vector<1x4x8xbf16>
    %126 = vector.shape_cast %125 : vector<1x4x8xbf16> to vector<4x8xbf16>
    %cst_110 = arith.constant dense<0.000000e+00> : vector<256x8xf32>
    %127 = tpu.matmul %124, %126, %cst_110 {dimension_numbers = #tpu.dot_dimension_numbers<[1], [0], [0], [1], [0, 0, 1, 1], [], []>} : vector<256x4xbf16>, vector<4x8xbf16>, vector<256x8xf32> -> vector<256x8xf32>
    %128 = arith.addf %121, %127 : vector<256x8xf32>
    %c1_111 = arith.constant 1 : index
    %c34_112 = arith.constant 34 : index
    %c0_113 = arith.constant 0 : index
    %129 = vector.load %arg1[%c1_111, %c34_112, %c0_113] : memref<2x296x4xf32, #tpu.memory_space<vmem>>, vector<1x256x4xf32>
    %130 = vector.shape_cast %129 : vector<1x256x4xf32> to vector<256x4xf32>
    %131 = arith.truncf %130 : vector<256x4xf32> to vector<256x4xbf16>
    %c8_114 = arith.constant 8 : index
    %c0_115 = arith.constant 0 : index
    %c0_116 = arith.constant 0 : index
    %132 = vector.load %arg2[%c8_114, %c0_115, %c0_116] : memref<9x4x8xbf16, #tpu.memory_space<vmem>>, vector<1x4x8xbf16>
    %133 = vector.shape_cast %132 : vector<1x4x8xbf16> to vector<4x8xbf16>
    %cst_117 = arith.constant dense<0.000000e+00> : vector<256x8xf32>
    %134 = tpu.matmul %131, %133, %cst_117 {dimension_numbers = #tpu.dot_dimension_numbers<[1], [0], [0], [1], [0, 0, 1, 1], [], []>} : vector<256x4xbf16>, vector<4x8xbf16>, vector<256x8xf32> -> vector<256x8xf32>
    %135 = arith.addf %128, %134 : vector<256x8xf32>
    %136 = vector.broadcast %0 : vector<1x8xf32> to vector<256x8xf32>
    %137 = arith.addf %135, %136 : vector<256x8xf32>
    %cst_118 = arith.constant 0.000000e+00 : f32
    %138 = vector.broadcast %cst_118 : f32 to vector<256x8xf32>
    %139 = arith.maximumf %137, %138 : vector<256x8xf32>
    %c1_119 = arith.constant 1 : index
    %c0_120 = arith.constant 0 : index
    %c0_121 = arith.constant 0 : index
    %140 = vector.load %arg4[%c1_119, %c0_120, %c0_121] : memref<2x256x8xf32, #tpu.memory_space<vmem>>, vector<1x256x8xf32>
    %141 = vector.shape_cast %140 : vector<1x256x8xf32> to vector<256x8xf32>
    %142 = vector.shape_cast %139 : vector<256x8xf32> to vector<1x256x8xf32>
    tpu.vector_store %arg4[%c1_119, %c0_120, %c0_121], %142 {strides = array<i32>} : memref<2x256x8xf32, #tpu.memory_space<vmem>>, vector<1x256x8xf32>,
    return
  }
  func.func @transform_0(%arg0: i32) -> (i32, i32, i32) {
    %c0_i32 = arith.constant 0 : i32
    %c0_i32_0 = arith.constant 0 : i32
    %c0_i32_1 = arith.constant 0 : i32
    %c0_i32_2 = arith.constant 0 : i32
    return %c0_i32, %c0_i32_0, %c0_i32_1 : i32, i32, i32
  }
  func.func @transform_1(%arg0: i32) -> (i32, i32, i32) {
    %c0_i32 = arith.constant 0 : i32
    %c0_i32_0 = arith.constant 0 : i32
    %c0_i32_1 = arith.constant 0 : i32
    %c0_i32_2 = arith.constant 0 : i32
    return %c0_i32, %c0_i32_0, %c0_i32_1 : i32, i32, i32
  }
  func.func @transform_2(%arg0: i32) -> (i32, i32) {
    %c0_i32 = arith.constant 0 : i32
    %c0_i32_0 = arith.constant 0 : i32
    %c0_i32_1 = arith.constant 0 : i32
    return %c0_i32, %c0_i32_0 : i32, i32
  }
  func.func @transform_3(%arg0: i32) -> (i32, i32, i32) {
    %c0_i32 = arith.constant 0 : i32
    %c0_i32_0 = arith.constant 0 : i32
    %c0_i32_1 = arith.constant 0 : i32
    return %c0_i32, %arg0, %c0_i32_0 : i32, i32, i32
  }
}

</mosaic_0001>

<llo_original>
// kernel: tpu_custom_call.1
$region0: #{tpu_custom_call.1}
  #allocation0 [shape = 'u32[]', space=smem, size = 0x4, offset = 0x4, fixed_abs, tag = 'smem constant byte address 0x4 - core index']
  #allocation1 [shape = 'u32[144,128]{1,0:T(1,128)}', space=vmem, size = 0x12000, scoped, tag = 'internal scratch']
  %s0 = inlined_call_operand.vmem [shape: f32[2,296,4], index: 0, kind: input, shape index: {}]
  %s1 = inlined_call_operand.vmem [shape: bf16[9,4,8], index: 1, kind: input, shape index: {}]
  %s2 = inlined_call_operand.vmem [shape: f32[1,8], index: 2, kind: input, shape index: {}]
  %s3 = inlined_call_operand.vmem [shape: f32[2,256,8], index: 3, kind: output, shape index: {}]
  %s4 = sld [smem:[#allocation0]]
  $region22: #{tpu_custom_call.1} parent=0
    _
  %s6 = ssub.s32 1, %s4
  %s7 = scalar_select 0, %s6, %s4
  // Predicated region
  $region2: #{tpu_custom_call.1} parent=0 // pred_check
    _
  $region3: #{tpu_custom_call.1} parent=0 // pred_check_branch
    %9 = sbr.rel (0) target = $region5
  $region4: #{tpu_custom_call.1} parent=0 // pred_region
    _
  $region5: #{tpu_custom_call.1} parent=0 // pred_fallthru
    _
  // Predicated region
  $region6: #{tpu_custom_call.1} parent=0 // pred_check
    _
  $region7: #{tpu_custom_call.1} parent=0 // pred_check_branch
    %11 = sbr.rel (0) target = $region9
  $region8: #{tpu_custom_call.1} parent=0 // pred_region
    _
  $region9: #{tpu_custom_call.1} parent=0 // pred_fallthru
    _
  // Predicated region
  $region10: #{tpu_custom_call.1} parent=0 // pred_check
    _
  $region11: #{tpu_custom_call.1} parent=0 // pred_check_branch
    %13 = sbr.rel (0) target = $region13
  $region12: #{tpu_custom_call.1} parent=0 // pred_region
    _
  $region13: #{tpu_custom_call.1} parent=0 // pred_fallthru
    _
  %v15 = vld [vmem:[%s2] sm:$0x1]
  %v16 = vld [vmem:[%s0] sm:$0xff]
  %v17 = vld [vmem:[%s0 + $0x8] sm:$0xff]
  %v18 = vld [vmem:[%s0 + $0x10] sm:$0xff]
  %v19 = vld [vmem:[%s0 + $0x18] sm:$0xff]
  %v20 = vld [vmem:[%s0 + $0x20] sm:$0xff]
  %v21 = vld [vmem:[%s0 + $0x28] sm:$0xff]
  %v22 = vld [vmem:[%s0 + $0x30] sm:$0xff]
  %v23 = vld [vmem:[%s0 + $0x38] sm:$0xff]
  %v24 = vld [vmem:[%s0 + $0x40] sm:$0xff]
  %v25 = vld [vmem:[%s0 + $0x48] sm:$0xff]
  %v26 = vld [vmem:[%s0 + $0x50] sm:$0xff]
  %v27 = vld [vmem:[%s0 + $0x58] sm:$0xff]
  %v28 = vld [vmem:[%s0 + $0x60] sm:$0xff]
  %v29 = vld [vmem:[%s0 + $0x68] sm:$0xff]
  %v30 = vld [vmem:[%s0 + $0x70] sm:$0xff]
  %v31 = vld [vmem:[%s0 + $0x78] sm:$0xff]
  %v32 = vld [vmem:[%s0 + $0x80] sm:$0xff]
  %v33 = vld [vmem:[%s0 + $0x88] sm:$0xff]
  %v34 = vld [vmem:[%s0 + $0x90] sm:$0xff]
  %v35 = vld [vmem:[%s0 + $0x98] sm:$0xff]
  %v36 = vld [vmem:[%s0 + $0xa0] sm:$0xff]
  %v37 = vld [vmem:[%s0 + $0xa8] sm:$0xff]
  %v38 = vld [vmem:[%s0 + $0xb0] sm:$0xff]
  %v39 = vld [vmem:[%s0 + $0xb8] sm:$0xff]
  %v40 = vld [vmem:[%s0 + $0xc0] sm:$0xff]
  %v41 = vld [vmem:[%s0 + $0xc8] sm:$0xff]
  %v42 = vld [vmem:[%s0 + $0xd0] sm:$0xff]
  %v43 = vld [vmem:[%s0 + $0xd8] sm:$0xff]
  %v44 = vld [vmem:[%s0 + $0xe0] sm:$0xff]
  %v45 = vld [vmem:[%s0 + $0xe8] sm:$0xff]
  %v46 = vld [vmem:[%s0 + $0xf0] sm:$0xff]
  %v47 = vld [vmem:[%s0 + $0xf8] sm:$0xff]
  %v48 = vpack.c.bf16 %v17, %v16
  %v49 = vpack.c.bf16 %v19, %v18
  %v50 = vpack.c.bf16 %v21, %v20
  %v51 = vpack.c.bf16 %v23, %v22
  %v52 = vpack.c.bf16 %v25, %v24
  %v53 = vpack.c.bf16 %v27, %v26
  %v54 = vpack.c.bf16 %v29, %v28
  %v55 = vpack.c.bf16 %v31, %v30
  %v56 = vpack.c.bf16 %v33, %v32
  %v57 = vpack.c.bf16 %v35, %v34
  %v58 = vpack.c.bf16 %v37, %v36
  %v59 = vpack.c.bf16 %v39, %v38
  %v60 = vpack.c.bf16 %v41, %v40
  %v61 = vpack.c.bf16 %v43, %v42
  %v62 = vpack.c.bf16 %v45, %v44
  %v63 = vpack.c.bf16 %v47, %v46
  %v64 = vld [vmem:[%s1] sm:$0x3]
  %v65 = vld [vmem:[%s0 + $0x1] sm:$0xff]
  %v66 = vld [vmem:[%s0 + $0x9] sm:$0xff]
  %v67 = vld [vmem:[%s0 + $0x11] sm:$0xff]
  %v68 = vld [vmem:[%s0 + $0x19] sm:$0xff]
  %v69 = vld [vmem:[%s0 + $0x21] sm:$0xff]
  %v70 = vld [vmem:[%s0 + $0x29] sm:$0xff]
  %v71 = vld [vmem:[%s0 + $0x31] sm:$0xff]
  %v72 = vld [vmem:[%s0 + $0x39] sm:$0xff]
  %v73 = vld [vmem:[%s0 + $0x41] sm:$0xff]
  %v74 = vld [vmem:[%s0 + $0x49] sm:$0xff]
  %v75 = vld [vmem:[%s0 + $0x51] sm:$0xff]
  %v76 = vld [vmem:[%s0 + $0x59] sm:$0xff]
  %v77 = vld [vmem:[%s0 + $0x61] sm:$0xff]
  %v78 = vld [vmem:[%s0 + $0x69] sm:$0xff]
  %v79 = vld [vmem:[%s0 + $0x71] sm:$0xff]
  %v80 = vld [vmem:[%s0 + $0x79] sm:$0xff]
  %v81 = vld [vmem:[%s0 + $0x81] sm:$0xff]
  %v82 = vld [vmem:[%s0 + $0x89] sm:$0xff]
  %v83 = vld [vmem:[%s0 + $0x91] sm:$0xff]
  %v84 = vld [vmem:[%s0 + $0x99] sm:$0xff]
  %v85 = vld [vmem:[%s0 + $0xa1] sm:$0xff]
  %v86 = vld [vmem:[%s0 + $0xa9] sm:$0xff]
  %v87 = vld [vmem:[%s0 + $0xb1] sm:$0xff]
  %v88 = vld [vmem:[%s0 + $0xb9] sm:$0xff]
  %v89 = vld [vmem:[%s0 + $0xc1] sm:$0xff]
  %v90 = vld [vmem:[%s0 + $0xc9] sm:$0xff]
  %v91 = vld [vmem:[%s0 + $0xd1] sm:$0xff]
  %v92 = vld [vmem:[%s0 + $0xd9] sm:$0xff]
  %v93 = vld [vmem:[%s0 + $0xe1] sm:$0xff]
  %v94 = vld [vmem:[%s0 + $0xe9] sm:$0xff]
  %v95 = vld [vmem:[%s0 + $0xf1] sm:$0xff]
  %v96 = vld [vmem:[%s0 + $0xf9] sm:$0xff]
  %v97 = vpack.c.bf16 %v66, %v65
  %v98 = vpack.c.bf16 %v68, %v67
  %v99 = vpack.c.bf16 %v70, %v69
  %v100 = vpack.c.bf16 %v72, %v71
  %v101 = vpack.c.bf16 %v74, %v73
  %v102 = vpack.c.bf16 %v76, %v75
  %v103 = vpack.c.bf16 %v78, %v77
  %v104 = vpack.c.bf16 %v80, %v79
  %v105 = vpack.c.bf16 %v82, %v81
  %v106 = vpack.c.bf16 %v84, %v83
  %v107 = vpack.c.bf16 %v86, %v85
  %v108 = vpack.c.bf16 %v88, %v87
  %v109 = vpack.c.bf16 %v90, %v89
  %v110 = vpack.c.bf16 %v92, %v91
  %v111 = vpack.c.bf16 %v94, %v93
  %v112 = vpack.c.bf16 %v96, %v95
  %s113 = scalar_lea.vmem %s1, 2
  %v114 = vld [vmem:[%s113] sm:$0x3]
  %vm115 = vcmask 31744
  %v117 = vsel %vm115, %v97, 0
  %v120 = vsel %vm115, %v98, 0
  %v123 = vsel %vm115, %v99, 0
  %v126 = vsel %vm115, %v100, 0
  %v129 = vsel %vm115, %v101, 0
  %v132 = vsel %vm115, %v102, 0
  %v135 = vsel %vm115, %v103, 0
  %v138 = vsel %vm115, %v104, 0
  %v141 = vsel %vm115, %v105, 0
  %v144 = vsel %vm115, %v106, 0
  %v147 = vsel %vm115, %v107, 0
  %v150 = vsel %vm115, %v108, 0
  %v153 = vsel %vm115, %v109, 0
  %v156 = vsel %vm115, %v110, 0
  %v159 = vsel %vm115, %v111, 0
  %v162 = vsel %vm115, %v112, 0
  %vm164 = vcmask 1041408
  %v166 = vsel %vm164, %v114, 0
  %168 = vmatprep.subr.bf16.mxu0 0
  %169 = vmatpush1.bf16.msra.mxu0 %v166
  %170 = vmatprep.subr.bf16.mxu0 0
  %171 = vmatpush1.bf16.msra.mxu0 0
  %172 = vmatprep.subr.bf16.mxu0 0
  %173 = vmatpush1.bf16.msra.mxu0 0
  %174 = vmatprep.subr.bf16.mxu0 0
  %175 = vmatpush1.bf16.msra.mxu0 0
  %176 = vmatprep.subr.bf16.mxu0 0
  %177 = vmatpush1.bf16.msra.mxu0 0
  %178 = vmatprep.subr.bf16.mxu0 0
  %179 = vmatpush1.bf16.msra.mxu0 0
  %180 = vmatprep.subr.bf16.mxu0 0
  %181 = vmatpush1.bf16.msra.mxu0 0
  %182 = vmatprep.subr.bf16.mxu0 0
  %183 = vmatpush1.bf16.msra.mxu0 0
  %184 = vmatprep.subr.bf16.mxu0 0
  %185 = vmatpush1.bf16.msra.mxu0 0
  %186 = vmatprep.subr.bf16.mxu0 0
  %187 = vmatpush1.bf16.msra.mxu0 0
  %188 = vmatprep.subr.bf16.mxu0 0
  %189 = vmatpush1.bf16.msra.mxu0 0
  %190 = vmatprep.subr.bf16.mxu0 0
  %191 = vmatpush1.bf16.msra.mxu0 0
  %192 = vmatprep.subr.bf16.mxu0 0
  %193 = vmatpush1.bf16.msra.mxu0 0
  %194 = vmatprep.subr.bf16.mxu0 0
  %195 = vmatpush1.bf16.msra.mxu0 0
  %196 = vmatprep.subr.bf16.mxu0 0
  %197 = vmatpush1.bf16.msra.mxu0 0
  %198 = vmatprep.subr.bf16.mxu0 0
  %199 = vmatpush1.bf16.msra.mxu0 0
  %200 = vmatprep.mubr.bf16.mxu0 0
  %201 = vmatmul.mubr.bf16.gmra.mrb[0].mxu0 %v117
  %v202 = vpop.f32.mrb[0].mxu0
  %v203 = vadd.f32 0.0, %v202
  %v204 = vpop.f32.mrb[0].mxu0
  %v205 = vpop.f32.mrb[0].mxu0
  %v206 = vadd.f32 0.0, %v205
  %v207 = vpop.f32.mrb[0].mxu0
  %208 = vmatprep.mubr.bf16.mxu0 0
  %209 = vmatmul.mubr.bf16.gmra.mrb[0].mxu0 %v120
  %v210 = vpop.f32.mrb[0].mxu0
  %v211 = vadd.f32 0.0, %v210
  %v212 = vpop.f32.mrb[0].mxu0
  %v213 = vpop.f32.mrb[0].mxu0
  %v214 = vadd.f32 0.0, %v213
  %v215 = vpop.f32.mrb[0].mxu0
  %216 = vmatprep.mubr.bf16.mxu0 0
  %217 = vmatmul.mubr.bf16.gmra.mrb[0].mxu0 %v123
  %v218 = vpop.f32.mrb[0].mxu0
  %v219 = vadd.f32 0.0, %v218
  %v220 = vpop.f32.mrb[0].mxu0
  %v221 = vpop.f32.mrb[0].mxu0
  %v222 = vadd.f32 0.0, %v221
  %v223 = vpop.f32.mrb[0].mxu0
  %224 = vmatprep.mubr.bf16.mxu0 0
  %225 = vmatmul.mubr.bf16.gmra.mrb[0].mxu0 %v126
  %v226 = vpop.f32.mrb[0].mxu0
  %v227 = vadd.f32 0.0, %v226
  %v228 = vpop.f32.mrb[0].mxu0
  %v229 = vpop.f32.mrb[0].mxu0
  %v230 = vadd.f32 0.0, %v229
  %v231 = vpop.f32.mrb[0].mxu0
  %232 = vmatprep.mubr.bf16.mxu0 0
  %233 = vmatmul.mubr.bf16.gmra.mrb[0].mxu0 %v129
  %v234 = vpop.f32.mrb[0].mxu0
  %v235 = vadd.f32 0.0, %v234
  %v236 = vpop.f32.mrb[0].mxu0
  %v237 = vpop.f32.mrb[0].mxu0
  %v238 = vadd.f32 0.0, %v237
  %v239 = vpop.f32.mrb[0].mxu0
  %240 = vmatprep.mubr.bf16.mxu0 0
  %241 = vmatmul.mubr.bf16.gmra.mrb[0].mxu0 %v132
  %v242 = vpop.f32.mrb[0].mxu0
  %v243 = vadd.f32 0.0, %v242
  %v244 = vpop.f32.mrb[0].mxu0
  %v245 = vpop.f32.mrb[0].mxu0
  %v246 = vadd.f32 0.0, %v245
  %v247 = vpop.f32.mrb[0].mxu0
  %248 = vmatprep.mubr.bf16.mxu0 0
  %249 = vmatmul.mubr.bf16.gmra.mrb[0].mxu0 %v135
  %v250 = vpop.f32.mrb[0].mxu0
  %v251 = vadd.f32 0.0, %v250
  %v252 = vpop.f32.mrb[0].mxu0
  %v253 = vpop.f32.mrb[0].mxu0
  %v254 = vadd.f32 0.0, %v253
  %v255 = vpop.f32.mrb[0].mxu0
  %256 = vmatprep.mubr.bf16.mxu0 0
  %257 = vmatmul.mubr.bf16.gmra.mrb[0].mxu0 %v138
  %v258 = vpop.f32.mrb[0].mxu0
  %v259 = vadd.f32 0.0, %v258
  %v260 = vpop.f32.mrb[0].mxu0
  %v261 = vpop.f32.mrb[0].mxu0
  %v262 = vadd.f32 0.0, %v261
  %v263 = vpop.f32.mrb[0].mxu0
  %264 = vmatprep.mubr.bf16.mxu0 0
  %265 = vmatmul.mubr.bf16.gmra.mrb[0].mxu0 %v141
  %v266 = vpop.f32.mrb[0].mxu0
  %v267 = vadd.f32 0.0, %v266
  %v268 = vpop.f32.mrb[0].mxu0
  %v269 = vpop.f32.mrb[0].mxu0
  %v270 = vadd.f32 0.0, %v269
  %v271 = vpop.f32.mrb[0].mxu0
  %272 = vmatprep.mubr.bf16.mxu0 0
  %273 = vmatmul.mubr.bf16.gmra.mrb[0].mxu0 %v144
  %v274 = vpop.f32.mrb[0].mxu0
  %v275 = vadd.f32 0.0, %v274
  %v276 = vpop.f32.mrb[0].mxu0
  %v277 = vpop.f32.mrb[0].mxu0
  %v278 = vadd.f32 0.0, %v277
  %v279 = vpop.f32.mrb[0].mxu0
  %280 = vmatprep.mubr.bf16.mxu0 0
  %281 = vmatmul.mubr.bf16.gmra.mrb[0].mxu0 %v147
  %v282 = vpop.f32.mrb[0].mxu0
  %v283 = vadd.f32 0.0, %v282
  %v284 = vpop.f32.mrb[0].mxu0
  %v285 = vpop.f32.mrb[0].mxu0
  %v286 = vadd.f32 0.0, %v285
  %v287 = vpop.f32.mrb[0].mxu0
  %288 = vmatprep.mubr.bf16.mxu0 0
  %289 = vmatmul.mubr.bf16.gmra.mrb[0].mxu0 %v150
  %v290 = vpop.f32.mrb[0].mxu0
  %v291 = vadd.f32 0.0, %v290
  %v292 = vpop.f32.mrb[0].mxu0
  %v293 = vpop.f32.mrb[0].mxu0
  %v294 = vadd.f32 0.0, %v293
  %v295 = vpop.f32.mrb[0].mxu0
  %296 = vmatprep.mubr.bf16.mxu0 0
  %297 = vmatmul.mubr.bf16.gmra.mrb[0].mxu0 %v153
  %v298 = vpop.f32.mrb[0].mxu0
  %v299 = vadd.f32 0.0, %v298
  %v300 = vpop.f32.mrb[0].mxu0
  %v301 = vpop.f32.mrb[0].mxu0
  %v302 = vadd.f32 0.0, %v301
  %v303 = vpop.f32.mrb[0].mxu0
  %304 = vmatprep.mubr.bf16.mxu0 0
  %305 = vmatmul.mubr.bf16.gmra.mrb[0].mxu0 %v156
  %v306 = vpop.f32.mrb[0].mxu0
  %v307 = vadd.f32 0.0, %v306
  %v308 = vpop.f32.mrb[0].mxu0
  %v309 = vpop.f32.mrb[0].mxu0
  %v310 = vadd.f32 0.0, %v309
  %v311 = vpop.f32.mrb[0].mxu0
  %312 = vmatprep.mubr.bf16.mxu0 0
  %313 = vmatmul.mubr.bf16.gmra.mrb[0].mxu0 %v159
  %v314 = vpop.f32.mrb[0].mxu0
  %v315 = vadd.f32 0.0, %v314
  %v316 = vpop.f32.mrb[0].mxu0
  %v317 = vpop.f32.mrb[0].mxu0
  %v318 = vadd.f32 0.0, %v317
  %v319 = vpop.f32.mrb[0].mxu0
  %320 = vmatprep.mubr.bf16.mxu0 0
  %321 = vmatmul.mubr.bf16.gmra.mrb[0].mxu0 %v162
  %v322 = vpop.f32.mrb[0].mxu0
  %v323 = vadd.f32 0.0, %v322
  %v324 = vpop.f32.mrb[0].mxu0
  %v325 = vpop.f32.mrb[0].mxu0
  %v326 = vadd.f32 0.0, %v325
  %v327 = vpop.f32.mrb[0].mxu0
  %328 = vdwg.mxu0
  %v330 = vsel %vm115, %v48, 0
  %v333 = vsel %vm115, %v49, 0
  %v336 = vsel %vm115, %v50, 0
  %v339 = vsel %vm115, %v51, 0
  %v342 = vsel %vm115, %v52, 0
  %v345 = vsel %vm115, %v53, 0
  %v348 = vsel %vm115, %v54, 0
  %v351 = vsel %vm115, %v55, 0
  %v354 = vsel %vm115, %v56, 0
  %v357 = vsel %vm115, %v57, 0
  %v360 = vsel %vm115, %v58, 0
  %v363 = vsel %vm115, %v59, 0
  %v366 = vsel %vm115, %v60, 0
  %v369 = vsel %vm115, %v61, 0
  %v372 = vsel %vm115, %v62, 0
  %v375 = vsel %vm115, %v63, 0
  %v378 = vsel %vm164, %v64, 0
  %380 = vmatprep.subr.bf16.mxu0 0
  %381 = vmatpush1.bf16.msra.mxu0 %v378
  %382 = vmatprep.subr.bf16.mxu0 0
  %383 = vmatpush1.bf16.msra.mxu0 0
  %384 = vmatprep.subr.bf16.mxu0 0
  %385 = vmatpush1.bf16.msra.mxu0 0
  %386 = vmatprep.subr.bf16.mxu0 0
  %387 = vmatpush1.bf16.msra.mxu0 0
  %388 = vmatprep.subr.bf16.mxu0 0
  %389 = vmatpush1.bf16.msra.mxu0 0
  %390 = vmatprep.subr.bf16.mxu0 0
  %391 = vmatpush1.bf16.msra.mxu0 0
  %392 = vmatprep.subr.bf16.mxu0 0
  %393 = vmatpush1.bf16.msra.mxu0 0
  %394 = vmatprep.subr.bf16.mxu0 0
  %395 = vmatpush1.bf16.msra.mxu0 0
  %396 = vmatprep.subr.bf16.mxu0 0
  %397 = vmatpush1.bf16.msra.mxu0 0
  %398 = vmatprep.subr.bf16.mxu0 0
  %399 = vmatpush1.bf16.msra.mxu0 0
  %400 = vmatprep.subr.bf16.mxu0 0
  %401 = vmatpush1.bf16.msra.mxu0 0
  %402 = vmatprep.subr.bf16.mxu0 0
  %403 = vmatpush1.bf16.msra.mxu0 0
  %404 = vmatprep.subr.bf16.mxu0 0
  %405 = vmatpush1.bf16.msra.mxu0 0
  %406 = vmatprep.subr.bf16.mxu0 0
  %407 = vmatpush1.bf16.msra.mxu0 0
  %408 = vmatprep.subr.bf16.mxu0 0
  %409 = vmatpush1.bf16.msra.mxu0 0
  %410 = vmatprep.subr.bf16.mxu0 0
  %411 = vmatpush1.bf16.msra.mxu0 0
  %412 = vmatprep.mubr.bf16.mxu0 0
  %413 = vmatmul.mubr.bf16.gmra.mrb[0].mxu0 %v330
  %v414 = vpop.f32.mrb[0].mxu0
  %v415 = vadd.f32 %v203, %v414
  %v416 = vpop.f32.mrb[0].mxu0
  %v417 = vpop.f32.mrb[0].mxu0
  %v418 = vadd.f32 %v206, %v417
  %v419 = vpop.f32.mrb[0].mxu0
  %420 = vmatprep.mubr.bf16.mxu0 0
  %421 = vmatmul.mubr.bf16.gmra.mrb[0].mxu0 %v333
  %v422 = vpop.f32.mrb[0].mxu0
  %v423 = vadd.f32 %v211, %v422
  %v424 = vpop.f32.mrb[0].mxu0
  %v425 = vpop.f32.mrb[0].mxu0
  %v426 = vadd.f32 %v214, %v425
  %v427 = vpop.f32.mrb[0].mxu0
  %428 = vmatprep.mubr.bf16.mxu0 0
  %429 = vmatmul.mubr.bf16.gmra.mrb[0].mxu0 %v336
  %v430 = vpop.f32.mrb[0].mxu0
  %v431 = vadd.f32 %v219, %v430
  %v432 = vpop.f32.mrb[0].mxu0
  %v433 = vpop.f32.mrb[0].mxu0
  %v434 = vadd.f32 %v222, %v433
  %v435 = vpop.f32.mrb[0].mxu0
  %436 = vmatprep.mubr.bf16.mxu0 0
  %437 = vmatmul.mubr.bf16.gmra.mrb[0].mxu0 %v339
  %v438 = vpop.f32.mrb[0].mxu0
  %v439 = vadd.f32 %v227, %v438
  %v440 = vpop.f32.mrb[0].mxu0
  %v441 = vpop.f32.mrb[0].mxu0
  %v442 = vadd.f32 %v230, %v441
  %v443 = vpop.f32.mrb[0].mxu0
  %444 = vmatprep.mubr.bf16.mxu0 0
  %445 = vmatmul.mubr.bf16.gmra.mrb[0].mxu0 %v342
  %v446 = vpop.f32.mrb[0].mxu0
  %v447 = vadd.f32 %v235, %v446
  %v448 = vpop.f32.mrb[0].mxu0
  %v449 = vpop.f32.mrb[0].mxu0
  %v450 = vadd.f32 %v238, %v449
  %v451 = vpop.f32.mrb[0].mxu0
  %452 = vmatprep.mubr.bf16.mxu0 0
  %453 = vmatmul.mubr.bf16.gmra.mrb[0].mxu0 %v345
  %v454 = vpop.f32.mrb[0].mxu0
  %v455 = vadd.f32 %v243, %v454
  %v456 = vpop.f32.mrb[0].mxu0
  %v457 = vpop.f32.mrb[0].mxu0
  %v458 = vadd.f32 %v246, %v457
  %v459 = vpop.f32.mrb[0].mxu0
  %460 = vmatprep.mubr.bf16.mxu0 0
  %461 = vmatmul.mubr.bf16.gmra.mrb[0].mxu0 %v348
  %v462 = vpop.f32.mrb[0].mxu0
  %v463 = vadd.f32 %v251, %v462
  %v464 = vpop.f32.mrb[0].mxu0
  %v465 = vpop.f32.mrb[0].mxu0
  %v466 = vadd.f32 %v254, %v465
  %v467 = vpop.f32.mrb[0].mxu0
  %468 = vmatprep.mubr.bf16.mxu0 0
  %469 = vmatmul.mubr.bf16.gmra.mrb[0].mxu0 %v351
  %v470 = vpop.f32.mrb[0].mxu0
  %v471 = vadd.f32 %v259, %v470
  %v472 = vpop.f32.mrb[0].mxu0
  %v473 = vpop.f32.mrb[0].mxu0
  %v474 = vadd.f32 %v262, %v473
  %v475 = vpop.f32.mrb[0].mxu0
  %476 = vmatprep.mubr.bf16.mxu0 0
  %477 = vmatmul.mubr.bf16.gmra.mrb[0].mxu0 %v354
  %v478 = vpop.f32.mrb[0].mxu0
  %v479 = vadd.f32 %v267, %v478
  %v480 = vpop.f32.mrb[0].mxu0
  %v481 = vpop.f32.mrb[0].mxu0
  %v482 = vadd.f32 %v270, %v481
  %v483 = vpop.f32.mrb[0].mxu0
  %484 = vmatprep.mubr.bf16.mxu0 0
  %485 = vmatmul.mubr.bf16.gmra.mrb[0].mxu0 %v357
  %v486 = vpop.f32.mrb[0].mxu0
  %v487 = vadd.f32 %v275, %v486
  %v488 = vpop.f32.mrb[0].mxu0
  %v489 = vpop.f32.mrb[0].mxu0
  %v490 = vadd.f32 %v278, %v489
  %v491 = vpop.f32.mrb[0].mxu0
  %492 = vmatprep.mubr.bf16.mxu0 0
  %493 = vmatmul.mubr.bf16.gmra.mrb[0].mxu0 %v360
  %v494 = vpop.f32.mrb[0].mxu0
  %v495 = vadd.f32 %v283, %v494
  %v496 = vpop.f32.mrb[0].mxu0
  %v497 = vpop.f32.mrb[0].mxu0
  %v498 = vadd.f32 %v286, %v497
  %v499 = vpop.f32.mrb[0].mxu0
  %500 = vmatprep.mubr.bf16.mxu0 0
  %501 = vmatmul.mubr.bf16.gmra.mrb[0].mxu0 %v363
  %v502 = vpop.f32.mrb[0].mxu0
  %v503 = vadd.f32 %v291, %v502
  %v504 = vpop.f32.mrb[0].mxu0
  %v505 = vpop.f32.mrb[0].mxu0
  %v506 = vadd.f32 %v294, %v505
  %v507 = vpop.f32.mrb[0].mxu0
  %508 = vmatprep.mubr.bf16.mxu0 0
  %509 = vmatmul.mubr.bf16.gmra.mrb[0].mxu0 %v366
  %v510 = vpop.f32.mrb[0].mxu0
  %v511 = vadd.f32 %v299, %v510
  %v512 = vpop.f32.mrb[0].mxu0
  %v513 = vpop.f32.mrb[0].mxu0
  %v514 = vadd.f32 %v302, %v513
  %v515 = vpop.f32.mrb[0].mxu0
  %516 = vmatprep.mubr.bf16.mxu0 0
  %517 = vmatmul.mubr.bf16.gmra.mrb[0].mxu0 %v369
  %v518 = vpop.f32.mrb[0].mxu0
  %v519 = vadd.f32 %v307, %v518
  %v520 = vpop.f32.mrb[0].mxu0
  %v521 = vpop.f32.mrb[0].mxu0
  %v522 = vadd.f32 %v310, %v521
  %v523 = vpop.f32.mrb[0].mxu0
  %524 = vmatprep.mubr.bf16.mxu0 0
  %525 = vmatmul.mubr.bf16.gmra.mrb[0].mxu0 %v372
  %v526 = vpop.f32.mrb[0].mxu0
  %v527 = vadd.f32 %v315, %v526
  %v528 = vpop.f32.mrb[0].mxu0
  %v529 = vpop.f32.mrb[0].mxu0
  %v530 = vadd.f32 %v318, %v529
  %v531 = vpop.f32.mrb[0].mxu0
  %532 = vmatprep.mubr.bf16.mxu0 0
  %533 = vmatmul.mubr.bf16.gmra.mrb[0].mxu0 %v375
  %v534 = vpop.f32.mrb[0].mxu0
  %v535 = vadd.f32 %v323, %v534
  %v536 = vpop.f32.mrb[0].mxu0
  %v537 = vpop.f32.mrb[0].mxu0
  %v538 = vadd.f32 %v326, %v537
  %v539 = vpop.f32.mrb[0].mxu0
  %540 = vdwg.mxu0
  %v541 = vld [vmem:[%s0 + $0x2] sm:$0xff]
  %v542 = vld [vmem:[%s0 + $0xa] sm:$0xff]
  %v543 = vld [vmem:[%s0 + $0x12] sm:$0xff]
  %v544 = vld [vmem:[%s0 + $0x1a] sm:$0xff]
  %v545 = vld [vmem:[%s0 + $0x22] sm:$0xff]
  %v546 = vld [vmem:[%s0 + $0x2a] sm:$0xff]
  %v547 = vld [vmem:[%s0 + $0x32] sm:$0xff]
  %v548 = vld [vmem:[%s0 + $0x3a] sm:$0xff]
  %v549 = vld [vmem:[%s0 + $0x42] sm:$0xff]
  %v550 = vld [vmem:[%s0 + $0x4a] sm:$0xff]
  %v551 = vld [vmem:[%s0 + $0x52] sm:$0xff]
  %v552 = vld [vmem:[%s0 + $0x5a] sm:$0xff]
  %v553 = vld [vmem:[%s0 + $0x62] sm:$0xff]
  %v554 = vld [vmem:[%s0 + $0x6a] sm:$0xff]
  %v555 = vld [vmem:[%s0 + $0x72] sm:$0xff]
  %v556 = vld [vmem:[%s0 + $0x7a] sm:$0xff]
  %v557 = vld [vmem:[%s0 + $0x82] sm:$0xff]
  %v558 = vld [vmem:[%s0 + $0x8a] sm:$0xff]
  %v559 = vld [vmem:[%s0 + $0x92] sm:$0xff]
  %v560 = vld [vmem:[%s0 + $0x9a] sm:$0xff]
  %v561 = vld [vmem:[%s0 + $0xa2] sm:$0xff]
  %v562 = vld [vmem:[%s0 + $0xaa] sm:$0xff]
  %v563 = vld [vmem:[%s0 + $0xb2] sm:$0xff]
  %v564 = vld [vmem:[%s0 + $0xba] sm:$0xff]
  %v565 = vld [vmem:[%s0 + $0xc2] sm:$0xff]
  %v566 = vld [vmem:[%s0 + $0xca] sm:$0xff]
  %v567 = vld [vmem:[%s0 + $0xd2] sm:$0xff]
  %v568 = vld [vmem:[%s0 + $0xda] sm:$0xff]
  %v569 = vld [vmem:[%s0 + $0xe2] sm:$0xff]
  %v570 = vld [vmem:[%s0 + $0xea] sm:$0xff]
  %v571 = vld [vmem:[%s0 + $0xf2] sm:$0xff]
  %v572 = vld [vmem:[%s0 + $0xfa] sm:$0xff]
  %v573 = vpack.c.bf16 %v542, %v541
  %v574 = vpack.c.bf16 %v544, %v543
  %v575 = vpack.c.bf16 %v546, %v545
  %v576 = vpack.c.bf16 %v548, %v547
  %v577 = vpack.c.bf16 %v550, %v549
  %v578 = vpack.c.bf16 %v552, %v551
  %v579 = vpack.c.bf16 %v554, %v553
  %v580 = vpack.c.bf16 %v556, %v555
  %v581 = vpack.c.bf16 %v558, %v557
  %v582 = vpack.c.bf16 %v560, %v559
  %v583 = vpack.c.bf16 %v562, %v561
  %v584 = vpack.c.bf16 %v564, %v563
  %v585 = vpack.c.bf16 %v566, %v565
  %v586 = vpack.c.bf16 %v568, %v567
  %v587 = vpack.c.bf16 %v570, %v569
  %v588 = vpack.c.bf16 %v572, %v571
  %s589 = scalar_lea.vmem %s1, 4
  %v590 = vld [vmem:[%s589] sm:$0x3]
  %v592 = vsel %vm115, %v573, 0
  %v595 = vsel %vm115, %v574, 0
  %v598 = vsel %vm115, %v575, 0
  %v601 = vsel %vm115, %v576, 0
  %v604 = vsel %vm115, %v577, 0
  %v607 = vsel %vm115, %v578, 0
  %v610 = vsel %vm115, %v579, 0
  %v613 = vsel %vm115, %v580, 0
  %v616 = vsel %vm115, %v581, 0
  %v619 = vsel %vm115, %v582, 0
  %v622 = vsel %vm115, %v583, 0
  %v625 = vsel %vm115, %v584, 0
  %v628 = vsel %vm115, %v585, 0
  %v631 = vsel %vm115, %v586, 0
  %v634 = vsel %vm115, %v587, 0
  %v637 = vsel %vm115, %v588, 0
  %v640 = vsel %vm164, %v590, 0
  %642 = vmatprep.subr.bf16.mxu0 0
  %643 = vmatpush1.bf16.msra.mxu0 %v640
  %644 = vmatprep.subr.bf16.mxu0 0
  %645 = vmatpush1.bf16.msra.mxu0 0
  %646 = vmatprep.subr.bf16.mxu0 0
  %647 = vmatpush1.bf16.msra.mxu0 0
  %648 = vmatprep.subr.bf16.mxu0 0
  %649 = vmatpush1.bf16.msra.mxu0 0
  %650 = vmatprep.subr.bf16.mxu0 0
  %651 = vmatpush1.bf16.msra.mxu0 0
  %652 = vmatprep.subr.bf16.mxu0 0
  %653 = vmatpush1.bf16.msra.mxu0 0
  %654 = vmatprep.subr.bf16.mxu0 0
  %655 = vmatpush1.bf16.msra.mxu0 0
  %656 = vmatprep.subr.bf16.mxu0 0
  %657 = vmatpush1.bf16.msra.mxu0 0
  %658 = vmatprep.subr.bf16.mxu0 0
  %659 = vmatpush1.bf16.msra.mxu0 0
  %660 = vmatprep.subr.bf16.mxu0 0
  %661 = vmatpush1.bf16.msra.mxu0 0
  %662 = vmatprep.subr.bf16.mxu0 0
  %663 = vmatpush1.bf16.msra.mxu0 0
  %664 = vmatprep.subr.bf16.mxu0 0
  %665 = vmatpush1.bf16.msra.mxu0 0
  %666 = vmatprep.subr.bf16.mxu0 0
  %667 = vmatpush1.bf16.msra.mxu0 0
  %668 = vmatprep.subr.bf16.mxu0 0
  %669 = vmatpush1.bf16.msra.mxu0 0
  %670 = vmatprep.subr.bf16.mxu0 0
  %671 = vmatpush1.bf16.msra.mxu0 0
  %672 = vmatprep.subr.bf16.mxu0 0
  %673 = vmatpush1.bf16.msra.mxu0 0
  %674 = vmatprep.mubr.bf16.mxu0 0
  %675 = vmatmul.mubr.bf16.gmra.mrb[0].mxu0 %v592
  %v676 = vpop.f32.mrb[0].mxu0
  %v677 = vadd.f32 0.0, %v676
  %v678 = vpop.f32.mrb[0].mxu0
  %v679 = vpop.f32.mrb[0].mxu0
  %v680 = vadd.f32 0.0, %v679
  %v681 = vpop.f32.mrb[0].mxu0
  %682 = vmatprep.mubr.bf16.mxu0 0
  %683 = vmatmul.mubr.bf16.gmra.mrb[0].mxu0 %v595
  %v684 = vpop.f32.mrb[0].mxu0
  %v685 = vadd.f32 0.0, %v684
  %v686 = vpop.f32.mrb[0].mxu0
  %v687 = vpop.f32.mrb[0].mxu0
  %v688 = vadd.f32 0.0, %v687
  %v689 = vpop.f32.mrb[0].mxu0
  %690 = vmatprep.mubr.bf16.mxu0 0
  %691 = vmatmul.mubr.bf16.gmra.mrb[0].mxu0 %v598
  %v692 = vpop.f32.mrb[0].mxu0
  %v693 = vadd.f32 0.0, %v692
  %v694 = vpop.f32.mrb[0].mxu0
  %v695 = vpop.f32.mrb[0].mxu0
  %v696 = vadd.f32 0.0, %v695
  %v697 = vpop.f32.mrb[0].mxu0
  %698 = vmatprep.mubr.bf16.mxu0 0
  %699 = vmatmul.mubr.bf16.gmra.mrb[0].mxu0 %v601
  %v700 = vpop.f32.mrb[0].mxu0
  %v701 = vadd.f32 0.0, %v700
  %v702 = vpop.f32.mrb[0].mxu0
  %v703 = vpop.f32.mrb[0].mxu0
  %v704 = vadd.f32 0.0, %v703
  %v705 = vpop.f32.mrb[0].mxu0
  %706 = vmatprep.mubr.bf16.mxu0 0
  %707 = vmatmul.mubr.bf16.gmra.mrb[0].mxu0 %v604
  %v708 = vpop.f32.mrb[0].mxu0
  %v709 = vadd.f32 0.0, %v708
  %v710 = vpop.f32.mrb[0].mxu0
  %v711 = vpop.f32.mrb[0].mxu0
  %v712 = vadd.f32 0.0, %v711
  %v713 = vpop.f32.mrb[0].mxu0
  %714 = vmatprep.mubr.bf16.mxu0 0
  %715 = vmatmul.mubr.bf16.gmra.mrb[0].mxu0 %v607
  %v716 = vpop.f32.mrb[0].mxu0
  %v717 = vadd.f32 0.0, %v716
  %v718 = vpop.f32.mrb[0].mxu0
  %v719 = vpop.f32.mrb[0].mxu0
  %v720 = vadd.f32 0.0, %v719
  %v721 = vpop.f32.mrb[0].mxu0
  %722 = vmatprep.mubr.bf16.mxu0 0
  %723 = vmatmul.mubr.bf16.gmra.mrb[0].mxu0 %v610
  %v724 = vpop.f32.mrb[0].mxu0
  %v725 = vadd.f32 0.0, %v724
  %v726 = vpop.f32.mrb[0].mxu0
  %v727 = vpop.f32.mrb[0].mxu0
  %v728 = vadd.f32 0.0, %v727
  %v729 = vpop.f32.mrb[0].mxu0
  %730 = vmatprep.mubr.bf16.mxu0 0
  %731 = vmatmul.mubr.bf16.gmra.mrb[0].mxu0 %v613
  %v732 = vpop.f32.mrb[0].mxu0
  %v733 = vadd.f32 0.0, %v732
  %v734 = vpop.f32.mrb[0].mxu0
  %v735 = vpop.f32.mrb[0].mxu0
  %v736 = vadd.f32 0.0, %v735
  %v737 = vpop.f32.mrb[0].mxu0
  %738 = vmatprep.mubr.bf16.mxu0 0
  %739 = vmatmul.mubr.bf16.gmra.mrb[0].mxu0 %v616
  %v740 = vpop.f32.mrb[0].mxu0
  %v741 = vadd.f32 0.0, %v740
  %v742 = vpop.f32.mrb[0].mxu0
  %v743 = vpop.f32.mrb[0].mxu0
  %v744 = vadd.f32 0.0, %v743
  %v745 = vpop.f32.mrb[0].mxu0
  %746 = vmatprep.mubr.bf16.mxu0 0
  %747 = vmatmul.mubr.bf16.gmra.mrb[0].mxu0 %v619
  %v748 = vpop.f32.mrb[0].mxu0
  %v749 = vadd.f32 0.0, %v748
  %v750 = vpop.f32.mrb[0].mxu0
  %v751 = vpop.f32.mrb[0].mxu0
  %v752 = vadd.f32 0.0, %v751
  %v753 = vpop.f32.mrb[0].mxu0
  %754 = vmatprep.mubr.bf16.mxu0 0
  %755 = vmatmul.mubr.bf16.gmra.mrb[0].mxu0 %v622
  %v756 = vpop.f32.mrb[0].mxu0
  %v757 = vadd.f32 0.0, %v756
  %v758 = vpop.f32.mrb[0].mxu0
  %v759 = vpop.f32.mrb[0].mxu0
  %v760 = vadd.f32 0.0, %v759
  %v761 = vpop.f32.mrb[0].mxu0
  %762 = vmatprep.mubr.bf16.mxu0 0
  %763 = vmatmul.mubr.bf16.gmra.mrb[0].mxu0 %v625
  %v764 = vpop.f32.mrb[0].mxu0
  %v765 = vadd.f32 0.0, %v764
  %v766 = vpop.f32.mrb[0].mxu0
  %v767 = vpop.f32.mrb[0].mxu0
  %v768 = vadd.f32 0.0, %v767
  %v769 = vpop.f32.mrb[0].mxu0
  %770 = vmatprep.mubr.bf16.mxu0 0
  %771 = vmatmul.mubr.bf16.gmra.mrb[0].mxu0 %v628
  %v772 = vpop.f32.mrb[0].mxu0
  %v773 = vadd.f32 0.0, %v772
  %v774 = vpop.f32.mrb[0].mxu0
  %v775 = vpop.f32.mrb[0].mxu0
  %v776 = vadd.f32 0.0, %v775
  %v777 = vpop.f32.mrb[0].mxu0
  %778 = vmatprep.mubr.bf16.mxu0 0
  %779 = vmatmul.mubr.bf16.gmra.mrb[0].mxu0 %v631
  %v780 = vpop.f32.mrb[0].mxu0
  %v781 = vadd.f32 0.0, %v780
  %v782 = vpop.f32.mrb[0].mxu0
  %v783 = vpop.f32.mrb[0].mxu0
  %v784 = vadd.f32 0.0, %v783
  %v785 = vpop.f32.mrb[0].mxu0
  %786 = vmatprep.mubr.bf16.mxu0 0
  %787 = vmatmul.mubr.bf16.gmra.mrb[0].mxu0 %v634
  %v788 = vpop.f32.mrb[0].mxu0
  %v789 = vadd.f32 0.0, %v788
  %v790 = vpop.f32.mrb[0].mxu0
  %v791 = vpop.f32.mrb[0].mxu0
  %v792 = vadd.f32 0.0, %v791
  %v793 = vpop.f32.mrb[0].mxu0
  %794 = vmatprep.mubr.bf16.mxu0 0
  %795 = vmatmul.mubr.bf16.gmra.mrb[0].mxu0 %v637
  %v796 = vpop.f32.mrb[0].mxu0
  %v797 = vadd.f32 0.0, %v796
  %v798 = vpop.f32.mrb[0].mxu0
  %v799 = vpop.f32.mrb[0].mxu0
  %v800 = vadd.f32 0.0, %v799
  %v801 = vpop.f32.mrb[0].mxu0
  %802 = vdwg.mxu0
  %v803 = vadd.f32 %v415, %v677
  %v804 = vadd.f32 %v418, %v680
  %v805 = vadd.f32 %v423, %v685
  %v806 = vadd.f32 %v426, %v688
  %v807 = vadd.f32 %v431, %v693
  %v808 = vadd.f32 %v434, %v696
  %v809 = vadd.f32 %v439, %v701
  %v810 = vadd.f32 %v442, %v704
  %v811 = vadd.f32 %v447, %v709
  %v812 = vadd.f32 %v450, %v712
  %v813 = vadd.f32 %v455, %v717
  %v814 = vadd.f32 %v458, %v720
  %v815 = vadd.f32 %v463, %v725
  %v816 = vadd.f32 %v466, %v728
  %v817 = vadd.f32 %v471, %v733
  %v818 = vadd.f32 %v474, %v736
  %v819 = vadd.f32 %v479, %v741
  %v820 = vadd.f32 %v482, %v744
  %v821 = vadd.f32 %v487, %v749
  %v822 = vadd.f32 %v490, %v752
  %v823 = vadd.f32 %v495, %v757
  %v824 = vadd.f32 %v498, %v760
  %v825 = vadd.f32 %v503, %v765
  %v826 = vadd.f32 %v506, %v768
  %v827 = vadd.f32 %v511, %v773
  %v828 = vadd.f32 %v514, %v776
  %v829 = vadd.f32 %v519, %v781
  %v830 = vadd.f32 %v522, %v784
  %v831 = vadd.f32 %v527, %v789
  %v832 = vadd.f32 %v530, %v792
  %v833 = vadd.f32 %v535, %v797
  %v834 = vadd.f32 %v538, %v800
  %v835 = vld [vmem:[%s0 + $0x10] sm:$0xff]
  %v836 = vld [vmem:[%s0 + $0x18] sm:$0xff]
  %v837 = vld [vmem:[%s0 + $0x20] sm:$0xff]
  %v838 = vld [vmem:[%s0 + $0x28] sm:$0xff]
  %v839 = vld [vmem:[%s0 + $0x30] sm:$0xff]
  %v840 = vld [vmem:[%s0 + $0x38] sm:$0xff]
  %v841 = vld [vmem:[%s0 + $0x40] sm:$0xff]
  %v842 = vld [vmem:[%s0 + $0x48] sm:$0xff]
  %v843 = vld [vmem:[%s0 + $0x50] sm:$0xff]
  %v844 = vld [vmem:[%s0 + $0x58] sm:$0xff]
  %v845 = vld [vmem:[%s0 + $0x60] sm:$0xff]
  %v846 = vld [vmem:[%s0 + $0x68] sm:$0xff]
  %v847 = vld [vmem:[%s0 + $0x70] sm:$0xff]
  %v848 = vld [vmem:[%s0 + $0x78] sm:$0xff]
  %v849 = vld [vmem:[%s0 + $0x80] sm:$0xff]
  %v850 = vld [vmem:[%s0 + $0x88] sm:$0xff]
  %v851 = vld [vmem:[%s0 + $0x90] sm:$0xff]
  %v852 = vld [vmem:[%s0 + $0x98] sm:$0xff]
  %v853 = vld [vmem:[%s0 + $0xa0] sm:$0xff]
  %v854 = vld [vmem:[%s0 + $0xa8] sm:$0xff]
  %v855 = vld [vmem:[%s0 + $0xb0] sm:$0xff]
  %v856 = vld [vmem:[%s0 + $0xb8] sm:$0xff]
  %v857 = vld [vmem:[%s0 + $0xc0] sm:$0xff]
  %v858 = vld [vmem:[%s0 + $0xc8] sm:$0xff]
  %v859 = vld [vmem:[%s0 + $0xd0] sm:$0xff]
  %v860 = vld [vmem:[%s0 + $0xd8] sm:$0xff]
  %v861 = vld [vmem:[%s0 + $0xe0] sm:$0xff]
  %v862 = vld [vmem:[%s0 + $0xe8] sm:$0xff]
  %v863 = vld [vmem:[%s0 + $0xf0] sm:$0xff]
  %v864 = vld [vmem:[%s0 + $0xf8] sm:$0xff]
  %v865 = vld [vmem:[%s0 + $0x100] sm:$0xff]
  %v866 = vld [vmem:[%s0 + $0x108] sm:$0xff]
  %v867 = vpack.c.bf16 %v836, %v835
  %v868 = vpack.c.bf16 %v838, %v837
  %v869 = vpack.c.bf16 %v840, %v839
  %v870 = vpack.c.bf16 %v842, %v841
  %v871 = vpack.c.bf16 %v844, %v843
  %v872 = vpack.c.bf16 %v846, %v845
  %v873 = vpack.c.bf16 %v848, %v847
  %v874 = vpack.c.bf16 %v850, %v849
  %v875 = vpack.c.bf16 %v852, %v851
  %v876 = vpack.c.bf16 %v854, %v853
  %v877 = vpack.c.bf16 %v856, %v855
  %v878 = vpack.c.bf16 %v858, %v857
  %v879 = vpack.c.bf16 %v860, %v859
  %v880 = vpack.c.bf16 %v862, %v861
  %v881 = vpack.c.bf16 %v864, %v863
  %v882 = vpack.c.bf16 %v866, %v865
  %s883 = scalar_lea.vmem %s1, 6
  %v884 = vld [vmem:[%s883] sm:$0x3]
  %v886 = vsel %vm115, %v867, 0
  %v889 = vsel %vm115, %v868, 0
  %v892 = vsel %vm115, %v869, 0
  %v895 = vsel %vm115, %v870, 0
  %v898 = vsel %vm115, %v871, 0
  %v901 = vsel %vm115, %v872, 0
  %v904 = vsel %vm115, %v873, 0
  %v907 = vsel %vm115, %v874, 0
  %v910 = vsel %vm115, %v875, 0
  %v913 = vsel %vm115, %v876, 0
  %v916 = vsel %vm115, %v877, 0
  %v919 = vsel %vm115, %v878, 0
  %v922 = vsel %vm115, %v879, 0
  %v925 = vsel %vm115, %v880, 0
  %v928 = vsel %vm115, %v881, 0
  %v931 = vsel %vm115, %v882, 0
  %v934 = vsel %vm164, %v884, 0
  %936 = vmatprep.subr.bf16.mxu0 0
  %937 = vmatpush1.bf16.msra.mxu0 %v934
  %938 = vmatprep.subr.bf16.mxu0 0
  %939 = vmatpush1.bf16.msra.mxu0 0
  %940 = vmatprep.subr.bf16.mxu0 0
  %941 = vmatpush1.bf16.msra.mxu0 0
  %942 = vmatprep.subr.bf16.mxu0 0
  %943 = vmatpush1.bf16.msra.mxu0 0
  %944 = vmatprep.subr.bf16.mxu0 0
  %945 = vmatpush1.bf16.msra.mxu0 0
  %946 = vmatprep.subr.bf16.mxu0 0
  %947 = vmatpush1.bf16.msra.mxu0 0
  %948 = vmatprep.subr.bf16.mxu0 0
  %949 = vmatpush1.bf16.msra.mxu0 0
  %950 = vmatprep.subr.bf16.mxu0 0
  %951 = vmatpush1.bf16.msra.mxu0 0
  %952 = vmatprep.subr.bf16.mxu0 0
  %953 = vmatpush1.bf16.msra.mxu0 0
  %954 = vmatprep.subr.bf16.mxu0 0
  %955 = vmatpush1.bf16.msra.mxu0 0
  %956 = vmatprep.subr.bf16.mxu0 0
  %957 = vmatpush1.bf16.msra.mxu0 0
  %958 = vmatprep.subr.bf16.mxu0 0
  %959 = vmatpush1.bf16.msra.mxu0 0
  %960 = vmatprep.subr.bf16.mxu0 0
  %961 = vmatpush1.bf16.msra.mxu0 0
  %962 = vmatprep.subr.bf16.mxu0 0
  %963 = vmatpush1.bf16.msra.mxu0 0
  %964 = vmatprep.subr.bf16.mxu0 0
  %965 = vmatpush1.bf16.msra.mxu0 0
  %966 = vmatprep.subr.bf16.mxu0 0
  %967 = vmatpush1.bf16.msra.mxu0 0
  %968 = vmatprep.mubr.bf16.mxu0 0
  %969 = vmatmul.mubr.bf16.gmra.mrb[0].mxu0 %v886
  %v970 = vpop.f32.mrb[0].mxu0
  %v971 = vadd.f32 0.0, %v970
  %v972 = vpop.f32.mrb[0].mxu0
  %v973 = vpop.f32.mrb[0].mxu0
  %v974 = vadd.f32 0.0, %v973
  %v975 = vpop.f32.mrb[0].mxu0
  %976 = vmatprep.mubr.bf16.mxu0 0
  %977 = vmatmul.mubr.bf16.gmra.mrb[0].mxu0 %v889
  %v978 = vpop.f32.mrb[0].mxu0
  %v979 = vadd.f32 0.0, %v978
  %v980 = vpop.f32.mrb[0].mxu0
  %v981 = vpop.f32.mrb[0].mxu0
  %v982 = vadd.f32 0.0, %v981
  %v983 = vpop.f32.mrb[0].mxu0
  %984 = vmatprep.mubr.bf16.mxu0 0
  %985 = vmatmul.mubr.bf16.gmra.mrb[0].mxu0 %v892
  %v986 = vpop.f32.mrb[0].mxu0
  %v987 = vadd.f32 0.0, %v986
  %v988 = vpop.f32.mrb[0].mxu0
  %v989 = vpop.f32.mrb[0].mxu0
  %v990 = vadd.f32 0.0, %v989
  %v991 = vpop.f32.mrb[0].mxu0
  %992 = vmatprep.mubr.bf16.mxu0 0
  %993 = vmatmul.mubr.bf16.gmra.mrb[0].mxu0 %v895
  %v994 = vpop.f32.mrb[0].mxu0
  %v995 = vadd.f32 0.0, %v994
  %v996 = vpop.f32.mrb[0].mxu0
  %v997 = vpop.f32.mrb[0].mxu0
  %v998 = vadd.f32 0.0, %v997
  %v999 = vpop.f32.mrb[0].mxu0
  %1000 = vmatprep.mubr.bf16.mxu0 0
  %1001 = vmatmul.mubr.bf16.gmra.mrb[0].mxu0 %v898
  %v1002 = vpop.f32.mrb[0].mxu0
  %v1003 = vadd.f32 0.0, %v1002
  %v1004 = vpop.f32.mrb[0].mxu0
  %v1005 = vpop.f32.mrb[0].mxu0
  %v1006 = vadd.f32 0.0, %v1005
  %v1007 = vpop.f32.mrb[0].mxu0
  %1008 = vmatprep.mubr.bf16.mxu0 0
  %1009 = vmatmul.mubr.bf16.gmra.mrb[0].mxu0 %v901
  %v1010 = vpop.f32.mrb[0].mxu0
  %v1011 = vadd.f32 0.0, %v1010
  %v1012 = vpop.f32.mrb[0].mxu0
  %v1013 = vpop.f32.mrb[0].mxu0
  %v1014 = vadd.f32 0.0, %v1013
  %v1015 = vpop.f32.mrb[0].mxu0
  %1016 = vmatprep.mubr.bf16.mxu0 0
  %1017 = vmatmul.mubr.bf16.gmra.mrb[0].mxu0 %v904
  %v1018 = vpop.f32.mrb[0].mxu0
  %v1019 = vadd.f32 0.0, %v1018
  %v1020 = vpop.f32.mrb[0].mxu0
  %v1021 = vpop.f32.mrb[0].mxu0
  %v1022 = vadd.f32 0.0, %v1021
  %v1023 = vpop.f32.mrb[0].mxu0
  %1024 = vmatprep.mubr.bf16.mxu0 0
  %1025 = vmatmul.mubr.bf16.gmra.mrb[0].mxu0 %v907
  %v1026 = vpop.f32.mrb[0].mxu0
  %v1027 = vadd.f32 0.0, %v1026
  %v1028 = vpop.f32.mrb[0].mxu0
  %v1029 = vpop.f32.mrb[0].mxu0
  %v1030 = vadd.f32 0.0, %v1029
  %v1031 = vpop.f32.mrb[0].mxu0
  %1032 = vmatprep.mubr.bf16.mxu0 0
  %1033 = vmatmul.mubr.bf16.gmra.mrb[0].mxu0 %v910
  %v1034 = vpop.f32.mrb[0].mxu0
  %v1035 = vadd.f32 0.0, %v1034
  %v1036 = vpop.f32.mrb[0].mxu0
  %v1037 = vpop.f32.mrb[0].mxu0
  %v1038 = vadd.f32 0.0, %v1037
  %v1039 = vpop.f32.mrb[0].mxu0
  %1040 = vmatprep.mubr.bf16.mxu0 0
  %1041 = vmatmul.mubr.bf16.gmra.mrb[0].mxu0 %v913
  %v1042 = vpop.f32.mrb[0].mxu0
  %v1043 = vadd.f32 0.0, %v1042
  %v1044 = vpop.f32.mrb[0].mxu0
  %v1045 = vpop.f32.mrb[0].mxu0
  %v1046 = vadd.f32 0.0, %v1045
  %v1047 = vpop.f32.mrb[0].mxu0
  %1048 = vmatprep.mubr.bf16.mxu0 0
  %1049 = vmatmul.mubr.bf16.gmra.mrb[0].mxu0 %v916
  %v1050 = vpop.f32.mrb[0].mxu0
  %v1051 = vadd.f32 0.0, %v1050
  %v1052 = vpop.f32.mrb[0].mxu0
  %v1053 = vpop.f32.mrb[0].mxu0
  %v1054 = vadd.f32 0.0, %v1053
  %v1055 = vpop.f32.mrb[0].mxu0
  %1056 = vmatprep.mubr.bf16.mxu0 0
  %1057 = vmatmul.mubr.bf16.gmra.mrb[0].mxu0 %v919
  %v1058 = vpop.f32.mrb[0].mxu0
  %v1059 = vadd.f32 0.0, %v1058
  %v1060 = vpop.f32.mrb[0].mxu0
  %v1061 = vpop.f32.mrb[0].mxu0
  %v1062 = vadd.f32 0.0, %v1061
  %v1063 = vpop.f32.mrb[0].mxu0
  %1064 = vmatprep.mubr.bf16.mxu0 0
  %1065 = vmatmul.mubr.bf16.gmra.mrb[0].mxu0 %v922
  %v1066 = vpop.f32.mrb[0].mxu0
  %v1067 = vadd.f32 0.0, %v1066
  %v1068 = vpop.f32.mrb[0].mxu0
  %v1069 = vpop.f32.mrb[0].mxu0
  %v1070 = vadd.f32 0.0, %v1069
  %v1071 = vpop.f32.mrb[0].mxu0
  %1072 = vmatprep.mubr.bf16.mxu0 0
  %1073 = vmatmul.mubr.bf16.gmra.mrb[0].mxu0 %v925
  %v1074 = vpop.f32.mrb[0].mxu0
  %v1075 = vadd.f32 0.0, %v1074
  %v1076 = vpop.f32.mrb[0].mxu0
  %v1077 = vpop.f32.mrb[0].mxu0
  %v1078 = vadd.f32 0.0, %v1077
  %v1079 = vpop.f32.mrb[0].mxu0
  %1080 = vmatprep.mubr.bf16.mxu0 0
  %1081 = vmatmul.mubr.bf16.gmra.mrb[0].mxu0 %v928
  %v1082 = vpop.f32.mrb[0].mxu0
  %v1083 = vadd.f32 0.0, %v1082
  %v1084 = vpop.f32.mrb[0].mxu0
  %v1085 = vpop.f32.mrb[0].mxu0
  %v1086 = vadd.f32 0.0, %v1085
  %v1087 = vpop.f32.mrb[0].mxu0
  %1088 = vmatprep.mubr.bf16.mxu0 0
  %1089 = vmatmul.mubr.bf16.gmra.mrb[0].mxu0 %v931
  %v1090 = vpop.f32.mrb[0].mxu0
  %v1091 = vadd.f32 0.0, %v1090
  %v1092 = vpop.f32.mrb[0].mxu0
  %v1093 = vpop.f32.mrb[0].mxu0
  %v1094 = vadd.f32 0.0, %v1093
  %v1095 = vpop.f32.mrb[0].mxu0
  %1096 = vdwg.mxu0
  %v1097 = vadd.f32 %v803, %v971
  %v1098 = vadd.f32 %v804, %v974
  %v1099 = vadd.f32 %v805, %v979
  %v1100 = vadd.f32 %v806, %v982
  %v1101 = vadd.f32 %v807, %v987
  %v1102 = vadd.f32 %v808, %v990
  %v1103 = vadd.f32 %v809, %v995
  %v1104 = vadd.f32 %v810, %v998
  %v1105 = vadd.f32 %v811, %v1003
  %v1106 = vadd.f32 %v812, %v1006
  %v1107 = vadd.f32 %v813, %v1011
  %v1108 = vadd.f32 %v814, %v1014
  %v1109 = vadd.f32 %v815, %v1019
  %v1110 = vadd.f32 %v816, %v1022
  %v1111 = vadd.f32 %v817, %v1027
  %v1112 = vadd.f32 %v818, %v1030
  %v1113 = vadd.f32 %v819, %v1035
  %v1114 = vadd.f32 %v820, %v1038
  %v1115 = vadd.f32 %v821, %v1043
  %v1116 = vadd.f32 %v822, %v1046
  %v1117 = vadd.f32 %v823, %v1051
  %v1118 = vadd.f32 %v824, %v1054
  %v1119 = vadd.f32 %v825, %v1059
  %v1120 = vadd.f32 %v826, %v1062
  %v1121 = vadd.f32 %v827, %v1067
  %v1122 = vadd.f32 %v828, %v1070
  %v1123 = vadd.f32 %v829, %v1075
  %v1124 = vadd.f32 %v830, %v1078
  %v1125 = vadd.f32 %v831, %v1083
  %v1126 = vadd.f32 %v832, %v1086
  %v1127 = vadd.f32 %v833, %v1091
  %v1128 = vadd.f32 %v834, %v1094
  %v1129 = vld [vmem:[%s0 + $0x11] sm:$0xff]
  %v1130 = vld [vmem:[%s0 + $0x19] sm:$0xff]
  %v1131 = vld [vmem:[%s0 + $0x21] sm:$0xff]
  %v1132 = vld [vmem:[%s0 + $0x29] sm:$0xff]
  %v1133 = vld [vmem:[%s0 + $0x31] sm:$0xff]
  %v1134 = vld [vmem:[%s0 + $0x39] sm:$0xff]
  %v1135 = vld [vmem:[%s0 + $0x41] sm:$0xff]
  %v1136 = vld [vmem:[%s0 + $0x49] sm:$0xff]
  %v1137 = vld [vmem:[%s0 + $0x51] sm:$0xff]
  %v1138 = vld [vmem:[%s0 + $0x59] sm:$0xff]
  %v1139 = vld [vmem:[%s0 + $0x61] sm:$0xff]
  %v1140 = vld [vmem:[%s0 + $0x69] sm:$0xff]
  %v1141 = vld [vmem:[%s0 + $0x71] sm:$0xff]
  %v1142 = vld [vmem:[%s0 + $0x79] sm:$0xff]
  %v1143 = vld [vmem:[%s0 + $0x81] sm:$0xff]
  %v1144 = vld [vmem:[%s0 + $0x89] sm:$0xff]
  %v1145 = vld [vmem:[%s0 + $0x91] sm:$0xff]
  %v1146 = vld [vmem:[%s0 + $0x99] sm:$0xff]
  %v1147 = vld [vmem:[%s0 + $0xa1] sm:$0xff]
  %v1148 = vld [vmem:[%s0 + $0xa9] sm:$0xff]
  %v1149 = vld [vmem:[%s0 + $0xb1] sm:$0xff]
  %v1150 = vld [vmem:[%s0 + $0xb9] sm:$0xff]
  %v1151 = vld [vmem:[%s0 + $0xc1] sm:$0xff]
  %v1152 = vld [vmem:[%s0 + $0xc9] sm:$0xff]
  %v1153 = vld [vmem:[%s0 + $0xd1] sm:$0xff]
  %v1154 = vld [vmem:[%s0 + $0xd9] sm:$0xff]
  %v1155 = vld [vmem:[%s0 + $0xe1] sm:$0xff]
  %v1156 = vld [vmem:[%s0 + $0xe9] sm:$0xff]
  %v1157 = vld [vmem:[%s0 + $0xf1] sm:$0xff]
  %v1158 = vld [vmem:[%s0 + $0xf9] sm:$0xff]
  %v1159 = vld [vmem:[%s0 + $0x101] sm:$0xff]
  %v1160 = vld [vmem:[%s0 + $0x109] sm:$0xff]
  %v1161 = vpack.c.bf16 %v1130, %v1129
  %v1162 = vpack.c.bf16 %v1132, %v1131
  %v1163 = vpack.c.bf16 %v1134, %v1133
  %v1164 = vpack.c.bf16 %v1136, %v1135
  %v1165 = vpack.c.bf16 %v1138, %v1137
  %v1166 = vpack.c.bf16 %v1140, %v1139
  %v1167 = vpack.c.bf16 %v1142, %v1141
  %v1168 = vpack.c.bf16 %v1144, %v1143
  %v1169 = vpack.c.bf16 %v1146, %v1145
  %v1170 = vpack.c.bf16 %v1148, %v1147
  %v1171 = vpack.c.bf16 %v1150, %v1149
  %v1172 = vpack.c.bf16 %v1152, %v1151
  %v1173 = vpack.c.bf16 %v1154, %v1153
  %v1174 = vpack.c.bf16 %v1156, %v1155
  %v1175 = vpack.c.bf16 %v1158, %v1157
  %v1176 = vpack.c.bf16 %v1160, %v1159
  %s1177 = scalar_lea.vmem %s1, 8
  %v1178 = vld [vmem:[%s1177] sm:$0x3]
  %v1180 = vsel %vm115, %v1161, 0
  %v1183 = vsel %vm115, %v1162, 0
  %v1186 = vsel %vm115, %v1163, 0
  %v1189 = vsel %vm115, %v1164, 0
  %v1192 = vsel %vm115, %v1165, 0
  %v1195 = vsel %vm115, %v1166, 0
  %v1198 = vsel %vm115, %v1167, 0
  %v1201 = vsel %vm115, %v1168, 0
  %v1204 = vsel %vm115, %v1169, 0
  %v1207 = vsel %vm115, %v1170, 0
  %v1210 = vsel %vm115, %v1171, 0
  %v1213 = vsel %vm115, %v1172, 0
  %v1216 = vsel %vm115, %v1173, 0
  %v1219 = vsel %vm115, %v1174, 0
  %v1222 = vsel %vm115, %v1175, 0
  %v1225 = vsel %vm115, %v1176, 0
  %v1228 = vsel %vm164, %v1178, 0
  %1230 = vmatprep.subr.bf16.mxu0 0
  %1231 = vmatpush1.bf16.msra.mxu0 %v1228
  %1232 = vmatprep.subr.bf16.mxu0 0
  %1233 = vmatpush1.bf16.msra.mxu0 0
  %1234 = vmatprep.subr.bf16.mxu0 0
  %1235 = vmatpush1.bf16.msra.mxu0 0
  %1236 = vmatprep.subr.bf16.mxu0 0
  %1237 = vmatpush1.bf16.msra.mxu0 0
  %1238 = vmatprep.subr.bf16.mxu0 0
  %1239 = vmatpush1.bf16.msra.mxu0 0
  %1240 = vmatprep.subr.bf16.mxu0 0
  %1241 = vmatpush1.bf16.msra.mxu0 0
  %1242 = vmatprep.subr.bf16.mxu0 0
  %1243 = vmatpush1.bf16.msra.mxu0 0
  %1244 = vmatprep.subr.bf16.mxu0 0
  %1245 = vmatpush1.bf16.msra.mxu0 0
  %1246 = vmatprep.subr.bf16.mxu0 0
  %1247 = vmatpush1.bf16.msra.mxu0 0
  %1248 = vmatprep.subr.bf16.mxu0 0
  %1249 = vmatpush1.bf16.msra.mxu0 0
  %1250 = vmatprep.subr.bf16.mxu0 0
  %1251 = vmatpush1.bf16.msra.mxu0 0
  %1252 = vmatprep.subr.bf16.mxu0 0
  %1253 = vmatpush1.bf16.msra.mxu0 0
  %1254 = vmatprep.subr.bf16.mxu0 0
  %1255 = vmatpush1.bf16.msra.mxu0 0
  %1256 = vmatprep.subr.bf16.mxu0 0
  %1257 = vmatpush1.bf16.msra.mxu0 0
  %1258 = vmatprep.subr.bf16.mxu0 0
  %1259 = vmatpush1.bf16.msra.mxu0 0
  %1260 = vmatprep.subr.bf16.mxu0 0
  %1261 = vmatpush1.bf16.msra.mxu0 0
  %1262 = vmatprep.mubr.bf16.mxu0 0
  %1263 = vmatmul.mubr.bf16.gmra.mrb[0].mxu0 %v1180
  %v1264 = vpop.f32.mrb[0].mxu0
  %v1265 = vadd.f32 0.0, %v1264
  %v1266 = vpop.f32.mrb[0].mxu0
  %v1267 = vpop.f32.mrb[0].mxu0
  %v1268 = vadd.f32 0.0, %v1267
  %v1269 = vpop.f32.mrb[0].mxu0
  %1270 = vmatprep.mubr.bf16.mxu0 0
  %1271 = vmatmul.mubr.bf16.gmra.mrb[0].mxu0 %v1183
  %v1272 = vpop.f32.mrb[0].mxu0
  %v1273 = vadd.f32 0.0, %v1272
  %v1274 = vpop.f32.mrb[0].mxu0
  %v1275 = vpop.f32.mrb[0].mxu0
  %v1276 = vadd.f32 0.0, %v1275
  %v1277 = vpop.f32.mrb[0].mxu0
  %1278 = vmatprep.mubr.bf16.mxu0 0
  %1279 = vmatmul.mubr.bf16.gmra.mrb[0].mxu0 %v1186
  %v1280 = vpop.f32.mrb[0].mxu0
  %v1281 = vadd.f32 0.0, %v1280
  %v1282 = vpop.f32.mrb[0].mxu0
  %v1283 = vpop.f32.mrb[0].mxu0
  %v1284 = vadd.f32 0.0, %v1283
  %v1285 = vpop.f32.mrb[0].mxu0
  %1286 = vmatprep.mubr.bf16.mxu0 0
  %1287 = vmatmul.mubr.bf16.gmra.mrb[0].mxu0 %v1189
  %v1288 = vpop.f32.mrb[0].mxu0
  %v1289 = vadd.f32 0.0, %v1288
  %v1290 = vpop.f32.mrb[0].mxu0
  %v1291 = vpop.f32.mrb[0].mxu0
  %v1292 = vadd.f32 0.0, %v1291
  %v1293 = vpop.f32.mrb[0].mxu0
  %1294 = vmatprep.mubr.bf16.mxu0 0
  %1295 = vmatmul.mubr.bf16.gmra.mrb[0].mxu0 %v1192
  %v1296 = vpop.f32.mrb[0].mxu0
  %v1297 = vadd.f32 0.0, %v1296
  %v1298 = vpop.f32.mrb[0].mxu0
  %v1299 = vpop.f32.mrb[0].mxu0
  %v1300 = vadd.f32 0.0, %v1299
  %v1301 = vpop.f32.mrb[0].mxu0
  %1302 = vmatprep.mubr.bf16.mxu0 0
  %1303 = vmatmul.mubr.bf16.gmra.mrb[0].mxu0 %v1195
  %v1304 = vpop.f32.mrb[0].mxu0
  %v1305 = vadd.f32 0.0, %v1304
  %v1306 = vpop.f32.mrb[0].mxu0
  %v1307 = vpop.f32.mrb[0].mxu0
  %v1308 = vadd.f32 0.0, %v1307
  %v1309 = vpop.f32.mrb[0].mxu0
  %1310 = vmatprep.mubr.bf16.mxu0 0
  %1311 = vmatmul.mubr.bf16.gmra.mrb[0].mxu0 %v1198
  %v1312 = vpop.f32.mrb[0].mxu0
  %v1313 = vadd.f32 0.0, %v1312
  %v1314 = vpop.f32.mrb[0].mxu0
  %v1315 = vpop.f32.mrb[0].mxu0
  %v1316 = vadd.f32 0.0, %v1315
  %v1317 = vpop.f32.mrb[0].mxu0
  %1318 = vmatprep.mubr.bf16.mxu0 0
  %1319 = vmatmul.mubr.bf16.gmra.mrb[0].mxu0 %v1201
  %v1320 = vpop.f32.mrb[0].mxu0
  %v1321 = vadd.f32 0.0, %v1320
  %v1322 = vpop.f32.mrb[0].mxu0
  %v1323 = vpop.f32.mrb[0].mxu0
  %v1324 = vadd.f32 0.0, %v1323
  %v1325 = vpop.f32.mrb[0].mxu0
  %1326 = vmatprep.mubr.bf16.mxu0 0
  %1327 = vmatmul.mubr.bf16.gmra.mrb[0].mxu0 %v1204
  %v1328 = vpop.f32.mrb[0].mxu0
  %v1329 = vadd.f32 0.0, %v1328
  %v1330 = vpop.f32.mrb[0].mxu0
  %v1331 = vpop.f32.mrb[0].mxu0
  %v1332 = vadd.f32 0.0, %v1331
  %v1333 = vpop.f32.mrb[0].mxu0
  %1334 = vmatprep.mubr.bf16.mxu0 0
  %1335 = vmatmul.mubr.bf16.gmra.mrb[0].mxu0 %v1207
  %v1336 = vpop.f32.mrb[0].mxu0
  %v1337 = vadd.f32 0.0, %v1336
  %v1338 = vpop.f32.mrb[0].mxu0
  %v1339 = vpop.f32.mrb[0].mxu0
  %v1340 = vadd.f32 0.0, %v1339
  %v1341 = vpop.f32.mrb[0].mxu0
  %1342 = vmatprep.mubr.bf16.mxu0 0
  %1343 = vmatmul.mubr.bf16.gmra.mrb[0].mxu0 %v1210
  %v1344 = vpop.f32.mrb[0].mxu0
  %v1345 = vadd.f32 0.0, %v1344
  %v1346 = vpop.f32.mrb[0].mxu0
  %v1347 = vpop.f32.mrb[0].mxu0
  %v1348 = vadd.f32 0.0, %v1347
  %v1349 = vpop.f32.mrb[0].mxu0
  %1350 = vmatprep.mubr.bf16.mxu0 0
  %1351 = vmatmul.mubr.bf16.gmra.mrb[0].mxu0 %v1213
  %v1352 = vpop.f32.mrb[0].mxu0
  %v1353 = vadd.f32 0.0, %v1352
  %v1354 = vpop.f32.mrb[0].mxu0
  %v1355 = vpop.f32.mrb[0].mxu0
  %v1356 = vadd.f32 0.0, %v1355
  %v1357 = vpop.f32.mrb[0].mxu0
  %1358 = vmatprep.mubr.bf16.mxu0 0
  %1359 = vmatmul.mubr.bf16.gmra.mrb[0].mxu0 %v1216
  %v1360 = vpop.f32.mrb[0].mxu0
  %v1361 = vadd.f32 0.0, %v1360
  %v1362 = vpop.f32.mrb[0].mxu0
  %v1363 = vpop.f32.mrb[0].mxu0
  %v1364 = vadd.f32 0.0, %v1363
  %v1365 = vpop.f32.mrb[0].mxu0
  %1366 = vmatprep.mubr.bf16.mxu0 0
  %1367 = vmatmul.mubr.bf16.gmra.mrb[0].mxu0 %v1219
  %v1368 = vpop.f32.mrb[0].mxu0
  %v1369 = vadd.f32 0.0, %v1368
  %v1370 = vpop.f32.mrb[0].mxu0
  %v1371 = vpop.f32.mrb[0].mxu0
  %v1372 = vadd.f32 0.0, %v1371
  %v1373 = vpop.f32.mrb[0].mxu0
  %1374 = vmatprep.mubr.bf16.mxu0 0
  %1375 = vmatmul.mubr.bf16.gmra.mrb[0].mxu0 %v1222
  %v1376 = vpop.f32.mrb[0].mxu0
  %v1377 = vadd.f32 0.0, %v1376
  %v1378 = vpop.f32.mrb[0].mxu0
  %v1379 = vpop.f32.mrb[0].mxu0
  %v1380 = vadd.f32 0.0, %v1379
  %v1381 = vpop.f32.mrb[0].mxu0
  %1382 = vmatprep.mubr.bf16.mxu0 0
  %1383 = vmatmul.mubr.bf16.gmra.mrb[0].mxu0 %v1225
  %v1384 = vpop.f32.mrb[0].mxu0
  %v1385 = vadd.f32 0.0, %v1384
  %v1386 = vpop.f32.mrb[0].mxu0
  %v1387 = vpop.f32.mrb[0].mxu0
  %v1388 = vadd.f32 0.0, %v1387
  %v1389 = vpop.f32.mrb[0].mxu0
  %1390 = vdwg.mxu0
  %v1391 = vadd.f32 %v1097, %v1265
  %v1392 = vadd.f32 %v1098, %v1268
  %v1393 = vadd.f32 %v1099, %v1273
  %v1394 = vadd.f32 %v1100, %v1276
  %v1395 = vadd.f32 %v1101, %v1281
  %v1396 = vadd.f32 %v1102, %v1284
  %v1397 = vadd.f32 %v1103, %v1289
  %v1398 = vadd.f32 %v1104, %v1292
  %v1399 = vadd.f32 %v1105, %v1297
  %v1400 = vadd.f32 %v1106, %v1300
  %v1401 = vadd.f32 %v1107, %v1305
  %v1402 = vadd.f32 %v1108, %v1308
  %v1403 = vadd.f32 %v1109, %v1313
  %v1404 = vadd.f32 %v1110, %v1316
  %v1405 = vadd.f32 %v1111, %v1321
  %v1406 = vadd.f32 %v1112, %v1324
  %v1407 = vadd.f32 %v1113, %v1329
  %v1408 = vadd.f32 %v1114, %v1332
  %v1409 = vadd.f32 %v1115, %v1337
  %v1410 = vadd.f32 %v1116, %v1340
  %v1411 = vadd.f32 %v1117, %v1345
  %v1412 = vadd.f32 %v1118, %v1348
  %v1413 = vadd.f32 %v1119, %v1353
  %v1414 = vadd.f32 %v1120, %v1356
  %v1415 = vadd.f32 %v1121, %v1361
  %v1416 = vadd.f32 %v1122, %v1364
  %v1417 = vadd.f32 %v1123, %v1369
  %v1418 = vadd.f32 %v1124, %v1372
  %v1419 = vadd.f32 %v1125, %v1377
  %v1420 = vadd.f32 %v1126, %v1380
  %v1421 = vadd.f32 %v1127, %v1385
  %v1422 = vadd.f32 %v1128, %v1388
  %v1423 = vld [vmem:[%s0 + $0x12] sm:$0xff]
  %v1424 = vld [vmem:[%s0 + $0x1a] sm:$0xff]
  %v1425 = vld [vmem:[%s0 + $0x22] sm:$0xff]
  %v1426 = vld [vmem:[%s0 + $0x2a] sm:$0xff]
  %v1427 = vld [vmem:[%s0 + $0x32] sm:$0xff]
  %v1428 = vld [vmem:[%s0 + $0x3a] sm:$0xff]
  %v1429 = vld [vmem:[%s0 + $0x42] sm:$0xff]
  %v1430 = vld [vmem:[%s0 + $0x4a] sm:$0xff]
  %v1431 = vld [vmem:[%s0 + $0x52] sm:$0xff]
  %v1432 = vld [vmem:[%s0 + $0x5a] sm:$0xff]
  %v1433 = vld [vmem:[%s0 + $0x62] sm:$0xff]
  %v1434 = vld [vmem:[%s0 + $0x6a] sm:$0xff]
  %v1435 = vld [vmem:[%s0 + $0x72] sm:$0xff]
  %v1436 = vld [vmem:[%s0 + $0x7a] sm:$0xff]
  %v1437 = vld [vmem:[%s0 + $0x82] sm:$0xff]
  %v1438 = vld [vmem:[%s0 + $0x8a] sm:$0xff]
  %v1439 = vld [vmem:[%s0 + $0x92] sm:$0xff]
  %v1440 = vld [vmem:[%s0 + $0x9a] sm:$0xff]
  %v1441 = vld [vmem:[%s0 + $0xa2] sm:$0xff]
  %v1442 = vld [vmem:[%s0 + $0xaa] sm:$0xff]
  %v1443 = vld [vmem:[%s0 + $0xb2] sm:$0xff]
  %v1444 = vld [vmem:[%s0 + $0xba] sm:$0xff]
  %v1445 = vld [vmem:[%s0 + $0xc2] sm:$0xff]
  %v1446 = vld [vmem:[%s0 + $0xca] sm:$0xff]
  %v1447 = vld [vmem:[%s0 + $0xd2] sm:$0xff]
  %v1448 = vld [vmem:[%s0 + $0xda] sm:$0xff]
  %v1449 = vld [vmem:[%s0 + $0xe2] sm:$0xff]
  %v1450 = vld [vmem:[%s0 + $0xea] sm:$0xff]
  %v1451 = vld [vmem:[%s0 + $0xf2] sm:$0xff]
  %v1452 = vld [vmem:[%s0 + $0xfa] sm:$0xff]
  %v1453 = vld [vmem:[%s0 + $0x102] sm:$0xff]
  %v1454 = vld [vmem:[%s0 + $0x10a] sm:$0xff]
  %v1455 = vpack.c.bf16 %v1424, %v1423
  %v1456 = vpack.c.bf16 %v1426, %v1425
  %v1457 = vpack.c.bf16 %v1428, %v1427
  %v1458 = vpack.c.bf16 %v1430, %v1429
  %v1459 = vpack.c.bf16 %v1432, %v1431
  %v1460 = vpack.c.bf16 %v1434, %v1433
  %v1461 = vpack.c.bf16 %v1436, %v1435
  %v1462 = vpack.c.bf16 %v1438, %v1437
  %v1463 = vpack.c.bf16 %v1440, %v1439
  %v1464 = vpack.c.bf16 %v1442, %v1441
  %v1465 = vpack.c.bf16 %v1444, %v1443
  %v1466 = vpack.c.bf16 %v1446, %v1445
  %v1467 = vpack.c.bf16 %v1448, %v1447
  %v1468 = vpack.c.bf16 %v1450, %v1449
  %v1469 = vpack.c.bf16 %v1452, %v1451
  %v1470 = vpack.c.bf16 %v1454, %v1453
  %s1471 = scalar_lea.vmem %s1, 10
  %v1472 = vld [vmem:[%s1471] sm:$0x3]
  %v1474 = vsel %vm115, %v1455, 0
  %v1477 = vsel %vm115, %v1456, 0
  %v1480 = vsel %vm115, %v1457, 0
  %v1483 = vsel %vm115, %v1458, 0
  %v1486 = vsel %vm115, %v1459, 0
  %v1489 = vsel %vm115, %v1460, 0
  %v1492 = vsel %vm115, %v1461, 0
  %v1495 = vsel %vm115, %v1462, 0
  %v1498 = vsel %vm115, %v1463, 0
  %v1501 = vsel %vm115, %v1464, 0
  %v1504 = vsel %vm115, %v1465, 0
  %v1507 = vsel %vm115, %v1466, 0
  %v1510 = vsel %vm115, %v1467, 0
  %v1513 = vsel %vm115, %v1468, 0
  %v1516 = vsel %vm115, %v1469, 0
  %v1519 = vsel %vm115, %v1470, 0
  %v1522 = vsel %vm164, %v1472, 0
  %1524 = vmatprep.subr.bf16.mxu0 0
  %1525 = vmatpush1.bf16.msra.mxu0 %v1522
  %1526 = vmatprep.subr.bf16.mxu0 0
  %1527 = vmatpush1.bf16.msra.mxu0 0
  %1528 = vmatprep.subr.bf16.mxu0 0
  %1529 = vmatpush1.bf16.msra.mxu0 0
  %1530 = vmatprep.subr.bf16.mxu0 0
  %1531 = vmatpush1.bf16.msra.mxu0 0
  %1532 = vmatprep.subr.bf16.mxu0 0
  %1533 = vmatpush1.bf16.msra.mxu0 0
  %1534 = vmatprep.subr.bf16.mxu0 0
  %1535 = vmatpush1.bf16.msra.mxu0 0
  %1536 = vmatprep.subr.bf16.mxu0 0
  %1537 = vmatpush1.bf16.msra.mxu0 0
  %1538 = vmatprep.subr.bf16.mxu0 0
  %1539 = vmatpush1.bf16.msra.mxu0 0
  %1540 = vmatprep.subr.bf16.mxu0 0
  %1541 = vmatpush1.bf16.msra.mxu0 0
  %1542 = vmatprep.subr.bf16.mxu0 0
  %1543 = vmatpush1.bf16.msra.mxu0 0
  %1544 = vmatprep.subr.bf16.mxu0 0
  %1545 = vmatpush1.bf16.msra.mxu0 0
  %1546 = vmatprep.subr.bf16.mxu0 0
  %1547 = vmatpush1.bf16.msra.mxu0 0
  %1548 = vmatprep.subr.bf16.mxu0 0
  %1549 = vmatpush1.bf16.msra.mxu0 0
  %1550 = vmatprep.subr.bf16.mxu0 0
  %1551 = vmatpush1.bf16.msra.mxu0 0
  %1552 = vmatprep.subr.bf16.mxu0 0
  %1553 = vmatpush1.bf16.msra.mxu0 0
  %1554 = vmatprep.subr.bf16.mxu0 0
  %1555 = vmatpush1.bf16.msra.mxu0 0
  %1556 = vmatprep.mubr.bf16.mxu0 0
  %1557 = vmatmul.mubr.bf16.gmra.mrb[0].mxu0 %v1474
  %v1558 = vpop.f32.mrb[0].mxu0
  %v1559 = vadd.f32 0.0, %v1558
  %v1560 = vpop.f32.mrb[0].mxu0
  %v1561 = vpop.f32.mrb[0].mxu0
  %v1562 = vadd.f32 0.0, %v1561
  %v1563 = vpop.f32.mrb[0].mxu0
  %1564 = vmatprep.mubr.bf16.mxu0 0
  %1565 = vmatmul.mubr.bf16.gmra.mrb[0].mxu0 %v1477
  %v1566 = vpop.f32.mrb[0].mxu0
  %v1567 = vadd.f32 0.0, %v1566
  %v1568 = vpop.f32.mrb[0].mxu0
  %v1569 = vpop.f32.mrb[0].mxu0
  %v1570 = vadd.f32 0.0, %v1569
  %v1571 = vpop.f32.mrb[0].mxu0
  %1572 = vmatprep.mubr.bf16.mxu0 0
  %1573 = vmatmul.mubr.bf16.gmra.mrb[0].mxu0 %v1480
  %v1574 = vpop.f32.mrb[0].mxu0
  %v1575 = vadd.f32 0.0, %v1574
  %v1576 = vpop.f32.mrb[0].mxu0
  %v1577 = vpop.f32.mrb[0].mxu0
  %v1578 = vadd.f32 0.0, %v1577
  %v1579 = vpop.f32.mrb[0].mxu0
  %1580 = vmatprep.mubr.bf16.mxu0 0
  %1581 = vmatmul.mubr.bf16.gmra.mrb[0].mxu0 %v1483
  %v1582 = vpop.f32.mrb[0].mxu0
  %v1583 = vadd.f32 0.0, %v1582
  %v1584 = vpop.f32.mrb[0].mxu0
  %v1585 = vpop.f32.mrb[0].mxu0
  %v1586 = vadd.f32 0.0, %v1585
  %v1587 = vpop.f32.mrb[0].mxu0
  %1588 = vmatprep.mubr.bf16.mxu0 0
  %1589 = vmatmul.mubr.bf16.gmra.mrb[0].mxu0 %v1486
  %v1590 = vpop.f32.mrb[0].mxu0
  %v1591 = vadd.f32 0.0, %v1590
  %v1592 = vpop.f32.mrb[0].mxu0
  %v1593 = vpop.f32.mrb[0].mxu0
  %v1594 = vadd.f32 0.0, %v1593
  %v1595 = vpop.f32.mrb[0].mxu0
  %1596 = vmatprep.mubr.bf16.mxu0 0
  %1597 = vmatmul.mubr.bf16.gmra.mrb[0].mxu0 %v1489
  %v1598 = vpop.f32.mrb[0].mxu0
  %v1599 = vadd.f32 0.0, %v1598
  %v1600 = vpop.f32.mrb[0].mxu0
  %v1601 = vpop.f32.mrb[0].mxu0
  %v1602 = vadd.f32 0.0, %v1601
  %v1603 = vpop.f32.mrb[0].mxu0
  %1604 = vmatprep.mubr.bf16.mxu0 0
  %1605 = vmatmul.mubr.bf16.gmra.mrb[0].mxu0 %v1492
  %v1606 = vpop.f32.mrb[0].mxu0
  %v1607 = vadd.f32 0.0, %v1606
  %v1608 = vpop.f32.mrb[0].mxu0
  %v1609 = vpop.f32.mrb[0].mxu0
  %v1610 = vadd.f32 0.0, %v1609
  %v1611 = vpop.f32.mrb[0].mxu0
  %1612 = vmatprep.mubr.bf16.mxu0 0
  %1613 = vmatmul.mubr.bf16.gmra.mrb[0].mxu0 %v1495
  %v1614 = vpop.f32.mrb[0].mxu0
  %v1615 = vadd.f32 0.0, %v1614
  %v1616 = vpop.f32.mrb[0].mxu0
  %v1617 = vpop.f32.mrb[0].mxu0
  %v1618 = vadd.f32 0.0, %v1617
  %v1619 = vpop.f32.mrb[0].mxu0
  %1620 = vmatprep.mubr.bf16.mxu0 0
  %1621 = vmatmul.mubr.bf16.gmra.mrb[0].mxu0 %v1498
  %v1622 = vpop.f32.mrb[0].mxu0
  %v1623 = vadd.f32 0.0, %v1622
  %v1624 = vpop.f32.mrb[0].mxu0
  %v1625 = vpop.f32.mrb[0].mxu0
  %v1626 = vadd.f32 0.0, %v1625
  %v1627 = vpop.f32.mrb[0].mxu0
  %1628 = vmatprep.mubr.bf16.mxu0 0
  %1629 = vmatmul.mubr.bf16.gmra.mrb[0].mxu0 %v1501
  %v1630 = vpop.f32.mrb[0].mxu0
  %v1631 = vadd.f32 0.0, %v1630
  %v1632 = vpop.f32.mrb[0].mxu0
  %v1633 = vpop.f32.mrb[0].mxu0
  %v1634 = vadd.f32 0.0, %v1633
  %v1635 = vpop.f32.mrb[0].mxu0
  %1636 = vmatprep.mubr.bf16.mxu0 0
  %1637 = vmatmul.mubr.bf16.gmra.mrb[0].mxu0 %v1504
  %v1638 = vpop.f32.mrb[0].mxu0
  %v1639 = vadd.f32 0.0, %v1638
  %v1640 = vpop.f32.mrb[0].mxu0
  %v1641 = vpop.f32.mrb[0].mxu0
  %v1642 = vadd.f32 0.0, %v1641
  %v1643 = vpop.f32.mrb[0].mxu0
  %1644 = vmatprep.mubr.bf16.mxu0 0
  %1645 = vmatmul.mubr.bf16.gmra.mrb[0].mxu0 %v1507
  %v1646 = vpop.f32.mrb[0].mxu0
  %v1647 = vadd.f32 0.0, %v1646
  %v1648 = vpop.f32.mrb[0].mxu0
  %v1649 = vpop.f32.mrb[0].mxu0
  %v1650 = vadd.f32 0.0, %v1649
  %v1651 = vpop.f32.mrb[0].mxu0
  %1652 = vmatprep.mubr.bf16.mxu0 0
  %1653 = vmatmul.mubr.bf16.gmra.mrb[0].mxu0 %v1510
  %v1654 = vpop.f32.mrb[0].mxu0
  %v1655 = vadd.f32 0.0, %v1654
  %v1656 = vpop.f32.mrb[0].mxu0
  %v1657 = vpop.f32.mrb[0].mxu0
  %v1658 = vadd.f32 0.0, %v1657
  %v1659 = vpop.f32.mrb[0].mxu0
  %1660 = vmatprep.mubr.bf16.mxu0 0
  %1661 = vmatmul.mubr.bf16.gmra.mrb[0].mxu0 %v1513
  %v1662 = vpop.f32.mrb[0].mxu0
  %v1663 = vadd.f32 0.0, %v1662
  %v1664 = vpop.f32.mrb[0].mxu0
  %v1665 = vpop.f32.mrb[0].mxu0
  %v1666 = vadd.f32 0.0, %v1665
  %v1667 = vpop.f32.mrb[0].mxu0
  %1668 = vmatprep.mubr.bf16.mxu0 0
  %1669 = vmatmul.mubr.bf16.gmra.mrb[0].mxu0 %v1516
  %v1670 = vpop.f32.mrb[0].mxu0
  %v1671 = vadd.f32 0.0, %v1670
  %v1672 = vpop.f32.mrb[0].mxu0
  %v1673 = vpop.f32.mrb[0].mxu0
  %v1674 = vadd.f32 0.0, %v1673
  %v1675 = vpop.f32.mrb[0].mxu0
  %1676 = vmatprep.mubr.bf16.mxu0 0
  %1677 = vmatmul.mubr.bf16.gmra.mrb[0].mxu0 %v1519
  %v1678 = vpop.f32.mrb[0].mxu0
  %v1679 = vadd.f32 0.0, %v1678
  %v1680 = vpop.f32.mrb[0].mxu0
  %v1681 = vpop.f32.mrb[0].mxu0
  %v1682 = vadd.f32 0.0, %v1681
  %v1683 = vpop.f32.mrb[0].mxu0
  %1684 = vdwg.mxu0
  %v1685 = vadd.f32 %v1391, %v1559
  %v1686 = vadd.f32 %v1392, %v1562
  %v1687 = vadd.f32 %v1393, %v1567
  %v1688 = vadd.f32 %v1394, %v1570
  %v1689 = vadd.f32 %v1395, %v1575
  %v1690 = vadd.f32 %v1396, %v1578
  %v1691 = vadd.f32 %v1397, %v1583
  %v1692 = vadd.f32 %v1398, %v1586
  %v1693 = vadd.f32 %v1399, %v1591
  %v1694 = vadd.f32 %v1400, %v1594
  %v1695 = vadd.f32 %v1401, %v1599
  %v1696 = vadd.f32 %v1402, %v1602
  %v1697 = vadd.f32 %v1403, %v1607
  %v1698 = vadd.f32 %v1404, %v1610
  %v1699 = vadd.f32 %v1405, %v1615
  %v1700 = vadd.f32 %v1406, %v1618
  %v1701 = vadd.f32 %v1407, %v1623
  %v1702 = vadd.f32 %v1408, %v1626
  %v1703 = vadd.f32 %v1409, %v1631
  %v1704 = vadd.f32 %v1410, %v1634
  %v1705 = vadd.f32 %v1411, %v1639
  %v1706 = vadd.f32 %v1412, %v1642
  %v1707 = vadd.f32 %v1413, %v1647
  %v1708 = vadd.f32 %v1414, %v1650
  %v1709 = vadd.f32 %v1415, %v1655
  %v1710 = vadd.f32 %v1416, %v1658
  %v1711 = vadd.f32 %v1417, %v1663
  %v1712 = vadd.f32 %v1418, %v1666
  %v1713 = vadd.f32 %v1419, %v1671
  %v1714 = vadd.f32 %v1420, %v1674
  %v1715 = vadd.f32 %v1421, %v1679
  %v1716 = vadd.f32 %v1422, %v1682
  %v1717 = vld [vmem:[%s0 + $0x20] sm:$0xff]
  %v1718 = vld [vmem:[%s0 + $0x28] sm:$0xff]
  %v1719 = vld [vmem:[%s0 + $0x30] sm:$0xff]
  %v1720 = vld [vmem:[%s0 + $0x38] sm:$0xff]
  %v1721 = vld [vmem:[%s0 + $0x40] sm:$0xff]
  %v1722 = vld [vmem:[%s0 + $0x48] sm:$0xff]
  %v1723 = vld [vmem:[%s0 + $0x50] sm:$0xff]
  %v1724 = vld [vmem:[%s0 + $0x58] sm:$0xff]
  %v1725 = vld [vmem:[%s0 + $0x60] sm:$0xff]
  %v1726 = vld [vmem:[%s0 + $0x68] sm:$0xff]
  %v1727 = vld [vmem:[%s0 + $0x70] sm:$0xff]
  %v1728 = vld [vmem:[%s0 + $0x78] sm:$0xff]
  %v1729 = vld [vmem:[%s0 + $0x80] sm:$0xff]
  %v1730 = vld [vmem:[%s0 + $0x88] sm:$0xff]
  %v1731 = vld [vmem:[%s0 + $0x90] sm:$0xff]
  %v1732 = vld [vmem:[%s0 + $0x98] sm:$0xff]
  %v1733 = vld [vmem:[%s0 + $0xa0] sm:$0xff]
  %v1734 = vld [vmem:[%s0 + $0xa8] sm:$0xff]
  %v1735 = vld [vmem:[%s0 + $0xb0] sm:$0xff]
  %v1736 = vld [vmem:[%s0 + $0xb8] sm:$0xff]
  %v1737 = vld [vmem:[%s0 + $0xc0] sm:$0xff]
  %v1738 = vld [vmem:[%s0 + $0xc8] sm:$0xff]
  %v1739 = vld [vmem:[%s0 + $0xd0] sm:$0xff]
  %v1740 = vld [vmem:[%s0 + $0xd8] sm:$0xff]
  %v1741 = vld [vmem:[%s0 + $0xe0] sm:$0xff]
  %v1742 = vld [vmem:[%s0 + $0xe8] sm:$0xff]
  %v1743 = vld [vmem:[%s0 + $0xf0] sm:$0xff]
  %v1744 = vld [vmem:[%s0 + $0xf8] sm:$0xff]
  %v1745 = vld [vmem:[%s0 + $0x100] sm:$0xff]
  %v1746 = vld [vmem:[%s0 + $0x108] sm:$0xff]
  %v1747 = vld [vmem:[%s0 + $0x110] sm:$0xff]
  %v1748 = vld [vmem:[%s0 + $0x118] sm:$0xff]
  %v1749 = vpack.c.bf16 %v1718, %v1717
  %v1750 = vpack.c.bf16 %v1720, %v1719
  %v1751 = vpack.c.bf16 %v1722, %v1721
  %v1752 = vpack.c.bf16 %v1724, %v1723
  %v1753 = vpack.c.bf16 %v1726, %v1725
  %v1754 = vpack.c.bf16 %v1728, %v1727
  %v1755 = vpack.c.bf16 %v1730, %v1729
  %v1756 = vpack.c.bf16 %v1732, %v1731
  %v1757 = vpack.c.bf16 %v1734, %v1733
  %v1758 = vpack.c.bf16 %v1736, %v1735
  %v1759 = vpack.c.bf16 %v1738, %v1737
  %v1760 = vpack.c.bf16 %v1740, %v1739
  %v1761 = vpack.c.bf16 %v1742, %v1741
  %v1762 = vpack.c.bf16 %v1744, %v1743
  %v1763 = vpack.c.bf16 %v1746, %v1745
  %v1764 = vpack.c.bf16 %v1748, %v1747
  %s1765 = scalar_lea.vmem %s1, 12
  %v1766 = vld [vmem:[%s1765] sm:$0x3]
  %v1768 = vsel %vm115, %v1749, 0
  %v1771 = vsel %vm115, %v1750, 0
  %v1774 = vsel %vm115, %v1751, 0
  %v1777 = vsel %vm115, %v1752, 0
  %v1780 = vsel %vm115, %v1753, 0
  %v1783 = vsel %vm115, %v1754, 0
  %v1786 = vsel %vm115, %v1755, 0
  %v1789 = vsel %vm115, %v1756, 0
  %v1792 = vsel %vm115, %v1757, 0
  %v1795 = vsel %vm115, %v1758, 0
  %v1798 = vsel %vm115, %v1759, 0
  %v1801 = vsel %vm115, %v1760, 0
  %v1804 = vsel %vm115, %v1761, 0
  %v1807 = vsel %vm115, %v1762, 0
  %v1810 = vsel %vm115, %v1763, 0
  %v1813 = vsel %vm115, %v1764, 0
  %v1816 = vsel %vm164, %v1766, 0
  %1818 = vmatprep.subr.bf16.mxu0 0
  %1819 = vmatpush1.bf16.msra.mxu0 %v1816
  %1820 = vmatprep.subr.bf16.mxu0 0
  %1821 = vmatpush1.bf16.msra.mxu0 0
  %1822 = vmatprep.subr.bf16.mxu0 0
  %1823 = vmatpush1.bf16.msra.mxu0 0
  %1824 = vmatprep.subr.bf16.mxu0 0
  %1825 = vmatpush1.bf16.msra.mxu0 0
  %1826 = vmatprep.subr.bf16.mxu0 0
  %1827 = vmatpush1.bf16.msra.mxu0 0
  %1828 = vmatprep.subr.bf16.mxu0 0
  %1829 = vmatpush1.bf16.msra.mxu0 0
  %1830 = vmatprep.subr.bf16.mxu0 0
  %1831 = vmatpush1.bf16.msra.mxu0 0
  %1832 = vmatprep.subr.bf16.mxu0 0
  %1833 = vmatpush1.bf16.msra.mxu0 0
  %1834 = vmatprep.subr.bf16.mxu0 0
  %1835 = vmatpush1.bf16.msra.mxu0 0
  %1836 = vmatprep.subr.bf16.mxu0 0
  %1837 = vmatpush1.bf16.msra.mxu0 0
  %1838 = vmatprep.subr.bf16.mxu0 0
  %1839 = vmatpush1.bf16.msra.mxu0 0
  %1840 = vmatprep.subr.bf16.mxu0 0
  %1841 = vmatpush1.bf16.msra.mxu0 0
  %1842 = vmatprep.subr.bf16.mxu0 0
  %1843 = vmatpush1.bf16.msra.mxu0 0
  %1844 = vmatprep.subr.bf16.mxu0 0
  %1845 = vmatpush1.bf16.msra.mxu0 0
  %1846 = vmatprep.subr.bf16.mxu0 0
  %1847 = vmatpush1.bf16.msra.mxu0 0
  %1848 = vmatprep.subr.bf16.mxu0 0
  %1849 = vmatpush1.bf16.msra.mxu0 0
  %1850 = vmatprep.mubr.bf16.mxu0 0
  %1851 = vmatmul.mubr.bf16.gmra.mrb[0].mxu0 %v1768
  %v1852 = vpop.f32.mrb[0].mxu0
  %v1853 = vadd.f32 0.0, %v1852
  %v1854 = vpop.f32.mrb[0].mxu0
  %v1855 = vpop.f32.mrb[0].mxu0
  %v1856 = vadd.f32 0.0, %v1855
  %v1857 = vpop.f32.mrb[0].mxu0
  %1858 = vmatprep.mubr.bf16.mxu0 0
  %1859 = vmatmul.mubr.bf16.gmra.mrb[0].mxu0 %v1771
  %v1860 = vpop.f32.mrb[0].mxu0
  %v1861 = vadd.f32 0.0, %v1860
  %v1862 = vpop.f32.mrb[0].mxu0
  %v1863 = vpop.f32.mrb[0].mxu0
  %v1864 = vadd.f32 0.0, %v1863
  %v1865 = vpop.f32.mrb[0].mxu0
  %1866 = vmatprep.mubr.bf16.mxu0 0
  %1867 = vmatmul.mubr.bf16.gmra.mrb[0].mxu0 %v1774
  %v1868 = vpop.f32.mrb[0].mxu0
  %v1869 = vadd.f32 0.0, %v1868
  %v1870 = vpop.f32.mrb[0].mxu0
  %v1871 = vpop.f32.mrb[0].mxu0
  %v1872 = vadd.f32 0.0, %v1871
  %v1873 = vpop.f32.mrb[0].mxu0
  %1874 = vmatprep.mubr.bf16.mxu0 0
  %1875 = vmatmul.mubr.bf16.gmra.mrb[0].mxu0 %v1777
  %v1876 = vpop.f32.mrb[0].mxu0
  %v1877 = vadd.f32 0.0, %v1876
  %v1878 = vpop.f32.mrb[0].mxu0
  %v1879 = vpop.f32.mrb[0].mxu0
  %v1880 = vadd.f32 0.0, %v1879
  %v1881 = vpop.f32.mrb[0].mxu0
  %1882 = vmatprep.mubr.bf16.mxu0 0
  %1883 = vmatmul.mubr.bf16.gmra.mrb[0].mxu0 %v1780
  %v1884 = vpop.f32.mrb[0].mxu0
  %v1885 = vadd.f32 0.0, %v1884
  %v1886 = vpop.f32.mrb[0].mxu0
  %v1887 = vpop.f32.mrb[0].mxu0
  %v1888 = vadd.f32 0.0, %v1887
  %v1889 = vpop.f32.mrb[0].mxu0
  %1890 = vmatprep.mubr.bf16.mxu0 0
  %1891 = vmatmul.mubr.bf16.gmra.mrb[0].mxu0 %v1783
  %v1892 = vpop.f32.mrb[0].mxu0
  %v1893 = vadd.f32 0.0, %v1892
  %v1894 = vpop.f32.mrb[0].mxu0
  %v1895 = vpop.f32.mrb[0].mxu0
  %v1896 = vadd.f32 0.0, %v1895
  %v1897 = vpop.f32.mrb[0].mxu0
  %1898 = vmatprep.mubr.bf16.mxu0 0
  %1899 = vmatmul.mubr.bf16.gmra.mrb[0].mxu0 %v1786
  %v1900 = vpop.f32.mrb[0].mxu0
  %v1901 = vadd.f32 0.0, %v1900
  %v1902 = vpop.f32.mrb[0].mxu0
  %v1903 = vpop.f32.mrb[0].mxu0
  %v1904 = vadd.f32 0.0, %v1903
  %v1905 = vpop.f32.mrb[0].mxu0
  %1906 = vmatprep.mubr.bf16.mxu0 0
  %1907 = vmatmul.mubr.bf16.gmra.mrb[0].mxu0 %v1789
  %v1908 = vpop.f32.mrb[0].mxu0
  %v1909 = vadd.f32 0.0, %v1908
  %v1910 = vpop.f32.mrb[0].mxu0
  %v1911 = vpop.f32.mrb[0].mxu0
  %v1912 = vadd.f32 0.0, %v1911
  %v1913 = vpop.f32.mrb[0].mxu0
  %1914 = vmatprep.mubr.bf16.mxu0 0
  %1915 = vmatmul.mubr.bf16.gmra.mrb[0].mxu0 %v1792
  %v1916 = vpop.f32.mrb[0].mxu0
  %v1917 = vadd.f32 0.0, %v1916
  %v1918 = vpop.f32.mrb[0].mxu0
  %v1919 = vpop.f32.mrb[0].mxu0
  %v1920 = vadd.f32 0.0, %v1919
  %v1921 = vpop.f32.mrb[0].mxu0
  %1922 = vmatprep.mubr.bf16.mxu0 0
  %1923 = vmatmul.mubr.bf16.gmra.mrb[0].mxu0 %v1795
  %v1924 = vpop.f32.mrb[0].mxu0
  %v1925 = vadd.f32 0.0, %v1924
  %v1926 = vpop.f32.mrb[0].mxu0
  %v1927 = vpop.f32.mrb[0].mxu0
  %v1928 = vadd.f32 0.0, %v1927
  %v1929 = vpop.f32.mrb[0].mxu0
  %1930 = vmatprep.mubr.bf16.mxu0 0
  %1931 = vmatmul.mubr.bf16.gmra.mrb[0].mxu0 %v1798
  %v1932 = vpop.f32.mrb[0].mxu0
  %v1933 = vadd.f32 0.0, %v1932
  %v1934 = vpop.f32.mrb[0].mxu0
  %v1935 = vpop.f32.mrb[0].mxu0
  %v1936 = vadd.f32 0.0, %v1935
  %v1937 = vpop.f32.mrb[0].mxu0
  %1938 = vmatprep.mubr.bf16.mxu0 0
  %1939 = vmatmul.mubr.bf16.gmra.mrb[0].mxu0 %v1801
  %v1940 = vpop.f32.mrb[0].mxu0
  %v1941 = vadd.f32 0.0, %v1940
  %v1942 = vpop.f32.mrb[0].mxu0
  %v1943 = vpop.f32.mrb[0].mxu0
  %v1944 = vadd.f32 0.0, %v1943
  %v1945 = vpop.f32.mrb[0].mxu0
  %1946 = vmatprep.mubr.bf16.mxu0 0
  %1947 = vmatmul.mubr.bf16.gmra.mrb[0].mxu0 %v1804
  %v1948 = vpop.f32.mrb[0].mxu0
  %v1949 = vadd.f32 0.0, %v1948
  %v1950 = vpop.f32.mrb[0].mxu0
  %v1951 = vpop.f32.mrb[0].mxu0
  %v1952 = vadd.f32 0.0, %v1951
  %v1953 = vpop.f32.mrb[0].mxu0
  %1954 = vmatprep.mubr.bf16.mxu0 0
  %1955 = vmatmul.mubr.bf16.gmra.mrb[0].mxu0 %v1807
  %v1956 = vpop.f32.mrb[0].mxu0
  %v1957 = vadd.f32 0.0, %v1956
  %v1958 = vpop.f32.mrb[0].mxu0
  %v1959 = vpop.f32.mrb[0].mxu0
  %v1960 = vadd.f32 0.0, %v1959
  %v1961 = vpop.f32.mrb[0].mxu0
  %1962 = vmatprep.mubr.bf16.mxu0 0
  %1963 = vmatmul.mubr.bf16.gmra.mrb[0].mxu0 %v1810
  %v1964 = vpop.f32.mrb[0].mxu0
  %v1965 = vadd.f32 0.0, %v1964
  %v1966 = vpop.f32.mrb[0].mxu0
  %v1967 = vpop.f32.mrb[0].mxu0
  %v1968 = vadd.f32 0.0, %v1967
  %v1969 = vpop.f32.mrb[0].mxu0
  %1970 = vmatprep.mubr.bf16.mxu0 0
  %1971 = vmatmul.mubr.bf16.gmra.mrb[0].mxu0 %v1813
  %v1972 = vpop.f32.mrb[0].mxu0
  %v1973 = vadd.f32 0.0, %v1972
  %v1974 = vpop.f32.mrb[0].mxu0
  %v1975 = vpop.f32.mrb[0].mxu0
  %v1976 = vadd.f32 0.0, %v1975
  %v1977 = vpop.f32.mrb[0].mxu0
  %1978 = vdwg.mxu0
  %v1979 = vadd.f32 %v1685, %v1853
  %v1980 = vadd.f32 %v1686, %v1856
  %v1981 = vadd.f32 %v1687, %v1861
  %v1982 = vadd.f32 %v1688, %v1864
  %v1983 = vadd.f32 %v1689, %v1869
  %v1984 = vadd.f32 %v1690, %v1872
  %v1985 = vadd.f32 %v1691, %v1877
  %v1986 = vadd.f32 %v1692, %v1880
  %v1987 = vadd.f32 %v1693, %v1885
  %v1988 = vadd.f32 %v1694, %v1888
  %v1989 = vadd.f32 %v1695, %v1893
  %v1990 = vadd.f32 %v1696, %v1896
  %v1991 = vadd.f32 %v1697, %v1901
  %v1992 = vadd.f32 %v1698, %v1904
  %v1993 = vadd.f32 %v1699, %v1909
  %v1994 = vadd.f32 %v1700, %v1912
  %v1995 = vadd.f32 %v1701, %v1917
  %v1996 = vadd.f32 %v1702, %v1920
  %v1997 = vadd.f32 %v1703, %v1925
  %v1998 = vadd.f32 %v1704, %v1928
  %v1999 = vadd.f32 %v1705, %v1933
  %v2000 = vadd.f32 %v1706, %v1936
  %v2001 = vadd.f32 %v1707, %v1941
  %v2002 = vadd.f32 %v1708, %v1944
  %v2003 = vadd.f32 %v1709, %v1949
  %v2004 = vadd.f32 %v1710, %v1952
  %v2005 = vadd.f32 %v1711, %v1957
  %v2006 = vadd.f32 %v1712, %v1960
  %v2007 = vadd.f32 %v1713, %v1965
  %v2008 = vadd.f32 %v1714, %v1968
  %v2009 = vadd.f32 %v1715, %v1973
  %v2010 = vadd.f32 %v1716, %v1976
  %v2011 = vld [vmem:[%s0 + $0x21] sm:$0xff]
  %v2012 = vld [vmem:[%s0 + $0x29] sm:$0xff]
  %v2013 = vld [vmem:[%s0 + $0x31] sm:$0xff]
  %v2014 = vld [vmem:[%s0 + $0x39] sm:$0xff]
  %v2015 = vld [vmem:[%s0 + $0x41] sm:$0xff]
  %v2016 = vld [vmem:[%s0 + $0x49] sm:$0xff]
  %v2017 = vld [vmem:[%s0 + $0x51] sm:$0xff]
  %v2018 = vld [vmem:[%s0 + $0x59] sm:$0xff]
  %v2019 = vld [vmem:[%s0 + $0x61] sm:$0xff]
  %v2020 = vld [vmem:[%s0 + $0x69] sm:$0xff]
  %v2021 = vld [vmem:[%s0 + $0x71] sm:$0xff]
  %v2022 = vld [vmem:[%s0 + $0x79] sm:$0xff]
  %v2023 = vld [vmem:[%s0 + $0x81] sm:$0xff]
  %v2024 = vld [vmem:[%s0 + $0x89] sm:$0xff]
  %v2025 = vld [vmem:[%s0 + $0x91] sm:$0xff]
  %v2026 = vld [vmem:[%s0 + $0x99] sm:$0xff]
  %v2027 = vld [vmem:[%s0 + $0xa1] sm:$0xff]
  %v2028 = vld [vmem:[%s0 + $0xa9] sm:$0xff]
  %v2029 = vld [vmem:[%s0 + $0xb1] sm:$0xff]
  %v2030 = vld [vmem:[%s0 + $0xb9] sm:$0xff]
  %v2031 = vld [vmem:[%s0 + $0xc1] sm:$0xff]
  %v2032 = vld [vmem:[%s0 + $0xc9] sm:$0xff]
  %v2033 = vld [vmem:[%s0 + $0xd1] sm:$0xff]
  %v2034 = vld [vmem:[%s0 + $0xd9] sm:$0xff]
  %v2035 = vld [vmem:[%s0 + $0xe1] sm:$0xff]
  %v2036 = vld [vmem:[%s0 + $0xe9] sm:$0xff]
  %v2037 = vld [vmem:[%s0 + $0xf1] sm:$0xff]
  %v2038 = vld [vmem:[%s0 + $0xf9] sm:$0xff]
  %v2039 = vld [vmem:[%s0 + $0x101] sm:$0xff]
  %v2040 = vld [vmem:[%s0 + $0x109] sm:$0xff]
  %v2041 = vld [vmem:[%s0 + $0x111] sm:$0xff]
  %v2042 = vld [vmem:[%s0 + $0x119] sm:$0xff]
  %v2043 = vpack.c.bf16 %v2012, %v2011
  %v2044 = vpack.c.bf16 %v2014, %v2013
  %v2045 = vpack.c.bf16 %v2016, %v2015
  %v2046 = vpack.c.bf16 %v2018, %v2017
  %v2047 = vpack.c.bf16 %v2020, %v2019
  %v2048 = vpack.c.bf16 %v2022, %v2021
  %v2049 = vpack.c.bf16 %v2024, %v2023
  %v2050 = vpack.c.bf16 %v2026, %v2025
  %v2051 = vpack.c.bf16 %v2028, %v2027
  %v2052 = vpack.c.bf16 %v2030, %v2029
  %v2053 = vpack.c.bf16 %v2032, %v2031
  %v2054 = vpack.c.bf16 %v2034, %v2033
  %v2055 = vpack.c.bf16 %v2036, %v2035
  %v2056 = vpack.c.bf16 %v2038, %v2037
  %v2057 = vpack.c.bf16 %v2040, %v2039
  %v2058 = vpack.c.bf16 %v2042, %v2041
  %s2059 = scalar_lea.vmem %s1, 14
  %v2060 = vld [vmem:[%s2059] sm:$0x3]
  %v2062 = vsel %vm115, %v2043, 0
  %v2065 = vsel %vm115, %v2044, 0
  %v2068 = vsel %vm115, %v2045, 0
  %v2071 = vsel %vm115, %v2046, 0
  %v2074 = vsel %vm115, %v2047, 0
  %v2077 = vsel %vm115, %v2048, 0
  %v2080 = vsel %vm115, %v2049, 0
  %v2083 = vsel %vm115, %v2050, 0
  %v2086 = vsel %vm115, %v2051, 0
  %v2089 = vsel %vm115, %v2052, 0
  %v2092 = vsel %vm115, %v2053, 0
  %v2095 = vsel %vm115, %v2054, 0
  %v2098 = vsel %vm115, %v2055, 0
  %v2101 = vsel %vm115, %v2056, 0
  %v2104 = vsel %vm115, %v2057, 0
  %v2107 = vsel %vm115, %v2058, 0
  %v2110 = vsel %vm164, %v2060, 0
  %2112 = vmatprep.subr.bf16.mxu0 0
  %2113 = vmatpush1.bf16.msra.mxu0 %v2110
  %2114 = vmatprep.subr.bf16.mxu0 0
  %2115 = vmatpush1.bf16.msra.mxu0 0
  %2116 = vmatprep.subr.bf16.mxu0 0
  %2117 = vmatpush1.bf16.msra.mxu0 0
  %2118 = vmatprep.subr.bf16.mxu0 0
  %2119 = vmatpush1.bf16.msra.mxu0 0
  %2120 = vmatprep.subr.bf16.mxu0 0
  %2121 = vmatpush1.bf16.msra.mxu0 0
  %2122 = vmatprep.subr.bf16.mxu0 0
  %2123 = vmatpush1.bf16.msra.mxu0 0
  %2124 = vmatprep.subr.bf16.mxu0 0
  %2125 = vmatpush1.bf16.msra.mxu0 0
  %2126 = vmatprep.subr.bf16.mxu0 0
  %2127 = vmatpush1.bf16.msra.mxu0 0
  %2128 = vmatprep.subr.bf16.mxu0 0
  %2129 = vmatpush1.bf16.msra.mxu0 0
  %2130 = vmatprep.subr.bf16.mxu0 0
  %2131 = vmatpush1.bf16.msra.mxu0 0
  %2132 = vmatprep.subr.bf16.mxu0 0
  %2133 = vmatpush1.bf16.msra.mxu0 0
  %2134 = vmatprep.subr.bf16.mxu0 0
  %2135 = vmatpush1.bf16.msra.mxu0 0
  %2136 = vmatprep.subr.bf16.mxu0 0
  %2137 = vmatpush1.bf16.msra.mxu0 0
  %2138 = vmatprep.subr.bf16.mxu0 0
  %2139 = vmatpush1.bf16.msra.mxu0 0
  %2140 = vmatprep.subr.bf16.mxu0 0
  %2141 = vmatpush1.bf16.msra.mxu0 0
  %2142 = vmatprep.subr.bf16.mxu0 0
  %2143 = vmatpush1.bf16.msra.mxu0 0
  %2144 = vmatprep.mubr.bf16.mxu0 0
  %2145 = vmatmul.mubr.bf16.gmra.mrb[0].mxu0 %v2062
  %v2146 = vpop.f32.mrb[0].mxu0
  %v2147 = vadd.f32 0.0, %v2146
  %v2148 = vpop.f32.mrb[0].mxu0
  %v2149 = vpop.f32.mrb[0].mxu0
  %v2150 = vadd.f32 0.0, %v2149
  %v2151 = vpop.f32.mrb[0].mxu0
  %2152 = vmatprep.mubr.bf16.mxu0 0
  %2153 = vmatmul.mubr.bf16.gmra.mrb[0].mxu0 %v2065
  %v2154 = vpop.f32.mrb[0].mxu0
  %v2155 = vadd.f32 0.0, %v2154
  %v2156 = vpop.f32.mrb[0].mxu0
  %v2157 = vpop.f32.mrb[0].mxu0
  %v2158 = vadd.f32 0.0, %v2157
  %v2159 = vpop.f32.mrb[0].mxu0
  %2160 = vmatprep.mubr.bf16.mxu0 0
  %2161 = vmatmul.mubr.bf16.gmra.mrb[0].mxu0 %v2068
  %v2162 = vpop.f32.mrb[0].mxu0
  %v2163 = vadd.f32 0.0, %v2162
  %v2164 = vpop.f32.mrb[0].mxu0
  %v2165 = vpop.f32.mrb[0].mxu0
  %v2166 = vadd.f32 0.0, %v2165
  %v2167 = vpop.f32.mrb[0].mxu0
  %2168 = vmatprep.mubr.bf16.mxu0 0
  %2169 = vmatmul.mubr.bf16.gmra.mrb[0].mxu0 %v2071
  %v2170 = vpop.f32.mrb[0].mxu0
  %v2171 = vadd.f32 0.0, %v2170
  %v2172 = vpop.f32.mrb[0].mxu0
  %v2173 = vpop.f32.mrb[0].mxu0
  %v2174 = vadd.f32 0.0, %v2173
  %v2175 = vpop.f32.mrb[0].mxu0
  %2176 = vmatprep.mubr.bf16.mxu0 0
  %2177 = vmatmul.mubr.bf16.gmra.mrb[0].mxu0 %v2074
  %v2178 = vpop.f32.mrb[0].mxu0
  %v2179 = vadd.f32 0.0, %v2178
  %v2180 = vpop.f32.mrb[0].mxu0
  %v2181 = vpop.f32.mrb[0].mxu0
  %v2182 = vadd.f32 0.0, %v2181
  %v2183 = vpop.f32.mrb[0].mxu0
  %2184 = vmatprep.mubr.bf16.mxu0 0
  %2185 = vmatmul.mubr.bf16.gmra.mrb[0].mxu0 %v2077
  %v2186 = vpop.f32.mrb[0].mxu0
  %v2187 = vadd.f32 0.0, %v2186
  %v2188 = vpop.f32.mrb[0].mxu0
  %v2189 = vpop.f32.mrb[0].mxu0
  %v2190 = vadd.f32 0.0, %v2189
  %v2191 = vpop.f32.mrb[0].mxu0
  %2192 = vmatprep.mubr.bf16.mxu0 0
  %2193 = vmatmul.mubr.bf16.gmra.mrb[0].mxu0 %v2080
  %v2194 = vpop.f32.mrb[0].mxu0
  %v2195 = vadd.f32 0.0, %v2194
  %v2196 = vpop.f32.mrb[0].mxu0
  %v2197 = vpop.f32.mrb[0].mxu0
  %v2198 = vadd.f32 0.0, %v2197
  %v2199 = vpop.f32.mrb[0].mxu0
  %2200 = vmatprep.mubr.bf16.mxu0 0
  %2201 = vmatmul.mubr.bf16.gmra.mrb[0].mxu0 %v2083
  %v2202 = vpop.f32.mrb[0].mxu0
  %v2203 = vadd.f32 0.0, %v2202
  %v2204 = vpop.f32.mrb[0].mxu0
  %v2205 = vpop.f32.mrb[0].mxu0
  %v2206 = vadd.f32 0.0, %v2205
  %v2207 = vpop.f32.mrb[0].mxu0
  %2208 = vmatprep.mubr.bf16.mxu0 0
  %2209 = vmatmul.mubr.bf16.gmra.mrb[0].mxu0 %v2086
  %v2210 = vpop.f32.mrb[0].mxu0
  %v2211 = vadd.f32 0.0, %v2210
  %v2212 = vpop.f32.mrb[0].mxu0
  %v2213 = vpop.f32.mrb[0].mxu0
  %v2214 = vadd.f32 0.0, %v2213
  %v2215 = vpop.f32.mrb[0].mxu0
  %2216 = vmatprep.mubr.bf16.mxu0 0
  %2217 = vmatmul.mubr.bf16.gmra.mrb[0].mxu0 %v2089
  %v2218 = vpop.f32.mrb[0].mxu0
  %v2219 = vadd.f32 0.0, %v2218
  %v2220 = vpop.f32.mrb[0].mxu0
  %v2221 = vpop.f32.mrb[0].mxu0
  %v2222 = vadd.f32 0.0, %v2221
  %v2223 = vpop.f32.mrb[0].mxu0
  %2224 = vmatprep.mubr.bf16.mxu0 0
  %2225 = vmatmul.mubr.bf16.gmra.mrb[0].mxu0 %v2092
  %v2226 = vpop.f32.mrb[0].mxu0
  %v2227 = vadd.f32 0.0, %v2226
  %v2228 = vpop.f32.mrb[0].mxu0
  %v2229 = vpop.f32.mrb[0].mxu0
  %v2230 = vadd.f32 0.0, %v2229
  %v2231 = vpop.f32.mrb[0].mxu0
  %2232 = vmatprep.mubr.bf16.mxu0 0
  %2233 = vmatmul.mubr.bf16.gmra.mrb[0].mxu0 %v2095
  %v2234 = vpop.f32.mrb[0].mxu0
  %v2235 = vadd.f32 0.0, %v2234
  %v2236 = vpop.f32.mrb[0].mxu0
  %v2237 = vpop.f32.mrb[0].mxu0
  %v2238 = vadd.f32 0.0, %v2237
  %v2239 = vpop.f32.mrb[0].mxu0
  %2240 = vmatprep.mubr.bf16.mxu0 0
  %2241 = vmatmul.mubr.bf16.gmra.mrb[0].mxu0 %v2098
  %v2242 = vpop.f32.mrb[0].mxu0
  %v2243 = vadd.f32 0.0, %v2242
  %v2244 = vpop.f32.mrb[0].mxu0
  %v2245 = vpop.f32.mrb[0].mxu0
  %v2246 = vadd.f32 0.0, %v2245
  %v2247 = vpop.f32.mrb[0].mxu0
  %2248 = vmatprep.mubr.bf16.mxu0 0
  %2249 = vmatmul.mubr.bf16.gmra.mrb[0].mxu0 %v2101
  %v2250 = vpop.f32.mrb[0].mxu0
  %v2251 = vadd.f32 0.0, %v2250
  %v2252 = vpop.f32.mrb[0].mxu0
  %v2253 = vpop.f32.mrb[0].mxu0
  %v2254 = vadd.f32 0.0, %v2253
  %v2255 = vpop.f32.mrb[0].mxu0
  %2256 = vmatprep.mubr.bf16.mxu0 0
  %2257 = vmatmul.mubr.bf16.gmra.mrb[0].mxu0 %v2104
  %v2258 = vpop.f32.mrb[0].mxu0
  %v2259 = vadd.f32 0.0, %v2258
  %v2260 = vpop.f32.mrb[0].mxu0
  %v2261 = vpop.f32.mrb[0].mxu0
  %v2262 = vadd.f32 0.0, %v2261
  %v2263 = vpop.f32.mrb[0].mxu0
  %2264 = vmatprep.mubr.bf16.mxu0 0
  %2265 = vmatmul.mubr.bf16.gmra.mrb[0].mxu0 %v2107
  %v2266 = vpop.f32.mrb[0].mxu0
  %v2267 = vadd.f32 0.0, %v2266
  %v2268 = vpop.f32.mrb[0].mxu0
  %v2269 = vpop.f32.mrb[0].mxu0
  %v2270 = vadd.f32 0.0, %v2269
  %v2271 = vpop.f32.mrb[0].mxu0
  %2272 = vdwg.mxu0
  %v2273 = vadd.f32 %v1979, %v2147
  %v2274 = vadd.f32 %v1980, %v2150
  %v2275 = vadd.f32 %v1981, %v2155
  %v2276 = vadd.f32 %v1982, %v2158
  %v2277 = vadd.f32 %v1983, %v2163
  %v2278 = vadd.f32 %v1984, %v2166
  %v2279 = vadd.f32 %v1985, %v2171
  %v2280 = vadd.f32 %v1986, %v2174
  %v2281 = vadd.f32 %v1987, %v2179
  %v2282 = vadd.f32 %v1988, %v2182
  %v2283 = vadd.f32 %v1989, %v2187
  %v2284 = vadd.f32 %v1990, %v2190
  %v2285 = vadd.f32 %v1991, %v2195
  %v2286 = vadd.f32 %v1992, %v2198
  %v2287 = vadd.f32 %v1993, %v2203
  %v2288 = vadd.f32 %v1994, %v2206
  %v2289 = vadd.f32 %v1995, %v2211
  %v2290 = vadd.f32 %v1996, %v2214
  %v2291 = vadd.f32 %v1997, %v2219
  %v2292 = vadd.f32 %v1998, %v2222
  %v2293 = vadd.f32 %v1999, %v2227
  %v2294 = vadd.f32 %v2000, %v2230
  %v2295 = vadd.f32 %v2001, %v2235
  %v2296 = vadd.f32 %v2002, %v2238
  %v2297 = vadd.f32 %v2003, %v2243
  %v2298 = vadd.f32 %v2004, %v2246
  %v2299 = vadd.f32 %v2005, %v2251
  %v2300 = vadd.f32 %v2006, %v2254
  %v2301 = vadd.f32 %v2007, %v2259
  %v2302 = vadd.f32 %v2008, %v2262
  %v2303 = vadd.f32 %v2009, %v2267
  %v2304 = vadd.f32 %v2010, %v2270
  %v2305 = vld [vmem:[%s0 + $0x22] sm:$0xff]
  %v2306 = vld [vmem:[%s0 + $0x2a] sm:$0xff]
  %v2307 = vld [vmem:[%s0 + $0x32] sm:$0xff]
  %v2308 = vld [vmem:[%s0 + $0x3a] sm:$0xff]
  %v2309 = vld [vmem:[%s0 + $0x42] sm:$0xff]
  %v2310 = vld [vmem:[%s0 + $0x4a] sm:$0xff]
  %v2311 = vld [vmem:[%s0 + $0x52] sm:$0xff]
  %v2312 = vld [vmem:[%s0 + $0x5a] sm:$0xff]
  %v2313 = vld [vmem:[%s0 + $0x62] sm:$0xff]
  %v2314 = vld [vmem:[%s0 + $0x6a] sm:$0xff]
  %v2315 = vld [vmem:[%s0 + $0x72] sm:$0xff]
  %v2316 = vld [vmem:[%s0 + $0x7a] sm:$0xff]
  %v2317 = vld [vmem:[%s0 + $0x82] sm:$0xff]
  %v2318 = vld [vmem:[%s0 + $0x8a] sm:$0xff]
  %v2319 = vld [vmem:[%s0 + $0x92] sm:$0xff]
  %v2320 = vld [vmem:[%s0 + $0x9a] sm:$0xff]
  %v2321 = vld [vmem:[%s0 + $0xa2] sm:$0xff]
  %v2322 = vld [vmem:[%s0 + $0xaa] sm:$0xff]
  %v2323 = vld [vmem:[%s0 + $0xb2] sm:$0xff]
  %v2324 = vld [vmem:[%s0 + $0xba] sm:$0xff]
  %v2325 = vld [vmem:[%s0 + $0xc2] sm:$0xff]
  %v2326 = vld [vmem:[%s0 + $0xca] sm:$0xff]
  %v2327 = vld [vmem:[%s0 + $0xd2] sm:$0xff]
  %v2328 = vld [vmem:[%s0 + $0xda] sm:$0xff]
  %v2329 = vld [vmem:[%s0 + $0xe2] sm:$0xff]
  %v2330 = vld [vmem:[%s0 + $0xea] sm:$0xff]
  %v2331 = vld [vmem:[%s0 + $0xf2] sm:$0xff]
  %v2332 = vld [vmem:[%s0 + $0xfa] sm:$0xff]
  %v2333 = vld [vmem:[%s0 + $0x102] sm:$0xff]
  %v2334 = vld [vmem:[%s0 + $0x10a] sm:$0xff]
  %v2335 = vld [vmem:[%s0 + $0x112] sm:$0xff]
  %v2336 = vld [vmem:[%s0 + $0x11a] sm:$0xff]
  %v2337 = vpack.c.bf16 %v2306, %v2305
  %v2338 = vpack.c.bf16 %v2308, %v2307
  %v2339 = vpack.c.bf16 %v2310, %v2309
  %v2340 = vpack.c.bf16 %v2312, %v2311
  %v2341 = vpack.c.bf16 %v2314, %v2313
  %v2342 = vpack.c.bf16 %v2316, %v2315
  %v2343 = vpack.c.bf16 %v2318, %v2317
  %v2344 = vpack.c.bf16 %v2320, %v2319
  %v2345 = vpack.c.bf16 %v2322, %v2321
  %v2346 = vpack.c.bf16 %v2324, %v2323
  %v2347 = vpack.c.bf16 %v2326, %v2325
  %v2348 = vpack.c.bf16 %v2328, %v2327
  %v2349 = vpack.c.bf16 %v2330, %v2329
  %v2350 = vpack.c.bf16 %v2332, %v2331
  %v2351 = vpack.c.bf16 %v2334, %v2333
  %v2352 = vpack.c.bf16 %v2336, %v2335
  %s2353 = scalar_lea.vmem %s1, 16
  %v2354 = vld [vmem:[%s2353] sm:$0x3]
  %v2356 = vsel %vm115, %v2337, 0
  %v2359 = vsel %vm115, %v2338, 0
  %v2362 = vsel %vm115, %v2339, 0
  %v2365 = vsel %vm115, %v2340, 0
  %v2368 = vsel %vm115, %v2341, 0
  %v2371 = vsel %vm115, %v2342, 0
  %v2374 = vsel %vm115, %v2343, 0
  %v2377 = vsel %vm115, %v2344, 0
  %v2380 = vsel %vm115, %v2345, 0
  %v2383 = vsel %vm115, %v2346, 0
  %v2386 = vsel %vm115, %v2347, 0
  %v2389 = vsel %vm115, %v2348, 0
  %v2392 = vsel %vm115, %v2349, 0
  %v2395 = vsel %vm115, %v2350, 0
  %v2398 = vsel %vm115, %v2351, 0
  %v2401 = vsel %vm115, %v2352, 0
  %v2404 = vsel %vm164, %v2354, 0
  %2406 = vmatprep.subr.bf16.mxu0 0
  %2407 = vmatpush1.bf16.msra.mxu0 %v2404
  %2408 = vmatprep.subr.bf16.mxu0 0
  %2409 = vmatpush1.bf16.msra.mxu0 0
  %2410 = vmatprep.subr.bf16.mxu0 0
  %2411 = vmatpush1.bf16.msra.mxu0 0
  %2412 = vmatprep.subr.bf16.mxu0 0
  %2413 = vmatpush1.bf16.msra.mxu0 0
  %2414 = vmatprep.subr.bf16.mxu0 0
  %2415 = vmatpush1.bf16.msra.mxu0 0
  %2416 = vmatprep.subr.bf16.mxu0 0
  %2417 = vmatpush1.bf16.msra.mxu0 0
  %2418 = vmatprep.subr.bf16.mxu0 0
  %2419 = vmatpush1.bf16.msra.mxu0 0
  %2420 = vmatprep.subr.bf16.mxu0 0
  %2421 = vmatpush1.bf16.msra.mxu0 0
  %2422 = vmatprep.subr.bf16.mxu0 0
  %2423 = vmatpush1.bf16.msra.mxu0 0
  %2424 = vmatprep.subr.bf16.mxu0 0
  %2425 = vmatpush1.bf16.msra.mxu0 0
  %2426 = vmatprep.subr.bf16.mxu0 0
  %2427 = vmatpush1.bf16.msra.mxu0 0
  %2428 = vmatprep.subr.bf16.mxu0 0
  %2429 = vmatpush1.bf16.msra.mxu0 0
  %2430 = vmatprep.subr.bf16.mxu0 0
  %2431 = vmatpush1.bf16.msra.mxu0 0
  %2432 = vmatprep.subr.bf16.mxu0 0
  %2433 = vmatpush1.bf16.msra.mxu0 0
  %2434 = vmatprep.subr.bf16.mxu0 0
  %2435 = vmatpush1.bf16.msra.mxu0 0
  %2436 = vmatprep.subr.bf16.mxu0 0
  %2437 = vmatpush1.bf16.msra.mxu0 0
  %2438 = vmatprep.mubr.bf16.mxu0 0
  %2439 = vmatmul.mubr.bf16.gmra.mrb[0].mxu0 %v2356
  %v2440 = vpop.f32.mrb[0].mxu0
  %v2441 = vadd.f32 0.0, %v2440
  %v2442 = vpop.f32.mrb[0].mxu0
  %v2443 = vpop.f32.mrb[0].mxu0
  %v2444 = vadd.f32 0.0, %v2443
  %v2445 = vpop.f32.mrb[0].mxu0
  %2446 = vmatprep.mubr.bf16.mxu0 0
  %2447 = vmatmul.mubr.bf16.gmra.mrb[0].mxu0 %v2359
  %v2448 = vpop.f32.mrb[0].mxu0
  %v2449 = vadd.f32 0.0, %v2448
  %v2450 = vpop.f32.mrb[0].mxu0
  %v2451 = vpop.f32.mrb[0].mxu0
  %v2452 = vadd.f32 0.0, %v2451
  %v2453 = vpop.f32.mrb[0].mxu0
  %2454 = vmatprep.mubr.bf16.mxu0 0
  %2455 = vmatmul.mubr.bf16.gmra.mrb[0].mxu0 %v2362
  %v2456 = vpop.f32.mrb[0].mxu0
  %v2457 = vadd.f32 0.0, %v2456
  %v2458 = vpop.f32.mrb[0].mxu0
  %v2459 = vpop.f32.mrb[0].mxu0
  %v2460 = vadd.f32 0.0, %v2459
  %v2461 = vpop.f32.mrb[0].mxu0
  %2462 = vmatprep.mubr.bf16.mxu0 0
  %2463 = vmatmul.mubr.bf16.gmra.mrb[0].mxu0 %v2365
  %v2464 = vpop.f32.mrb[0].mxu0
  %v2465 = vadd.f32 0.0, %v2464
  %v2466 = vpop.f32.mrb[0].mxu0
  %v2467 = vpop.f32.mrb[0].mxu0
  %v2468 = vadd.f32 0.0, %v2467
  %v2469 = vpop.f32.mrb[0].mxu0
  %2470 = vmatprep.mubr.bf16.mxu0 0
  %2471 = vmatmul.mubr.bf16.gmra.mrb[0].mxu0 %v2368
  %v2472 = vpop.f32.mrb[0].mxu0
  %v2473 = vadd.f32 0.0, %v2472
  %v2474 = vpop.f32.mrb[0].mxu0
  %v2475 = vpop.f32.mrb[0].mxu0
  %v2476 = vadd.f32 0.0, %v2475
  %v2477 = vpop.f32.mrb[0].mxu0
  %2478 = vmatprep.mubr.bf16.mxu0 0
  %2479 = vmatmul.mubr.bf16.gmra.mrb[0].mxu0 %v2371
  %v2480 = vpop.f32.mrb[0].mxu0
  %v2481 = vadd.f32 0.0, %v2480
  %v2482 = vpop.f32.mrb[0].mxu0
  %v2483 = vpop.f32.mrb[0].mxu0
  %v2484 = vadd.f32 0.0, %v2483
  %v2485 = vpop.f32.mrb[0].mxu0
  %2486 = vmatprep.mubr.bf16.mxu0 0
  %2487 = vmatmul.mubr.bf16.gmra.mrb[0].mxu0 %v2374
  %v2488 = vpop.f32.mrb[0].mxu0
  %v2489 = vadd.f32 0.0, %v2488
  %v2490 = vpop.f32.mrb[0].mxu0
  %v2491 = vpop.f32.mrb[0].mxu0
  %v2492 = vadd.f32 0.0, %v2491
  %v2493 = vpop.f32.mrb[0].mxu0
  %2494 = vmatprep.mubr.bf16.mxu0 0
  %2495 = vmatmul.mubr.bf16.gmra.mrb[0].mxu0 %v2377
  %v2496 = vpop.f32.mrb[0].mxu0
  %v2497 = vadd.f32 0.0, %v2496
  %v2498 = vpop.f32.mrb[0].mxu0
  %v2499 = vpop.f32.mrb[0].mxu0
  %v2500 = vadd.f32 0.0, %v2499
  %v2501 = vpop.f32.mrb[0].mxu0
  %2502 = vmatprep.mubr.bf16.mxu0 0
  %2503 = vmatmul.mubr.bf16.gmra.mrb[0].mxu0 %v2380
  %v2504 = vpop.f32.mrb[0].mxu0
  %v2505 = vadd.f32 0.0, %v2504
  %v2506 = vpop.f32.mrb[0].mxu0
  %v2507 = vpop.f32.mrb[0].mxu0
  %v2508 = vadd.f32 0.0, %v2507
  %v2509 = vpop.f32.mrb[0].mxu0
  %2510 = vmatprep.mubr.bf16.mxu0 0
  %2511 = vmatmul.mubr.bf16.gmra.mrb[0].mxu0 %v2383
  %v2512 = vpop.f32.mrb[0].mxu0
  %v2513 = vadd.f32 0.0, %v2512
  %v2514 = vpop.f32.mrb[0].mxu0
  %v2515 = vpop.f32.mrb[0].mxu0
  %v2516 = vadd.f32 0.0, %v2515
  %v2517 = vpop.f32.mrb[0].mxu0
  %2518 = vmatprep.mubr.bf16.mxu0 0
  %2519 = vmatmul.mubr.bf16.gmra.mrb[0].mxu0 %v2386
  %v2520 = vpop.f32.mrb[0].mxu0
  %v2521 = vadd.f32 0.0, %v2520
  %v2522 = vpop.f32.mrb[0].mxu0
  %v2523 = vpop.f32.mrb[0].mxu0
  %v2524 = vadd.f32 0.0, %v2523
  %v2525 = vpop.f32.mrb[0].mxu0
  %2526 = vmatprep.mubr.bf16.mxu0 0
  %2527 = vmatmul.mubr.bf16.gmra.mrb[0].mxu0 %v2389
  %v2528 = vpop.f32.mrb[0].mxu0
  %v2529 = vadd.f32 0.0, %v2528
  %v2530 = vpop.f32.mrb[0].mxu0
  %v2531 = vpop.f32.mrb[0].mxu0
  %v2532 = vadd.f32 0.0, %v2531
  %v2533 = vpop.f32.mrb[0].mxu0
  %2534 = vmatprep.mubr.bf16.mxu0 0
  %2535 = vmatmul.mubr.bf16.gmra.mrb[0].mxu0 %v2392
  %v2536 = vpop.f32.mrb[0].mxu0
  %v2537 = vadd.f32 0.0, %v2536
  %v2538 = vpop.f32.mrb[0].mxu0
  %v2539 = vpop.f32.mrb[0].mxu0
  %v2540 = vadd.f32 0.0, %v2539
  %v2541 = vpop.f32.mrb[0].mxu0
  %2542 = vmatprep.mubr.bf16.mxu0 0
  %2543 = vmatmul.mubr.bf16.gmra.mrb[0].mxu0 %v2395
  %v2544 = vpop.f32.mrb[0].mxu0
  %v2545 = vadd.f32 0.0, %v2544
  %v2546 = vpop.f32.mrb[0].mxu0
  %v2547 = vpop.f32.mrb[0].mxu0
  %v2548 = vadd.f32 0.0, %v2547
  %v2549 = vpop.f32.mrb[0].mxu0
  %2550 = vmatprep.mubr.bf16.mxu0 0
  %2551 = vmatmul.mubr.bf16.gmra.mrb[0].mxu0 %v2398
  %v2552 = vpop.f32.mrb[0].mxu0
  %v2553 = vadd.f32 0.0, %v2552
  %v2554 = vpop.f32.mrb[0].mxu0
  %v2555 = vpop.f32.mrb[0].mxu0
  %v2556 = vadd.f32 0.0, %v2555
  %v2557 = vpop.f32.mrb[0].mxu0
  %2558 = vmatprep.mubr.bf16.mxu0 0
  %2559 = vmatmul.mubr.bf16.gmra.mrb[0].mxu0 %v2401
  %v2560 = vpop.f32.mrb[0].mxu0
  %v2561 = vadd.f32 0.0, %v2560
  %v2562 = vpop.f32.mrb[0].mxu0
  %v2563 = vpop.f32.mrb[0].mxu0
  %v2564 = vadd.f32 0.0, %v2563
  %v2565 = vpop.f32.mrb[0].mxu0
  %2566 = vdwg.mxu0
  %v2567 = vadd.f32 %v2273, %v2441
  %v2568 = vadd.f32 %v2274, %v2444
  %v2569 = vadd.f32 %v2275, %v2449
  %v2570 = vadd.f32 %v2276, %v2452
  %v2571 = vadd.f32 %v2277, %v2457
  %v2572 = vadd.f32 %v2278, %v2460
  %v2573 = vadd.f32 %v2279, %v2465
  %v2574 = vadd.f32 %v2280, %v2468
  %v2575 = vadd.f32 %v2281, %v2473
  %v2576 = vadd.f32 %v2282, %v2476
  %v2577 = vadd.f32 %v2283, %v2481
  %v2578 = vadd.f32 %v2284, %v2484
  %v2579 = vadd.f32 %v2285, %v2489
  %v2580 = vadd.f32 %v2286, %v2492
  %v2581 = vadd.f32 %v2287, %v2497
  %v2582 = vadd.f32 %v2288, %v2500
  %v2583 = vadd.f32 %v2289, %v2505
  %v2584 = vadd.f32 %v2290, %v2508
  %v2585 = vadd.f32 %v2291, %v2513
  %v2586 = vadd.f32 %v2292, %v2516
  %v2587 = vadd.f32 %v2293, %v2521
  %v2588 = vadd.f32 %v2294, %v2524
  %v2589 = vadd.f32 %v2295, %v2529
  %v2590 = vadd.f32 %v2296, %v2532
  %v2591 = vadd.f32 %v2297, %v2537
  %v2592 = vadd.f32 %v2298, %v2540
  %v2593 = vadd.f32 %v2299, %v2545
  %v2594 = vadd.f32 %v2300, %v2548
  %v2595 = vadd.f32 %v2301, %v2553
  %v2596 = vadd.f32 %v2302, %v2556
  %v2597 = vadd.f32 %v2303, %v2561
  %v2598 = vadd.f32 %v2304, %v2564
  %v2600 = vlaneseq
  %v2601 = vshrl.u32 %v2600, 7
  %v2602 = vsub.s32 0, %v2601
  %v2603 = vrot.slane %v15, %v2602
  %v2605 = vadd.f32 %v2567, %v2603
  %v2606 = vadd.f32 %v2568, %v2603
  %v2607 = vadd.f32 %v2569, %v2603
  %v2608 = vadd.f32 %v2570, %v2603
  %v2609 = vadd.f32 %v2571, %v2603
  %v2610 = vadd.f32 %v2572, %v2603
  %v2611 = vadd.f32 %v2573, %v2603
  %v2612 = vadd.f32 %v2574, %v2603
  %v2613 = vadd.f32 %v2575, %v2603
  %v2614 = vadd.f32 %v2576, %v2603
  %v2615 = vadd.f32 %v2577, %v2603
  %v2616 = vadd.f32 %v2578, %v2603
  %v2617 = vadd.f32 %v2579, %v2603
  %v2618 = vadd.f32 %v2580, %v2603
  %v2619 = vadd.f32 %v2581, %v2603
  %v2620 = vadd.f32 %v2582, %v2603
  %v2621 = vadd.f32 %v2583, %v2603
  %v2622 = vadd.f32 %v2584, %v2603
  %v2623 = vadd.f32 %v2585, %v2603
  %v2624 = vadd.f32 %v2586, %v2603
  %v2625 = vadd.f32 %v2587, %v2603
  %v2626 = vadd.f32 %v2588, %v2603
  %v2627 = vadd.f32 %v2589, %v2603
  %v2628 = vadd.f32 %v2590, %v2603
  %v2629 = vadd.f32 %v2591, %v2603
  %v2630 = vadd.f32 %v2592, %v2603
  %v2631 = vadd.f32 %v2593, %v2603
  %v2632 = vadd.f32 %v2594, %v2603
  %v2633 = vadd.f32 %v2595, %v2603
  %v2634 = vadd.f32 %v2596, %v2603
  %v2635 = vadd.f32 %v2597, %v2603
  %v2636 = vadd.f32 %v2598, %v2603
  %v2637 = vmax.f32 %v2605, 0.0
  %v2638 = vmax.f32 %v2606, 0.0
  %v2639 = vmax.f32 %v2607, 0.0
  %v2640 = vmax.f32 %v2608, 0.0
  %v2641 = vmax.f32 %v2609, 0.0
  %v2642 = vmax.f32 %v2610, 0.0
  %v2643 = vmax.f32 %v2611, 0.0
  %v2644 = vmax.f32 %v2612, 0.0
  %v2645 = vmax.f32 %v2613, 0.0
  %v2646 = vmax.f32 %v2614, 0.0
  %v2647 = vmax.f32 %v2615, 0.0
  %v2648 = vmax.f32 %v2616, 0.0
  %v2649 = vmax.f32 %v2617, 0.0
  %v2650 = vmax.f32 %v2618, 0.0
  %v2651 = vmax.f32 %v2619, 0.0
  %v2652 = vmax.f32 %v2620, 0.0
  %v2653 = vmax.f32 %v2621, 0.0
  %v2654 = vmax.f32 %v2622, 0.0
  %v2655 = vmax.f32 %v2623, 0.0
  %v2656 = vmax.f32 %v2624, 0.0
  %v2657 = vmax.f32 %v2625, 0.0
  %v2658 = vmax.f32 %v2626, 0.0
  %v2659 = vmax.f32 %v2627, 0.0
  %v2660 = vmax.f32 %v2628, 0.0
  %v2661 = vmax.f32 %v2629, 0.0
  %v2662 = vmax.f32 %v2630, 0.0
  %v2663 = vmax.f32 %v2631, 0.0
  %v2664 = vmax.f32 %v2632, 0.0
  %v2665 = vmax.f32 %v2633, 0.0
  %v2666 = vmax.f32 %v2634, 0.0
  %v2667 = vmax.f32 %v2635, 0.0
  %v2668 = vmax.f32 %v2636, 0.0
  %vm2669 = vcmask 64512
  %2670 = vst.msk [vmem:[%s3] sm:$0xff] %vm2669, %v2637
  %2671 = vst.msk [vmem:[%s3 + $0x8] sm:$0xff] %vm2669, %v2638
  %2672 = vst.msk [vmem:[%s3 + $0x10] sm:$0xff] %vm2669, %v2639
  %2673 = vst.msk [vmem:[%s3 + $0x18] sm:$0xff] %vm2669, %v2640
  %2674 = vst.msk [vmem:[%s3 + $0x20] sm:$0xff] %vm2669, %v2641
  %2675 = vst.msk [vmem:[%s3 + $0x28] sm:$0xff] %vm2669, %v2642
  %2676 = vst.msk [vmem:[%s3 + $0x30] sm:$0xff] %vm2669, %v2643
  %2677 = vst.msk [vmem:[%s3 + $0x38] sm:$0xff] %vm2669, %v2644
  %2678 = vst.msk [vmem:[%s3 + $0x40] sm:$0xff] %vm2669, %v2645
  %2679 = vst.msk [vmem:[%s3 + $0x48] sm:$0xff] %vm2669, %v2646
  %2680 = vst.msk [vmem:[%s3 + $0x50] sm:$0xff] %vm2669, %v2647
  %2681 = vst.msk [vmem:[%s3 + $0x58] sm:$0xff] %vm2669, %v2648
  %2682 = vst.msk [vmem:[%s3 + $0x60] sm:$0xff] %vm2669, %v2649
  %2683 = vst.msk [vmem:[%s3 + $0x68] sm:$0xff] %vm2669, %v2650
  %2684 = vst.msk [vmem:[%s3 + $0x70] sm:$0xff] %vm2669, %v2651
  %2685 = vst.msk [vmem:[%s3 + $0x78] sm:$0xff] %vm2669, %v2652
  %2686 = vst.msk [vmem:[%s3 + $0x80] sm:$0xff] %vm2669, %v2653
  %2687 = vst.msk [vmem:[%s3 + $0x88] sm:$0xff] %vm2669, %v2654
  %2688 = vst.msk [vmem:[%s3 + $0x90] sm:$0xff] %vm2669, %v2655
  %2689 = vst.msk [vmem:[%s3 + $0x98] sm:$0xff] %vm2669, %v2656
  %2690 = vst.msk [vmem:[%s3 + $0xa0] sm:$0xff] %vm2669, %v2657
  %2691 = vst.msk [vmem:[%s3 + $0xa8] sm:$0xff] %vm2669, %v2658
  %2692 = vst.msk [vmem:[%s3 + $0xb0] sm:$0xff] %vm2669, %v2659
  %2693 = vst.msk [vmem:[%s3 + $0xb8] sm:$0xff] %vm2669, %v2660
  %2694 = vst.msk [vmem:[%s3 + $0xc0] sm:$0xff] %vm2669, %v2661
  %2695 = vst.msk [vmem:[%s3 + $0xc8] sm:$0xff] %vm2669, %v2662
  %2696 = vst.msk [vmem:[%s3 + $0xd0] sm:$0xff] %vm2669, %v2663
  %2697 = vst.msk [vmem:[%s3 + $0xd8] sm:$0xff] %vm2669, %v2664
  %2698 = vst.msk [vmem:[%s3 + $0xe0] sm:$0xff] %vm2669, %v2665
  %2699 = vst.msk [vmem:[%s3 + $0xe8] sm:$0xff] %vm2669, %v2666
  %2700 = vst.msk [vmem:[%s3 + $0xf0] sm:$0xff] %vm2669, %v2667
  %2701 = vst.msk [vmem:[%s3 + $0xf8] sm:$0xff] %vm2669, %v2668
  %s2702 = scalar_lea.vmem %s0, 296
  %v2703 = vld [vmem:[%s2702] sm:$0xff]
  %v2704 = vld [vmem:[%s2702 + $0x8] sm:$0xff]
  %v2705 = vld [vmem:[%s2702 + $0x10] sm:$0xff]
  %v2706 = vld [vmem:[%s2702 + $0x18] sm:$0xff]
  %v2707 = vld [vmem:[%s2702 + $0x20] sm:$0xff]
  %v2708 = vld [vmem:[%s2702 + $0x28] sm:$0xff]
  %v2709 = vld [vmem:[%s2702 + $0x30] sm:$0xff]
  %v2710 = vld [vmem:[%s2702 + $0x38] sm:$0xff]
  %v2711 = vld [vmem:[%s2702 + $0x40] sm:$0xff]
  %v2712 = vld [vmem:[%s2702 + $0x48] sm:$0xff]
  %v2713 = vld [vmem:[%s2702 + $0x50] sm:$0xff]
  %v2714 = vld [vmem:[%s2702 + $0x58] sm:$0xff]
  %v2715 = vld [vmem:[%s2702 + $0x60] sm:$0xff]
  %v2716 = vld [vmem:[%s2702 + $0x68] sm:$0xff]
  %v2717 = vld [vmem:[%s2702 + $0x70] sm:$0xff]
  %v2718 = vld [vmem:[%s2702 + $0x78] sm:$0xff]
  %v2719 = vld [vmem:[%s2702 + $0x80] sm:$0xff]
  %v2720 = vld [vmem:[%s2702 + $0x88] sm:$0xff]
  %v2721 = vld [vmem:[%s2702 + $0x90] sm:$0xff]
  %v2722 = vld [vmem:[%s2702 + $0x98] sm:$0xff]
  %v2723 = vld [vmem:[%s2702 + $0xa0] sm:$0xff]
  %v2724 = vld [vmem:[%s2702 + $0xa8] sm:$0xff]
  %v2725 = vld [vmem:[%s2702 + $0xb0] sm:$0xff]
  %v2726 = vld [vmem:[%s2702 + $0xb8] sm:$0xff]
  %v2727 = vld [vmem:[%s2702 + $0xc0] sm:$0xff]
  %v2728 = vld [vmem:[%s2702 + $0xc8] sm:$0xff]
  %v2729 = vld [vmem:[%s2702 + $0xd0] sm:$0xff]
  %v2730 = vld [vmem:[%s2702 + $0xd8] sm:$0xff]
  %v2731 = vld [vmem:[%s2702 + $0xe0] sm:$0xff]
  %v2732 = vld [vmem:[%s2702 + $0xe8] sm:$0xff]
  %v2733 = vld [vmem:[%s2702 + $0xf0] sm:$0xff]
  %v2734 = vld [vmem:[%s2702 + $0xf8] sm:$0xff]
  %v2735 = vpack.c.bf16 %v2704, %v2703
  %v2736 = vpack.c.bf16 %v2706, %v2705
  %v2737 = vpack.c.bf16 %v2708, %v2707
  %v2738 = vpack.c.bf16 %v2710, %v2709
  %v2739 = vpack.c.bf16 %v2712, %v2711
  %v2740 = vpack.c.bf16 %v2714, %v2713
  %v2741 = vpack.c.bf16 %v2716, %v2715
  %v2742 = vpack.c.bf16 %v2718, %v2717
  %v2743 = vpack.c.bf16 %v2720, %v2719
  %v2744 = vpack.c.bf16 %v2722, %v2721
  %v2745 = vpack.c.bf16 %v2724, %v2723
  %v2746 = vpack.c.bf16 %v2726, %v2725
  %v2747 = vpack.c.bf16 %v2728, %v2727
  %v2748 = vpack.c.bf16 %v2730, %v2729
  %v2749 = vpack.c.bf16 %v2732, %v2731
  %v2750 = vpack.c.bf16 %v2734, %v2733
  %v2751 = vld [vmem:[%s1] sm:$0x3]
  %v2752 = vld [vmem:[%s2702 + $0x1] sm:$0xff]
  %v2753 = vld [vmem:[%s2702 + $0x9] sm:$0xff]
  %v2754 = vld [vmem:[%s2702 + $0x11] sm:$0xff]
  %v2755 = vld [vmem:[%s2702 + $0x19] sm:$0xff]
  %v2756 = vld [vmem:[%s2702 + $0x21] sm:$0xff]
  %v2757 = vld [vmem:[%s2702 + $0x29] sm:$0xff]
  %v2758 = vld [vmem:[%s2702 + $0x31] sm:$0xff]
  %v2759 = vld [vmem:[%s2702 + $0x39] sm:$0xff]
  %v2760 = vld [vmem:[%s2702 + $0x41] sm:$0xff]
  %v2761 = vld [vmem:[%s2702 + $0x49] sm:$0xff]
  %v2762 = vld [vmem:[%s2702 + $0x51] sm:$0xff]
  %v2763 = vld [vmem:[%s2702 + $0x59] sm:$0xff]
  %v2764 = vld [vmem:[%s2702 + $0x61] sm:$0xff]
  %v2765 = vld [vmem:[%s2702 + $0x69] sm:$0xff]
  %v2766 = vld [vmem:[%s2702 + $0x71] sm:$0xff]
  %v2767 = vld [vmem:[%s2702 + $0x79] sm:$0xff]
  %v2768 = vld [vmem:[%s2702 + $0x81] sm:$0xff]
  %v2769 = vld [vmem:[%s2702 + $0x89] sm:$0xff]
  %v2770 = vld [vmem:[%s2702 + $0x91] sm:$0xff]
  %v2771 = vld [vmem:[%s2702 + $0x99] sm:$0xff]
  %v2772 = vld [vmem:[%s2702 + $0xa1] sm:$0xff]
  %v2773 = vld [vmem:[%s2702 + $0xa9] sm:$0xff]
  %v2774 = vld [vmem:[%s2702 + $0xb1] sm:$0xff]
  %v2775 = vld [vmem:[%s2702 + $0xb9] sm:$0xff]
  %v2776 = vld [vmem:[%s2702 + $0xc1] sm:$0xff]
  %v2777 = vld [vmem:[%s2702 + $0xc9] sm:$0xff]
  %v2778 = vld [vmem:[%s2702 + $0xd1] sm:$0xff]
  %v2779 = vld [vmem:[%s2702 + $0xd9] sm:$0xff]
  %v2780 = vld [vmem:[%s2702 + $0xe1] sm:$0xff]
  %v2781 = vld [vmem:[%s2702 + $0xe9] sm:$0xff]
  %v2782 = vld [vmem:[%s2702 + $0xf1] sm:$0xff]
  %v2783 = vld [vmem:[%s2702 + $0xf9] sm:$0xff]
  %v2784 = vpack.c.bf16 %v2753, %v2752
  %v2785 = vpack.c.bf16 %v2755, %v2754
  %v2786 = vpack.c.bf16 %v2757, %v2756
  %v2787 = vpack.c.bf16 %v2759, %v2758
  %v2788 = vpack.c.bf16 %v2761, %v2760
  %v2789 = vpack.c.bf16 %v2763, %v2762
  %v2790 = vpack.c.bf16 %v2765, %v2764
  %v2791 = vpack.c.bf16 %v2767, %v2766
  %v2792 = vpack.c.bf16 %v2769, %v2768
  %v2793 = vpack.c.bf16 %v2771, %v2770
  %v2794 = vpack.c.bf16 %v2773, %v2772
  %v2795 = vpack.c.bf16 %v2775, %v2774
  %v2796 = vpack.c.bf16 %v2777, %v2776
  %v2797 = vpack.c.bf16 %v2779, %v2778
  %v2798 = vpack.c.bf16 %v2781, %v2780
  %v2799 = vpack.c.bf16 %v2783, %v2782
  %v2800 = vld [vmem:[%s113] sm:$0x3]
  %v2802 = vsel %vm115, %v2784, 0
  %v2805 = vsel %vm115, %v2785, 0
  %v2808 = vsel %vm115, %v2786, 0
  %v2811 = vsel %vm115, %v2787, 0
  %v2814 = vsel %vm115, %v2788, 0
  %v2817 = vsel %vm115, %v2789, 0
  %v2820 = vsel %vm115, %v2790, 0
  %v2823 = vsel %vm115, %v2791, 0
  %v2826 = vsel %vm115, %v2792, 0
  %v2829 = vsel %vm115, %v2793, 0
  %v2832 = vsel %vm115, %v2794, 0
  %v2835 = vsel %vm115, %v2795, 0
  %v2838 = vsel %vm115, %v2796, 0
  %v2841 = vsel %vm115, %v2797, 0
  %v2844 = vsel %vm115, %v2798, 0
  %v2847 = vsel %vm115, %v2799, 0
  %v2850 = vsel %vm164, %v2800, 0
  %2852 = vmatprep.subr.bf16.mxu0 0
  %2853 = vmatpush1.bf16.msra.mxu0 %v2850
  %2854 = vmatprep.subr.bf16.mxu0 0
  %2855 = vmatpush1.bf16.msra.mxu0 0
  %2856 = vmatprep.subr.bf16.mxu0 0
  %2857 = vmatpush1.bf16.msra.mxu0 0
  %2858 = vmatprep.subr.bf16.mxu0 0
  %2859 = vmatpush1.bf16.msra.mxu0 0
  %2860 = vmatprep.subr.bf16.mxu0 0
  %2861 = vmatpush1.bf16.msra.mxu0 0
  %2862 = vmatprep.subr.bf16.mxu0 0
  %2863 = vmatpush1.bf16.msra.mxu0 0
  %2864 = vmatprep.subr.bf16.mxu0 0
  %2865 = vmatpush1.bf16.msra.mxu0 0
  %2866 = vmatprep.subr.bf16.mxu0 0
  %2867 = vmatpush1.bf16.msra.mxu0 0
  %2868 = vmatprep.subr.bf16.mxu0 0
  %2869 = vmatpush1.bf16.msra.mxu0 0
  %2870 = vmatprep.subr.bf16.mxu0 0
  %2871 = vmatpush1.bf16.msra.mxu0 0
  %2872 = vmatprep.subr.bf16.mxu0 0
  %2873 = vmatpush1.bf16.msra.mxu0 0
  %2874 = vmatprep.subr.bf16.mxu0 0
  %2875 = vmatpush1.bf16.msra.mxu0 0
  %2876 = vmatprep.subr.bf16.mxu0 0
  %2877 = vmatpush1.bf16.msra.mxu0 0
  %2878 = vmatprep.subr.bf16.mxu0 0
  %2879 = vmatpush1.bf16.msra.mxu0 0
  %2880 = vmatprep.subr.bf16.mxu0 0
  %2881 = vmatpush1.bf16.msra.mxu0 0
  %2882 = vmatprep.subr.bf16.mxu0 0
  %2883 = vmatpush1.bf16.msra.mxu0 0
  %2884 = vmatprep.mubr.bf16.mxu0 0
  %2885 = vmatmul.mubr.bf16.gmra.mrb[0].mxu0 %v2802
  %v2886 = vpop.f32.mrb[0].mxu0
  %v2887 = vadd.f32 0.0, %v2886
  %v2888 = vpop.f32.mrb[0].mxu0
  %v2889 = vpop.f32.mrb[0].mxu0
  %v2890 = vadd.f32 0.0, %v2889
  %v2891 = vpop.f32.mrb[0].mxu0
  %2892 = vmatprep.mubr.bf16.mxu0 0
  %2893 = vmatmul.mubr.bf16.gmra.mrb[0].mxu0 %v2805
  %v2894 = vpop.f32.mrb[0].mxu0
  %v2895 = vadd.f32 0.0, %v2894
  %v2896 = vpop.f32.mrb[0].mxu0
  %v2897 = vpop.f32.mrb[0].mxu0
  %v2898 = vadd.f32 0.0, %v2897
  %v2899 = vpop.f32.mrb[0].mxu0
  %2900 = vmatprep.mubr.bf16.mxu0 0
  %2901 = vmatmul.mubr.bf16.gmra.mrb[0].mxu0 %v2808
  %v2902 = vpop.f32.mrb[0].mxu0
  %v2903 = vadd.f32 0.0, %v2902
  %v2904 = vpop.f32.mrb[0].mxu0
  %v2905 = vpop.f32.mrb[0].mxu0
  %v2906 = vadd.f32 0.0, %v2905
  %v2907 = vpop.f32.mrb[0].mxu0
  %2908 = vmatprep.mubr.bf16.mxu0 0
  %2909 = vmatmul.mubr.bf16.gmra.mrb[0].mxu0 %v2811
  %v2910 = vpop.f32.mrb[0].mxu0
  %v2911 = vadd.f32 0.0, %v2910
  %v2912 = vpop.f32.mrb[0].mxu0
  %v2913 = vpop.f32.mrb[0].mxu0
  %v2914 = vadd.f32 0.0, %v2913
  %v2915 = vpop.f32.mrb[0].mxu0
  %2916 = vmatprep.mubr.bf16.mxu0 0
  %2917 = vmatmul.mubr.bf16.gmra.mrb[0].mxu0 %v2814
  %v2918 = vpop.f32.mrb[0].mxu0
  %v2919 = vadd.f32 0.0, %v2918
  %v2920 = vpop.f32.mrb[0].mxu0
  %v2921 = vpop.f32.mrb[0].mxu0
  %v2922 = vadd.f32 0.0, %v2921
  %v2923 = vpop.f32.mrb[0].mxu0
  %2924 = vmatprep.mubr.bf16.mxu0 0
  %2925 = vmatmul.mubr.bf16.gmra.mrb[0].mxu0 %v2817
  %v2926 = vpop.f32.mrb[0].mxu0
  %v2927 = vadd.f32 0.0, %v2926
  %v2928 = vpop.f32.mrb[0].mxu0
  %v2929 = vpop.f32.mrb[0].mxu0
  %v2930 = vadd.f32 0.0, %v2929
  %v2931 = vpop.f32.mrb[0].mxu0
  %2932 = vmatprep.mubr.bf16.mxu0 0
  %2933 = vmatmul.mubr.bf16.gmra.mrb[0].mxu0 %v2820
  %v2934 = vpop.f32.mrb[0].mxu0
  %v2935 = vadd.f32 0.0, %v2934
  %v2936 = vpop.f32.mrb[0].mxu0
  %v2937 = vpop.f32.mrb[0].mxu0
  %v2938 = vadd.f32 0.0, %v2937
  %v2939 = vpop.f32.mrb[0].mxu0
  %2940 = vmatprep.mubr.bf16.mxu0 0
  %2941 = vmatmul.mubr.bf16.gmra.mrb[0].mxu0 %v2823
  %v2942 = vpop.f32.mrb[0].mxu0
  %v2943 = vadd.f32 0.0, %v2942
  %v2944 = vpop.f32.mrb[0].mxu0
  %v2945 = vpop.f32.mrb[0].mxu0
  %v2946 = vadd.f32 0.0, %v2945
  %v2947 = vpop.f32.mrb[0].mxu0
  %2948 = vmatprep.mubr.bf16.mxu0 0
  %2949 = vmatmul.mubr.bf16.gmra.mrb[0].mxu0 %v2826
  %v2950 = vpop.f32.mrb[0].mxu0
  %v2951 = vadd.f32 0.0, %v2950
  %v2952 = vpop.f32.mrb[0].mxu0
  %v2953 = vpop.f32.mrb[0].mxu0
  %v2954 = vadd.f32 0.0, %v2953
  %v2955 = vpop.f32.mrb[0].mxu0
  %2956 = vmatprep.mubr.bf16.mxu0 0
  %2957 = vmatmul.mubr.bf16.gmra.mrb[0].mxu0 %v2829
  %v2958 = vpop.f32.mrb[0].mxu0
  %v2959 = vadd.f32 0.0, %v2958
  %v2960 = vpop.f32.mrb[0].mxu0
  %v2961 = vpop.f32.mrb[0].mxu0
  %v2962 = vadd.f32 0.0, %v2961
  %v2963 = vpop.f32.mrb[0].mxu0
  %2964 = vmatprep.mubr.bf16.mxu0 0
  %2965 = vmatmul.mubr.bf16.gmra.mrb[0].mxu0 %v2832
  %v2966 = vpop.f32.mrb[0].mxu0
  %v2967 = vadd.f32 0.0, %v2966
  %v2968 = vpop.f32.mrb[0].mxu0
  %v2969 = vpop.f32.mrb[0].mxu0
  %v2970 = vadd.f32 0.0, %v2969
  %v2971 = vpop.f32.mrb[0].mxu0
  %2972 = vmatprep.mubr.bf16.mxu0 0
  %2973 = vmatmul.mubr.bf16.gmra.mrb[0].mxu0 %v2835
  %v2974 = vpop.f32.mrb[0].mxu0
  %v2975 = vadd.f32 0.0, %v2974
  %v2976 = vpop.f32.mrb[0].mxu0
  %v2977 = vpop.f32.mrb[0].mxu0
  %v2978 = vadd.f32 0.0, %v2977
  %v2979 = vpop.f32.mrb[0].mxu0
  %2980 = vmatprep.mubr.bf16.mxu0 0
  %2981 = vmatmul.mubr.bf16.gmra.mrb[0].mxu0 %v2838
  %v2982 = vpop.f32.mrb[0].mxu0
  %v2983 = vadd.f32 0.0, %v2982
  %v2984 = vpop.f32.mrb[0].mxu0
  %v2985 = vpop.f32.mrb[0].mxu0
  %v2986 = vadd.f32 0.0, %v2985
  %v2987 = vpop.f32.mrb[0].mxu0
  %2988 = vmatprep.mubr.bf16.mxu0 0
  %2989 = vmatmul.mubr.bf16.gmra.mrb[0].mxu0 %v2841
  %v2990 = vpop.f32.mrb[0].mxu0
  %v2991 = vadd.f32 0.0, %v2990
  %v2992 = vpop.f32.mrb[0].mxu0
  %v2993 = vpop.f32.mrb[0].mxu0
  %v2994 = vadd.f32 0.0, %v2993
  %v2995 = vpop.f32.mrb[0].mxu0
  %2996 = vmatprep.mubr.bf16.mxu0 0
  %2997 = vmatmul.mubr.bf16.gmra.mrb[0].mxu0 %v2844
  %v2998 = vpop.f32.mrb[0].mxu0
  %v2999 = vadd.f32 0.0, %v2998
  %v3000 = vpop.f32.mrb[0].mxu0
  %v3001 = vpop.f32.mrb[0].mxu0
  %v3002 = vadd.f32 0.0, %v3001
  %v3003 = vpop.f32.mrb[0].mxu0
  %3004 = vmatprep.mubr.bf16.mxu0 0
  %3005 = vmatmul.mubr.bf16.gmra.mrb[0].mxu0 %v2847
  %v3006 = vpop.f32.mrb[0].mxu0
  %v3007 = vadd.f32 0.0, %v3006
  %v3008 = vpop.f32.mrb[0].mxu0
  %v3009 = vpop.f32.mrb[0].mxu0
  %v3010 = vadd.f32 0.0, %v3009
  %v3011 = vpop.f32.mrb[0].mxu0
  %3012 = vdwg.mxu0
  %v3014 = vsel %vm115, %v2735, 0
  %v3017 = vsel %vm115, %v2736, 0
  %v3020 = vsel %vm115, %v2737, 0
  %v3023 = vsel %vm115, %v2738, 0
  %v3026 = vsel %vm115, %v2739, 0
  %v3029 = vsel %vm115, %v2740, 0
  %v3032 = vsel %vm115, %v2741, 0
  %v3035 = vsel %vm115, %v2742, 0
  %v3038 = vsel %vm115, %v2743, 0
  %v3041 = vsel %vm115, %v2744, 0
  %v3044 = vsel %vm115, %v2745, 0
  %v3047 = vsel %vm115, %v2746, 0
  %v3050 = vsel %vm115, %v2747, 0
  %v3053 = vsel %vm115, %v2748, 0
  %v3056 = vsel %vm115, %v2749, 0
  %v3059 = vsel %vm115, %v2750, 0
  %v3062 = vsel %vm164, %v2751, 0
  %3064 = vmatprep.subr.bf16.mxu0 0
  %3065 = vmatpush1.bf16.msra.mxu0 %v3062
  %3066 = vmatprep.subr.bf16.mxu0 0
  %3067 = vmatpush1.bf16.msra.mxu0 0
  %3068 = vmatprep.subr.bf16.mxu0 0
  %3069 = vmatpush1.bf16.msra.mxu0 0
  %3070 = vmatprep.subr.bf16.mxu0 0
  %3071 = vmatpush1.bf16.msra.mxu0 0
  %3072 = vmatprep.subr.bf16.mxu0 0
  %3073 = vmatpush1.bf16.msra.mxu0 0
  %3074 = vmatprep.subr.bf16.mxu0 0
  %3075 = vmatpush1.bf16.msra.mxu0 0
  %3076 = vmatprep.subr.bf16.mxu0 0
  %3077 = vmatpush1.bf16.msra.mxu0 0
  %3078 = vmatprep.subr.bf16.mxu0 0
  %3079 = vmatpush1.bf16.msra.mxu0 0
  %3080 = vmatprep.subr.bf16.mxu0 0
  %3081 = vmatpush1.bf16.msra.mxu0 0
  %3082 = vmatprep.subr.bf16.mxu0 0
  %3083 = vmatpush1.bf16.msra.mxu0 0
  %3084 = vmatprep.subr.bf16.mxu0 0
  %3085 = vmatpush1.bf16.msra.mxu0 0
  %3086 = vmatprep.subr.bf16.mxu0 0
  %3087 = vmatpush1.bf16.msra.mxu0 0
  %3088 = vmatprep.subr.bf16.mxu0 0
  %3089 = vmatpush1.bf16.msra.mxu0 0
  %3090 = vmatprep.subr.bf16.mxu0 0
  %3091 = vmatpush1.bf16.msra.mxu0 0
  %3092 = vmatprep.subr.bf16.mxu0 0
  %3093 = vmatpush1.bf16.msra.mxu0 0
  %3094 = vmatprep.subr.bf16.mxu0 0
  %3095 = vmatpush1.bf16.msra.mxu0 0
  %3096 = vmatprep.mubr.bf16.mxu0 0
  %3097 = vmatmul.mubr.bf16.gmra.mrb[0].mxu0 %v3014
  %v3098 = vpop.f32.mrb[0].mxu0
  %v3099 = vadd.f32 %v2887, %v3098
  %v3100 = vpop.f32.mrb[0].mxu0
  %v3101 = vpop.f32.mrb[0].mxu0
  %v3102 = vadd.f32 %v2890, %v3101
  %v3103 = vpop.f32.mrb[0].mxu0
  %3104 = vmatprep.mubr.bf16.mxu0 0
  %3105 = vmatmul.mubr.bf16.gmra.mrb[0].mxu0 %v3017
  %v3106 = vpop.f32.mrb[0].mxu0
  %v3107 = vadd.f32 %v2895, %v3106
  %v3108 = vpop.f32.mrb[0].mxu0
  %v3109 = vpop.f32.mrb[0].mxu0
  %v3110 = vadd.f32 %v2898, %v3109
  %v3111 = vpop.f32.mrb[0].mxu0
  %3112 = vmatprep.mubr.bf16.mxu0 0
  %3113 = vmatmul.mubr.bf16.gmra.mrb[0].mxu0 %v3020
  %v3114 = vpop.f32.mrb[0].mxu0
  %v3115 = vadd.f32 %v2903, %v3114
  %v3116 = vpop.f32.mrb[0].mxu0
  %v3117 = vpop.f32.mrb[0].mxu0
  %v3118 = vadd.f32 %v2906, %v3117
  %v3119 = vpop.f32.mrb[0].mxu0
  %3120 = vmatprep.mubr.bf16.mxu0 0
  %3121 = vmatmul.mubr.bf16.gmra.mrb[0].mxu0 %v3023
  %v3122 = vpop.f32.mrb[0].mxu0
  %v3123 = vadd.f32 %v2911, %v3122
  %v3124 = vpop.f32.mrb[0].mxu0
  %v3125 = vpop.f32.mrb[0].mxu0
  %v3126 = vadd.f32 %v2914, %v3125
  %v3127 = vpop.f32.mrb[0].mxu0
  %3128 = vmatprep.mubr.bf16.mxu0 0
  %3129 = vmatmul.mubr.bf16.gmra.mrb[0].mxu0 %v3026
  %v3130 = vpop.f32.mrb[0].mxu0
  %v3131 = vadd.f32 %v2919, %v3130
  %v3132 = vpop.f32.mrb[0].mxu0
  %v3133 = vpop.f32.mrb[0].mxu0
  %v3134 = vadd.f32 %v2922, %v3133
  %v3135 = vpop.f32.mrb[0].mxu0
  %3136 = vmatprep.mubr.bf16.mxu0 0
  %3137 = vmatmul.mubr.bf16.gmra.mrb[0].mxu0 %v3029
  %v3138 = vpop.f32.mrb[0].mxu0
  %v3139 = vadd.f32 %v2927, %v3138
  %v3140 = vpop.f32.mrb[0].mxu0
  %v3141 = vpop.f32.mrb[0].mxu0
  %v3142 = vadd.f32 %v2930, %v3141
  %v3143 = vpop.f32.mrb[0].mxu0
  %3144 = vmatprep.mubr.bf16.mxu0 0
  %3145 = vmatmul.mubr.bf16.gmra.mrb[0].mxu0 %v3032
  %v3146 = vpop.f32.mrb[0].mxu0
  %v3147 = vadd.f32 %v2935, %v3146
  %v3148 = vpop.f32.mrb[0].mxu0
  %v3149 = vpop.f32.mrb[0].mxu0
  %v3150 = vadd.f32 %v2938, %v3149
  %v3151 = vpop.f32.mrb[0].mxu0
  %3152 = vmatprep.mubr.bf16.mxu0 0
  %3153 = vmatmul.mubr.bf16.gmra.mrb[0].mxu0 %v3035
  %v3154 = vpop.f32.mrb[0].mxu0
  %v3155 = vadd.f32 %v2943, %v3154
  %v3156 = vpop.f32.mrb[0].mxu0
  %v3157 = vpop.f32.mrb[0].mxu0
  %v3158 = vadd.f32 %v2946, %v3157
  %v3159 = vpop.f32.mrb[0].mxu0
  %3160 = vmatprep.mubr.bf16.mxu0 0
  %3161 = vmatmul.mubr.bf16.gmra.mrb[0].mxu0 %v3038
  %v3162 = vpop.f32.mrb[0].mxu0
  %v3163 = vadd.f32 %v2951, %v3162
  %v3164 = vpop.f32.mrb[0].mxu0
  %v3165 = vpop.f32.mrb[0].mxu0
  %v3166 = vadd.f32 %v2954, %v3165
  %v3167 = vpop.f32.mrb[0].mxu0
  %3168 = vmatprep.mubr.bf16.mxu0 0
  %3169 = vmatmul.mubr.bf16.gmra.mrb[0].mxu0 %v3041
  %v3170 = vpop.f32.mrb[0].mxu0
  %v3171 = vadd.f32 %v2959, %v3170
  %v3172 = vpop.f32.mrb[0].mxu0
  %v3173 = vpop.f32.mrb[0].mxu0
  %v3174 = vadd.f32 %v2962, %v3173
  %v3175 = vpop.f32.mrb[0].mxu0
  %3176 = vmatprep.mubr.bf16.mxu0 0
  %3177 = vmatmul.mubr.bf16.gmra.mrb[0].mxu0 %v3044
  %v3178 = vpop.f32.mrb[0].mxu0
  %v3179 = vadd.f32 %v2967, %v3178
  %v3180 = vpop.f32.mrb[0].mxu0
  %v3181 = vpop.f32.mrb[0].mxu0
  %v3182 = vadd.f32 %v2970, %v3181
  %v3183 = vpop.f32.mrb[0].mxu0
  %3184 = vmatprep.mubr.bf16.mxu0 0
  %3185 = vmatmul.mubr.bf16.gmra.mrb[0].mxu0 %v3047
  %v3186 = vpop.f32.mrb[0].mxu0
  %v3187 = vadd.f32 %v2975, %v3186
  %v3188 = vpop.f32.mrb[0].mxu0
  %v3189 = vpop.f32.mrb[0].mxu0
  %v3190 = vadd.f32 %v2978, %v3189
  %v3191 = vpop.f32.mrb[0].mxu0
  %3192 = vmatprep.mubr.bf16.mxu0 0
  %3193 = vmatmul.mubr.bf16.gmra.mrb[0].mxu0 %v3050
  %v3194 = vpop.f32.mrb[0].mxu0
  %v3195 = vadd.f32 %v2983, %v3194
  %v3196 = vpop.f32.mrb[0].mxu0
  %v3197 = vpop.f32.mrb[0].mxu0
  %v3198 = vadd.f32 %v2986, %v3197
  %v3199 = vpop.f32.mrb[0].mxu0
  %3200 = vmatprep.mubr.bf16.mxu0 0
  %3201 = vmatmul.mubr.bf16.gmra.mrb[0].mxu0 %v3053
  %v3202 = vpop.f32.mrb[0].mxu0
  %v3203 = vadd.f32 %v2991, %v3202
  %v3204 = vpop.f32.mrb[0].mxu0
  %v3205 = vpop.f32.mrb[0].mxu0
  %v3206 = vadd.f32 %v2994, %v3205
  %v3207 = vpop.f32.mrb[0].mxu0
  %3208 = vmatprep.mubr.bf16.mxu0 0
  %3209 = vmatmul.mubr.bf16.gmra.mrb[0].mxu0 %v3056
  %v3210 = vpop.f32.mrb[0].mxu0
  %v3211 = vadd.f32 %v2999, %v3210
  %v3212 = vpop.f32.mrb[0].mxu0
  %v3213 = vpop.f32.mrb[0].mxu0
  %v3214 = vadd.f32 %v3002, %v3213
  %v3215 = vpop.f32.mrb[0].mxu0
  %3216 = vmatprep.mubr.bf16.mxu0 0
  %3217 = vmatmul.mubr.bf16.gmra.mrb[0].mxu0 %v3059
  %v3218 = vpop.f32.mrb[0].mxu0
  %v3219 = vadd.f32 %v3007, %v3218
  %v3220 = vpop.f32.mrb[0].mxu0
  %v3221 = vpop.f32.mrb[0].mxu0
  %v3222 = vadd.f32 %v3010, %v3221
  %v3223 = vpop.f32.mrb[0].mxu0
  %3224 = vdwg.mxu0
  %v3225 = vld [vmem:[%s2702 + $0x2] sm:$0xff]
  %v3226 = vld [vmem:[%s2702 + $0xa] sm:$0xff]
  %v3227 = vld [vmem:[%s2702 + $0x12] sm:$0xff]
  %v3228 = vld [vmem:[%s2702 + $0x1a] sm:$0xff]
  %v3229 = vld [vmem:[%s2702 + $0x22] sm:$0xff]
  %v3230 = vld [vmem:[%s2702 + $0x2a] sm:$0xff]
  %v3231 = vld [vmem:[%s2702 + $0x32] sm:$0xff]
  %v3232 = vld [vmem:[%s2702 + $0x3a] sm:$0xff]
  %v3233 = vld [vmem:[%s2702 + $0x42] sm:$0xff]
  %v3234 = vld [vmem:[%s2702 + $0x4a] sm:$0xff]
  %v3235 = vld [vmem:[%s2702 + $0x52] sm:$0xff]
  %v3236 = vld [vmem:[%s2702 + $0x5a] sm:$0xff]
  %v3237 = vld [vmem:[%s2702 + $0x62] sm:$0xff]
  %v3238 = vld [vmem:[%s2702 + $0x6a] sm:$0xff]
  %v3239 = vld [vmem:[%s2702 + $0x72] sm:$0xff]
  %v3240 = vld [vmem:[%s2702 + $0x7a] sm:$0xff]
  %v3241 = vld [vmem:[%s2702 + $0x82] sm:$0xff]
  %v3242 = vld [vmem:[%s2702 + $0x8a] sm:$0xff]
  %v3243 = vld [vmem:[%s2702 + $0x92] sm:$0xff]
  %v3244 = vld [vmem:[%s2702 + $0x9a] sm:$0xff]
  %v3245 = vld [vmem:[%s2702 + $0xa2] sm:$0xff]
  %v3246 = vld [vmem:[%s2702 + $0xaa] sm:$0xff]
  %v3247 = vld [vmem:[%s2702 + $0xb2] sm:$0xff]
  %v3248 = vld [vmem:[%s2702 + $0xba] sm:$0xff]
  %v3249 = vld [vmem:[%s2702 + $0xc2] sm:$0xff]
  %v3250 = vld [vmem:[%s2702 + $0xca] sm:$0xff]
  %v3251 = vld [vmem:[%s2702 + $0xd2] sm:$0xff]
  %v3252 = vld [vmem:[%s2702 + $0xda] sm:$0xff]
  %v3253 = vld [vmem:[%s2702 + $0xe2] sm:$0xff]
  %v3254 = vld [vmem:[%s2702 + $0xea] sm:$0xff]
  %v3255 = vld [vmem:[%s2702 + $0xf2] sm:$0xff]
  %v3256 = vld [vmem:[%s2702 + $0xfa] sm:$0xff]
  %v3257 = vpack.c.bf16 %v3226, %v3225
  %v3258 = vpack.c.bf16 %v3228, %v3227
  %v3259 = vpack.c.bf16 %v3230, %v3229
  %v3260 = vpack.c.bf16 %v3232, %v3231
  %v3261 = vpack.c.bf16 %v3234, %v3233
  %v3262 = vpack.c.bf16 %v3236, %v3235
  %v3263 = vpack.c.bf16 %v3238, %v3237
  %v3264 = vpack.c.bf16 %v3240, %v3239
  %v3265 = vpack.c.bf16 %v3242, %v3241
  %v3266 = vpack.c.bf16 %v3244, %v3243
  %v3267 = vpack.c.bf16 %v3246, %v3245
  %v3268 = vpack.c.bf16 %v3248, %v3247
  %v3269 = vpack.c.bf16 %v3250, %v3249
  %v3270 = vpack.c.bf16 %v3252, %v3251
  %v3271 = vpack.c.bf16 %v3254, %v3253
  %v3272 = vpack.c.bf16 %v3256, %v3255
  %v3273 = vld [vmem:[%s589] sm:$0x3]
  %v3275 = vsel %vm115, %v3257, 0
  %v3278 = vsel %vm115, %v3258, 0
  %v3281 = vsel %vm115, %v3259, 0
  %v3284 = vsel %vm115, %v3260, 0
  %v3287 = vsel %vm115, %v3261, 0
  %v3290 = vsel %vm115, %v3262, 0
  %v3293 = vsel %vm115, %v3263, 0
  %v3296 = vsel %vm115, %v3264, 0
  %v3299 = vsel %vm115, %v3265, 0
  %v3302 = vsel %vm115, %v3266, 0
  %v3305 = vsel %vm115, %v3267, 0
  %v3308 = vsel %vm115, %v3268, 0
  %v3311 = vsel %vm115, %v3269, 0
  %v3314 = vsel %vm115, %v3270, 0
  %v3317 = vsel %vm115, %v3271, 0
  %v3320 = vsel %vm115, %v3272, 0
  %v3323 = vsel %vm164, %v3273, 0
  %3325 = vmatprep.subr.bf16.mxu0 0
  %3326 = vmatpush1.bf16.msra.mxu0 %v3323
  %3327 = vmatprep.subr.bf16.mxu0 0
  %3328 = vmatpush1.bf16.msra.mxu0 0
  %3329 = vmatprep.subr.bf16.mxu0 0
  %3330 = vmatpush1.bf16.msra.mxu0 0
  %3331 = vmatprep.subr.bf16.mxu0 0
  %3332 = vmatpush1.bf16.msra.mxu0 0
  %3333 = vmatprep.subr.bf16.mxu0 0
  %3334 = vmatpush1.bf16.msra.mxu0 0
  %3335 = vmatprep.subr.bf16.mxu0 0
  %3336 = vmatpush1.bf16.msra.mxu0 0
  %3337 = vmatprep.subr.bf16.mxu0 0
  %3338 = vmatpush1.bf16.msra.mxu0 0
  %3339 = vmatprep.subr.bf16.mxu0 0
  %3340 = vmatpush1.bf16.msra.mxu0 0
  %3341 = vmatprep.subr.bf16.mxu0 0
  %3342 = vmatpush1.bf16.msra.mxu0 0
  %3343 = vmatprep.subr.bf16.mxu0 0
  %3344 = vmatpush1.bf16.msra.mxu0 0
  %3345 = vmatprep.subr.bf16.mxu0 0
  %3346 = vmatpush1.bf16.msra.mxu0 0
  %3347 = vmatprep.subr.bf16.mxu0 0
  %3348 = vmatpush1.bf16.msra.mxu0 0
  %3349 = vmatprep.subr.bf16.mxu0 0
  %3350 = vmatpush1.bf16.msra.mxu0 0
  %3351 = vmatprep.subr.bf16.mxu0 0
  %3352 = vmatpush1.bf16.msra.mxu0 0
  %3353 = vmatprep.subr.bf16.mxu0 0
  %3354 = vmatpush1.bf16.msra.mxu0 0
  %3355 = vmatprep.subr.bf16.mxu0 0
  %3356 = vmatpush1.bf16.msra.mxu0 0
  %3357 = vmatprep.mubr.bf16.mxu0 0
  %3358 = vmatmul.mubr.bf16.gmra.mrb[0].mxu0 %v3275
  %v3359 = vpop.f32.mrb[0].mxu0
  %v3360 = vadd.f32 0.0, %v3359
  %v3361 = vpop.f32.mrb[0].mxu0
  %v3362 = vpop.f32.mrb[0].mxu0
  %v3363 = vadd.f32 0.0, %v3362
  %v3364 = vpop.f32.mrb[0].mxu0
  %3365 = vmatprep.mubr.bf16.mxu0 0
  %3366 = vmatmul.mubr.bf16.gmra.mrb[0].mxu0 %v3278
  %v3367 = vpop.f32.mrb[0].mxu0
  %v3368 = vadd.f32 0.0, %v3367
  %v3369 = vpop.f32.mrb[0].mxu0
  %v3370 = vpop.f32.mrb[0].mxu0
  %v3371 = vadd.f32 0.0, %v3370
  %v3372 = vpop.f32.mrb[0].mxu0
  %3373 = vmatprep.mubr.bf16.mxu0 0
  %3374 = vmatmul.mubr.bf16.gmra.mrb[0].mxu0 %v3281
  %v3375 = vpop.f32.mrb[0].mxu0
  %v3376 = vadd.f32 0.0, %v3375
  %v3377 = vpop.f32.mrb[0].mxu0
  %v3378 = vpop.f32.mrb[0].mxu0
  %v3379 = vadd.f32 0.0, %v3378
  %v3380 = vpop.f32.mrb[0].mxu0
  %3381 = vmatprep.mubr.bf16.mxu0 0
  %3382 = vmatmul.mubr.bf16.gmra.mrb[0].mxu0 %v3284
  %v3383 = vpop.f32.mrb[0].mxu0
  %v3384 = vadd.f32 0.0, %v3383
  %v3385 = vpop.f32.mrb[0].mxu0
  %v3386 = vpop.f32.mrb[0].mxu0
  %v3387 = vadd.f32 0.0, %v3386
  %v3388 = vpop.f32.mrb[0].mxu0
  %3389 = vmatprep.mubr.bf16.mxu0 0
  %3390 = vmatmul.mubr.bf16.gmra.mrb[0].mxu0 %v3287
  %v3391 = vpop.f32.mrb[0].mxu0
  %v3392 = vadd.f32 0.0, %v3391
  %v3393 = vpop.f32.mrb[0].mxu0
  %v3394 = vpop.f32.mrb[0].mxu0
  %v3395 = vadd.f32 0.0, %v3394
  %v3396 = vpop.f32.mrb[0].mxu0
  %3397 = vmatprep.mubr.bf16.mxu0 0
  %3398 = vmatmul.mubr.bf16.gmra.mrb[0].mxu0 %v3290
  %v3399 = vpop.f32.mrb[0].mxu0
  %v3400 = vadd.f32 0.0, %v3399
  %v3401 = vpop.f32.mrb[0].mxu0
  %v3402 = vpop.f32.mrb[0].mxu0
  %v3403 = vadd.f32 0.0, %v3402
  %v3404 = vpop.f32.mrb[0].mxu0
  %3405 = vmatprep.mubr.bf16.mxu0 0
  %3406 = vmatmul.mubr.bf16.gmra.mrb[0].mxu0 %v3293
  %v3407 = vpop.f32.mrb[0].mxu0
  %v3408 = vadd.f32 0.0, %v3407
  %v3409 = vpop.f32.mrb[0].mxu0
  %v3410 = vpop.f32.mrb[0].mxu0
  %v3411 = vadd.f32 0.0, %v3410
  %v3412 = vpop.f32.mrb[0].mxu0
  %3413 = vmatprep.mubr.bf16.mxu0 0
  %3414 = vmatmul.mubr.bf16.gmra.mrb[0].mxu0 %v3296
  %v3415 = vpop.f32.mrb[0].mxu0
  %v3416 = vadd.f32 0.0, %v3415
  %v3417 = vpop.f32.mrb[0].mxu0
  %v3418 = vpop.f32.mrb[0].mxu0
  %v3419 = vadd.f32 0.0, %v3418
  %v3420 = vpop.f32.mrb[0].mxu0
  %3421 = vmatprep.mubr.bf16.mxu0 0
  %3422 = vmatmul.mubr.bf16.gmra.mrb[0].mxu0 %v3299
  %v3423 = vpop.f32.mrb[0].mxu0
  %v3424 = vadd.f32 0.0, %v3423
  %v3425 = vpop.f32.mrb[0].mxu0
  %v3426 = vpop.f32.mrb[0].mxu0
  %v3427 = vadd.f32 0.0, %v3426
  %v3428 = vpop.f32.mrb[0].mxu0
  %3429 = vmatprep.mubr.bf16.mxu0 0
  %3430 = vmatmul.mubr.bf16.gmra.mrb[0].mxu0 %v3302
  %v3431 = vpop.f32.mrb[0].mxu0
  %v3432 = vadd.f32 0.0, %v3431
  %v3433 = vpop.f32.mrb[0].mxu0
  %v3434 = vpop.f32.mrb[0].mxu0
  %v3435 = vadd.f32 0.0, %v3434
  %v3436 = vpop.f32.mrb[0].mxu0
  %3437 = vmatprep.mubr.bf16.mxu0 0
  %3438 = vmatmul.mubr.bf16.gmra.mrb[0].mxu0 %v3305
  %v3439 = vpop.f32.mrb[0].mxu0
  %v3440 = vadd.f32 0.0, %v3439
  %v3441 = vpop.f32.mrb[0].mxu0
  %v3442 = vpop.f32.mrb[0].mxu0
  %v3443 = vadd.f32 0.0, %v3442
  %v3444 = vpop.f32.mrb[0].mxu0
  %3445 = vmatprep.mubr.bf16.mxu0 0
  %3446 = vmatmul.mubr.bf16.gmra.mrb[0].mxu0 %v3308
  %v3447 = vpop.f32.mrb[0].mxu0
  %v3448 = vadd.f32 0.0, %v3447
  %v3449 = vpop.f32.mrb[0].mxu0
  %v3450 = vpop.f32.mrb[0].mxu0
  %v3451 = vadd.f32 0.0, %v3450
  %v3452 = vpop.f32.mrb[0].mxu0
  %3453 = vmatprep.mubr.bf16.mxu0 0
  %3454 = vmatmul.mubr.bf16.gmra.mrb[0].mxu0 %v3311
  %v3455 = vpop.f32.mrb[0].mxu0
  %v3456 = vadd.f32 0.0, %v3455
  %v3457 = vpop.f32.mrb[0].mxu0
  %v3458 = vpop.f32.mrb[0].mxu0
  %v3459 = vadd.f32 0.0, %v3458
  %v3460 = vpop.f32.mrb[0].mxu0
  %3461 = vmatprep.mubr.bf16.mxu0 0
  %3462 = vmatmul.mubr.bf16.gmra.mrb[0].mxu0 %v3314
  %v3463 = vpop.f32.mrb[0].mxu0
  %v3464 = vadd.f32 0.0, %v3463
  %v3465 = vpop.f32.mrb[0].mxu0
  %v3466 = vpop.f32.mrb[0].mxu0
  %v3467 = vadd.f32 0.0, %v3466
  %v3468 = vpop.f32.mrb[0].mxu0
  %3469 = vmatprep.mubr.bf16.mxu0 0
  %3470 = vmatmul.mubr.bf16.gmra.mrb[0].mxu0 %v3317
  %v3471 = vpop.f32.mrb[0].mxu0
  %v3472 = vadd.f32 0.0, %v3471
  %v3473 = vpop.f32.mrb[0].mxu0
  %v3474 = vpop.f32.mrb[0].mxu0
  %v3475 = vadd.f32 0.0, %v3474
  %v3476 = vpop.f32.mrb[0].mxu0
  %3477 = vmatprep.mubr.bf16.mxu0 0
  %3478 = vmatmul.mubr.bf16.gmra.mrb[0].mxu0 %v3320
  %v3479 = vpop.f32.mrb[0].mxu0
  %v3480 = vadd.f32 0.0, %v3479
  %v3481 = vpop.f32.mrb[0].mxu0
  %v3482 = vpop.f32.mrb[0].mxu0
  %v3483 = vadd.f32 0.0, %v3482
  %v3484 = vpop.f32.mrb[0].mxu0
  %3485 = vdwg.mxu0
  %v3486 = vadd.f32 %v3099, %v3360
  %v3487 = vadd.f32 %v3102, %v3363
  %v3488 = vadd.f32 %v3107, %v3368
  %v3489 = vadd.f32 %v3110, %v3371
  %v3490 = vadd.f32 %v3115, %v3376
  %v3491 = vadd.f32 %v3118, %v3379
  %v3492 = vadd.f32 %v3123, %v3384
  %v3493 = vadd.f32 %v3126, %v3387
  %v3494 = vadd.f32 %v3131, %v3392
  %v3495 = vadd.f32 %v3134, %v3395
  %v3496 = vadd.f32 %v3139, %v3400
  %v3497 = vadd.f32 %v3142, %v3403
  %v3498 = vadd.f32 %v3147, %v3408
  %v3499 = vadd.f32 %v3150, %v3411
  %v3500 = vadd.f32 %v3155, %v3416
  %v3501 = vadd.f32 %v3158, %v3419
  %v3502 = vadd.f32 %v3163, %v3424
  %v3503 = vadd.f32 %v3166, %v3427
  %v3504 = vadd.f32 %v3171, %v3432
  %v3505 = vadd.f32 %v3174, %v3435
  %v3506 = vadd.f32 %v3179, %v3440
  %v3507 = vadd.f32 %v3182, %v3443
  %v3508 = vadd.f32 %v3187, %v3448
  %v3509 = vadd.f32 %v3190, %v3451
  %v3510 = vadd.f32 %v3195, %v3456
  %v3511 = vadd.f32 %v3198, %v3459
  %v3512 = vadd.f32 %v3203, %v3464
  %v3513 = vadd.f32 %v3206, %v3467
  %v3514 = vadd.f32 %v3211, %v3472
  %v3515 = vadd.f32 %v3214, %v3475
  %v3516 = vadd.f32 %v3219, %v3480
  %v3517 = vadd.f32 %v3222, %v3483
  %v3518 = vld [vmem:[%s2702 + $0x10] sm:$0xff]
  %v3519 = vld [vmem:[%s2702 + $0x18] sm:$0xff]
  %v3520 = vld [vmem:[%s2702 + $0x20] sm:$0xff]
  %v3521 = vld [vmem:[%s2702 + $0x28] sm:$0xff]
  %v3522 = vld [vmem:[%s2702 + $0x30] sm:$0xff]
  %v3523 = vld [vmem:[%s2702 + $0x38] sm:$0xff]
  %v3524 = vld [vmem:[%s2702 + $0x40] sm:$0xff]
  %v3525 = vld [vmem:[%s2702 + $0x48] sm:$0xff]
  %v3526 = vld [vmem:[%s2702 + $0x50] sm:$0xff]
  %v3527 = vld [vmem:[%s2702 + $0x58] sm:$0xff]
  %v3528 = vld [vmem:[%s2702 + $0x60] sm:$0xff]
  %v3529 = vld [vmem:[%s2702 + $0x68] sm:$0xff]
  %v3530 = vld [vmem:[%s2702 + $0x70] sm:$0xff]
  %v3531 = vld [vmem:[%s2702 + $0x78] sm:$0xff]
  %v3532 = vld [vmem:[%s2702 + $0x80] sm:$0xff]
  %v3533 = vld [vmem:[%s2702 + $0x88] sm:$0xff]
  %v3534 = vld [vmem:[%s2702 + $0x90] sm:$0xff]
  %v3535 = vld [vmem:[%s2702 + $0x98] sm:$0xff]
  %v3536 = vld [vmem:[%s2702 + $0xa0] sm:$0xff]
  %v3537 = vld [vmem:[%s2702 + $0xa8] sm:$0xff]
  %v3538 = vld [vmem:[%s2702 + $0xb0] sm:$0xff]
  %v3539 = vld [vmem:[%s2702 + $0xb8] sm:$0xff]
  %v3540 = vld [vmem:[%s2702 + $0xc0] sm:$0xff]
  %v3541 = vld [vmem:[%s2702 + $0xc8] sm:$0xff]
  %v3542 = vld [vmem:[%s2702 + $0xd0] sm:$0xff]
  %v3543 = vld [vmem:[%s2702 + $0xd8] sm:$0xff]
  %v3544 = vld [vmem:[%s2702 + $0xe0] sm:$0xff]
  %v3545 = vld [vmem:[%s2702 + $0xe8] sm:$0xff]
  %v3546 = vld [vmem:[%s2702 + $0xf0] sm:$0xff]
  %v3547 = vld [vmem:[%s2702 + $0xf8] sm:$0xff]
  %v3548 = vld [vmem:[%s2702 + $0x100] sm:$0xff]
  %v3549 = vld [vmem:[%s2702 + $0x108] sm:$0xff]
  %v3550 = vpack.c.bf16 %v3519, %v3518
  %v3551 = vpack.c.bf16 %v3521, %v3520
  %v3552 = vpack.c.bf16 %v3523, %v3522
  %v3553 = vpack.c.bf16 %v3525, %v3524
  %v3554 = vpack.c.bf16 %v3527, %v3526
  %v3555 = vpack.c.bf16 %v3529, %v3528
  %v3556 = vpack.c.bf16 %v3531, %v3530
  %v3557 = vpack.c.bf16 %v3533, %v3532
  %v3558 = vpack.c.bf16 %v3535, %v3534
  %v3559 = vpack.c.bf16 %v3537, %v3536
  %v3560 = vpack.c.bf16 %v3539, %v3538
  %v3561 = vpack.c.bf16 %v3541, %v3540
  %v3562 = vpack.c.bf16 %v3543, %v3542
  %v3563 = vpack.c.bf16 %v3545, %v3544
  %v3564 = vpack.c.bf16 %v3547, %v3546
  %v3565 = vpack.c.bf16 %v3549, %v3548
  %v3566 = vld [vmem:[%s883] sm:$0x3]
  %v3568 = vsel %vm115, %v3550, 0
  %v3571 = vsel %vm115, %v3551, 0
  %v3574 = vsel %vm115, %v3552, 0
  %v3577 = vsel %vm115, %v3553, 0
  %v3580 = vsel %vm115, %v3554, 0
  %v3583 = vsel %vm115, %v3555, 0
  %v3586 = vsel %vm115, %v3556, 0
  %v3589 = vsel %vm115, %v3557, 0
  %v3592 = vsel %vm115, %v3558, 0
  %v3595 = vsel %vm115, %v3559, 0
  %v3598 = vsel %vm115, %v3560, 0
  %v3601 = vsel %vm115, %v3561, 0
  %v3604 = vsel %vm115, %v3562, 0
  %v3607 = vsel %vm115, %v3563, 0
  %v3610 = vsel %vm115, %v3564, 0
  %v3613 = vsel %vm115, %v3565, 0
  %v3616 = vsel %vm164, %v3566, 0
  %3618 = vmatprep.subr.bf16.mxu0 0
  %3619 = vmatpush1.bf16.msra.mxu0 %v3616
  %3620 = vmatprep.subr.bf16.mxu0 0
  %3621 = vmatpush1.bf16.msra.mxu0 0
  %3622 = vmatprep.subr.bf16.mxu0 0
  %3623 = vmatpush1.bf16.msra.mxu0 0
  %3624 = vmatprep.subr.bf16.mxu0 0
  %3625 = vmatpush1.bf16.msra.mxu0 0
  %3626 = vmatprep.subr.bf16.mxu0 0
  %3627 = vmatpush1.bf16.msra.mxu0 0
  %3628 = vmatprep.subr.bf16.mxu0 0
  %3629 = vmatpush1.bf16.msra.mxu0 0
  %3630 = vmatprep.subr.bf16.mxu0 0
  %3631 = vmatpush1.bf16.msra.mxu0 0
  %3632 = vmatprep.subr.bf16.mxu0 0
  %3633 = vmatpush1.bf16.msra.mxu0 0
  %3634 = vmatprep.subr.bf16.mxu0 0
  %3635 = vmatpush1.bf16.msra.mxu0 0
  %3636 = vmatprep.subr.bf16.mxu0 0
  %3637 = vmatpush1.bf16.msra.mxu0 0
  %3638 = vmatprep.subr.bf16.mxu0 0
  %3639 = vmatpush1.bf16.msra.mxu0 0
  %3640 = vmatprep.subr.bf16.mxu0 0
  %3641 = vmatpush1.bf16.msra.mxu0 0
  %3642 = vmatprep.subr.bf16.mxu0 0
  %3643 = vmatpush1.bf16.msra.mxu0 0
  %3644 = vmatprep.subr.bf16.mxu0 0
  %3645 = vmatpush1.bf16.msra.mxu0 0
  %3646 = vmatprep.subr.bf16.mxu0 0
  %3647 = vmatpush1.bf16.msra.mxu0 0
  %3648 = vmatprep.subr.bf16.mxu0 0
  %3649 = vmatpush1.bf16.msra.mxu0 0
  %3650 = vmatprep.mubr.bf16.mxu0 0
  %3651 = vmatmul.mubr.bf16.gmra.mrb[0].mxu0 %v3568
  %v3652 = vpop.f32.mrb[0].mxu0
  %v3653 = vadd.f32 0.0, %v3652
  %v3654 = vpop.f32.mrb[0].mxu0
  %v3655 = vpop.f32.mrb[0].mxu0
  %v3656 = vadd.f32 0.0, %v3655
  %v3657 = vpop.f32.mrb[0].mxu0
  %3658 = vmatprep.mubr.bf16.mxu0 0
  %3659 = vmatmul.mubr.bf16.gmra.mrb[0].mxu0 %v3571
  %v3660 = vpop.f32.mrb[0].mxu0
  %v3661 = vadd.f32 0.0, %v3660
  %v3662 = vpop.f32.mrb[0].mxu0
  %v3663 = vpop.f32.mrb[0].mxu0
  %v3664 = vadd.f32 0.0, %v3663
  %v3665 = vpop.f32.mrb[0].mxu0
  %3666 = vmatprep.mubr.bf16.mxu0 0
  %3667 = vmatmul.mubr.bf16.gmra.mrb[0].mxu0 %v3574
  %v3668 = vpop.f32.mrb[0].mxu0
  %v3669 = vadd.f32 0.0, %v3668
  %v3670 = vpop.f32.mrb[0].mxu0
  %v3671 = vpop.f32.mrb[0].mxu0
  %v3672 = vadd.f32 0.0, %v3671
  %v3673 = vpop.f32.mrb[0].mxu0
  %3674 = vmatprep.mubr.bf16.mxu0 0
  %3675 = vmatmul.mubr.bf16.gmra.mrb[0].mxu0 %v3577
  %v3676 = vpop.f32.mrb[0].mxu0
  %v3677 = vadd.f32 0.0, %v3676
  %v3678 = vpop.f32.mrb[0].mxu0
  %v3679 = vpop.f32.mrb[0].mxu0
  %v3680 = vadd.f32 0.0, %v3679
  %v3681 = vpop.f32.mrb[0].mxu0
  %3682 = vmatprep.mubr.bf16.mxu0 0
  %3683 = vmatmul.mubr.bf16.gmra.mrb[0].mxu0 %v3580
  %v3684 = vpop.f32.mrb[0].mxu0
  %v3685 = vadd.f32 0.0, %v3684
  %v3686 = vpop.f32.mrb[0].mxu0
  %v3687 = vpop.f32.mrb[0].mxu0
  %v3688 = vadd.f32 0.0, %v3687
  %v3689 = vpop.f32.mrb[0].mxu0
  %3690 = vmatprep.mubr.bf16.mxu0 0
  %3691 = vmatmul.mubr.bf16.gmra.mrb[0].mxu0 %v3583
  %v3692 = vpop.f32.mrb[0].mxu0
  %v3693 = vadd.f32 0.0, %v3692
  %v3694 = vpop.f32.mrb[0].mxu0
  %v3695 = vpop.f32.mrb[0].mxu0
  %v3696 = vadd.f32 0.0, %v3695
  %v3697 = vpop.f32.mrb[0].mxu0
  %3698 = vmatprep.mubr.bf16.mxu0 0
  %3699 = vmatmul.mubr.bf16.gmra.mrb[0].mxu0 %v3586
  %v3700 = vpop.f32.mrb[0].mxu0
  %v3701 = vadd.f32 0.0, %v3700
  %v3702 = vpop.f32.mrb[0].mxu0
  %v3703 = vpop.f32.mrb[0].mxu0
  %v3704 = vadd.f32 0.0, %v3703
  %v3705 = vpop.f32.mrb[0].mxu0
  %3706 = vmatprep.mubr.bf16.mxu0 0
  %3707 = vmatmul.mubr.bf16.gmra.mrb[0].mxu0 %v3589
  %v3708 = vpop.f32.mrb[0].mxu0
  %v3709 = vadd.f32 0.0, %v3708
  %v3710 = vpop.f32.mrb[0].mxu0
  %v3711 = vpop.f32.mrb[0].mxu0
  %v3712 = vadd.f32 0.0, %v3711
  %v3713 = vpop.f32.mrb[0].mxu0
  %3714 = vmatprep.mubr.bf16.mxu0 0
  %3715 = vmatmul.mubr.bf16.gmra.mrb[0].mxu0 %v3592
  %v3716 = vpop.f32.mrb[0].mxu0
  %v3717 = vadd.f32 0.0, %v3716
  %v3718 = vpop.f32.mrb[0].mxu0
  %v3719 = vpop.f32.mrb[0].mxu0
  %v3720 = vadd.f32 0.0, %v3719
  %v3721 = vpop.f32.mrb[0].mxu0
  %3722 = vmatprep.mubr.bf16.mxu0 0
  %3723 = vmatmul.mubr.bf16.gmra.mrb[0].mxu0 %v3595
  %v3724 = vpop.f32.mrb[0].mxu0
  %v3725 = vadd.f32 0.0, %v3724
  %v3726 = vpop.f32.mrb[0].mxu0
  %v3727 = vpop.f32.mrb[0].mxu0
  %v3728 = vadd.f32 0.0, %v3727
  %v3729 = vpop.f32.mrb[0].mxu0
  %3730 = vmatprep.mubr.bf16.mxu0 0
  %3731 = vmatmul.mubr.bf16.gmra.mrb[0].mxu0 %v3598
  %v3732 = vpop.f32.mrb[0].mxu0
  %v3733 = vadd.f32 0.0, %v3732
  %v3734 = vpop.f32.mrb[0].mxu0
  %v3735 = vpop.f32.mrb[0].mxu0
  %v3736 = vadd.f32 0.0, %v3735
  %v3737 = vpop.f32.mrb[0].mxu0
  %3738 = vmatprep.mubr.bf16.mxu0 0
  %3739 = vmatmul.mubr.bf16.gmra.mrb[0].mxu0 %v3601
  %v3740 = vpop.f32.mrb[0].mxu0
  %v3741 = vadd.f32 0.0, %v3740
  %v3742 = vpop.f32.mrb[0].mxu0
  %v3743 = vpop.f32.mrb[0].mxu0
  %v3744 = vadd.f32 0.0, %v3743
  %v3745 = vpop.f32.mrb[0].mxu0
  %3746 = vmatprep.mubr.bf16.mxu0 0
  %3747 = vmatmul.mubr.bf16.gmra.mrb[0].mxu0 %v3604
  %v3748 = vpop.f32.mrb[0].mxu0
  %v3749 = vadd.f32 0.0, %v3748
  %v3750 = vpop.f32.mrb[0].mxu0
  %v3751 = vpop.f32.mrb[0].mxu0
  %v3752 = vadd.f32 0.0, %v3751
  %v3753 = vpop.f32.mrb[0].mxu0
  %3754 = vmatprep.mubr.bf16.mxu0 0
  %3755 = vmatmul.mubr.bf16.gmra.mrb[0].mxu0 %v3607
  %v3756 = vpop.f32.mrb[0].mxu0
  %v3757 = vadd.f32 0.0, %v3756
  %v3758 = vpop.f32.mrb[0].mxu0
  %v3759 = vpop.f32.mrb[0].mxu0
  %v3760 = vadd.f32 0.0, %v3759
  %v3761 = vpop.f32.mrb[0].mxu0
  %3762 = vmatprep.mubr.bf16.mxu0 0
  %3763 = vmatmul.mubr.bf16.gmra.mrb[0].mxu0 %v3610
  %v3764 = vpop.f32.mrb[0].mxu0
  %v3765 = vadd.f32 0.0, %v3764
  %v3766 = vpop.f32.mrb[0].mxu0
  %v3767 = vpop.f32.mrb[0].mxu0
  %v3768 = vadd.f32 0.0, %v3767
  %v3769 = vpop.f32.mrb[0].mxu0
  %3770 = vmatprep.mubr.bf16.mxu0 0
  %3771 = vmatmul.mubr.bf16.gmra.mrb[0].mxu0 %v3613
  %v3772 = vpop.f32.mrb[0].mxu0
  %v3773 = vadd.f32 0.0, %v3772
  %v3774 = vpop.f32.mrb[0].mxu0
  %v3775 = vpop.f32.mrb[0].mxu0
  %v3776 = vadd.f32 0.0, %v3775
  %v3777 = vpop.f32.mrb[0].mxu0
  %3778 = vdwg.mxu0
  %v3779 = vadd.f32 %v3486, %v3653
  %v3780 = vadd.f32 %v3487, %v3656
  %v3781 = vadd.f32 %v3488, %v3661
  %v3782 = vadd.f32 %v3489, %v3664
  %v3783 = vadd.f32 %v3490, %v3669
  %v3784 = vadd.f32 %v3491, %v3672
  %v3785 = vadd.f32 %v3492, %v3677
  %v3786 = vadd.f32 %v3493, %v3680
  %v3787 = vadd.f32 %v3494, %v3685
  %v3788 = vadd.f32 %v3495, %v3688
  %v3789 = vadd.f32 %v3496, %v3693
  %v3790 = vadd.f32 %v3497, %v3696
  %v3791 = vadd.f32 %v3498, %v3701
  %v3792 = vadd.f32 %v3499, %v3704
  %v3793 = vadd.f32 %v3500, %v3709
  %v3794 = vadd.f32 %v3501, %v3712
  %v3795 = vadd.f32 %v3502, %v3717
  %v3796 = vadd.f32 %v3503, %v3720
  %v3797 = vadd.f32 %v3504, %v3725
  %v3798 = vadd.f32 %v3505, %v3728
  %v3799 = vadd.f32 %v3506, %v3733
  %v3800 = vadd.f32 %v3507, %v3736
  %v3801 = vadd.f32 %v3508, %v3741
  %v3802 = vadd.f32 %v3509, %v3744
  %v3803 = vadd.f32 %v3510, %v3749
  %v3804 = vadd.f32 %v3511, %v3752
  %v3805 = vadd.f32 %v3512, %v3757
  %v3806 = vadd.f32 %v3513, %v3760
  %v3807 = vadd.f32 %v3514, %v3765
  %v3808 = vadd.f32 %v3515, %v3768
  %v3809 = vadd.f32 %v3516, %v3773
  %v3810 = vadd.f32 %v3517, %v3776
  %v3811 = vld [vmem:[%s2702 + $0x11] sm:$0xff]
  %v3812 = vld [vmem:[%s2702 + $0x19] sm:$0xff]
  %v3813 = vld [vmem:[%s2702 + $0x21] sm:$0xff]
  %v3814 = vld [vmem:[%s2702 + $0x29] sm:$0xff]
  %v3815 = vld [vmem:[%s2702 + $0x31] sm:$0xff]
  %v3816 = vld [vmem:[%s2702 + $0x39] sm:$0xff]
  %v3817 = vld [vmem:[%s2702 + $0x41] sm:$0xff]
  %v3818 = vld [vmem:[%s2702 + $0x49] sm:$0xff]
  %v3819 = vld [vmem:[%s2702 + $0x51] sm:$0xff]
  %v3820 = vld [vmem:[%s2702 + $0x59] sm:$0xff]
  %v3821 = vld [vmem:[%s2702 + $0x61] sm:$0xff]
  %v3822 = vld [vmem:[%s2702 + $0x69] sm:$0xff]
  %v3823 = vld [vmem:[%s2702 + $0x71] sm:$0xff]
  %v3824 = vld [vmem:[%s2702 + $0x79] sm:$0xff]
  %v3825 = vld [vmem:[%s2702 + $0x81] sm:$0xff]
  %v3826 = vld [vmem:[%s2702 + $0x89] sm:$0xff]
  %v3827 = vld [vmem:[%s2702 + $0x91] sm:$0xff]
  %v3828 = vld [vmem:[%s2702 + $0x99] sm:$0xff]
  %v3829 = vld [vmem:[%s2702 + $0xa1] sm:$0xff]
  %v3830 = vld [vmem:[%s2702 + $0xa9] sm:$0xff]
  %v3831 = vld [vmem:[%s2702 + $0xb1] sm:$0xff]
  %v3832 = vld [vmem:[%s2702 + $0xb9] sm:$0xff]
  %v3833 = vld [vmem:[%s2702 + $0xc1] sm:$0xff]
  %v3834 = vld [vmem:[%s2702 + $0xc9] sm:$0xff]
  %v3835 = vld [vmem:[%s2702 + $0xd1] sm:$0xff]
  %v3836 = vld [vmem:[%s2702 + $0xd9] sm:$0xff]
  %v3837 = vld [vmem:[%s2702 + $0xe1] sm:$0xff]
  %v3838 = vld [vmem:[%s2702 + $0xe9] sm:$0xff]
  %v3839 = vld [vmem:[%s2702 + $0xf1] sm:$0xff]
  %v3840 = vld [vmem:[%s2702 + $0xf9] sm:$0xff]
  %v3841 = vld [vmem:[%s2702 + $0x101] sm:$0xff]
  %v3842 = vld [vmem:[%s2702 + $0x109] sm:$0xff]
  %v3843 = vpack.c.bf16 %v3812, %v3811
  %v3844 = vpack.c.bf16 %v3814, %v3813
  %v3845 = vpack.c.bf16 %v3816, %v3815
  %v3846 = vpack.c.bf16 %v3818, %v3817
  %v3847 = vpack.c.bf16 %v3820, %v3819
  %v3848 = vpack.c.bf16 %v3822, %v3821
  %v3849 = vpack.c.bf16 %v3824, %v3823
  %v3850 = vpack.c.bf16 %v3826, %v3825
  %v3851 = vpack.c.bf16 %v3828, %v3827
  %v3852 = vpack.c.bf16 %v3830, %v3829
  %v3853 = vpack.c.bf16 %v3832, %v3831
  %v3854 = vpack.c.bf16 %v3834, %v3833
  %v3855 = vpack.c.bf16 %v3836, %v3835
  %v3856 = vpack.c.bf16 %v3838, %v3837
  %v3857 = vpack.c.bf16 %v3840, %v3839
  %v3858 = vpack.c.bf16 %v3842, %v3841
  %v3859 = vld [vmem:[%s1177] sm:$0x3]
  %v3861 = vsel %vm115, %v3843, 0
  %v3864 = vsel %vm115, %v3844, 0
  %v3867 = vsel %vm115, %v3845, 0
  %v3870 = vsel %vm115, %v3846, 0
  %v3873 = vsel %vm115, %v3847, 0
  %v3876 = vsel %vm115, %v3848, 0
  %v3879 = vsel %vm115, %v3849, 0
  %v3882 = vsel %vm115, %v3850, 0
  %v3885 = vsel %vm115, %v3851, 0
  %v3888 = vsel %vm115, %v3852, 0
  %v3891 = vsel %vm115, %v3853, 0
  %v3894 = vsel %vm115, %v3854, 0
  %v3897 = vsel %vm115, %v3855, 0
  %v3900 = vsel %vm115, %v3856, 0
  %v3903 = vsel %vm115, %v3857, 0
  %v3906 = vsel %vm115, %v3858, 0
  %v3909 = vsel %vm164, %v3859, 0
  %3911 = vmatprep.subr.bf16.mxu0 0
  %3912 = vmatpush1.bf16.msra.mxu0 %v3909
  %3913 = vmatprep.subr.bf16.mxu0 0
  %3914 = vmatpush1.bf16.msra.mxu0 0
  %3915 = vmatprep.subr.bf16.mxu0 0
  %3916 = vmatpush1.bf16.msra.mxu0 0
  %3917 = vmatprep.subr.bf16.mxu0 0
  %3918 = vmatpush1.bf16.msra.mxu0 0
  %3919 = vmatprep.subr.bf16.mxu0 0
  %3920 = vmatpush1.bf16.msra.mxu0 0
  %3921 = vmatprep.subr.bf16.mxu0 0
  %3922 = vmatpush1.bf16.msra.mxu0 0
  %3923 = vmatprep.subr.bf16.mxu0 0
  %3924 = vmatpush1.bf16.msra.mxu0 0
  %3925 = vmatprep.subr.bf16.mxu0 0
  %3926 = vmatpush1.bf16.msra.mxu0 0
  %3927 = vmatprep.subr.bf16.mxu0 0
  %3928 = vmatpush1.bf16.msra.mxu0 0
  %3929 = vmatprep.subr.bf16.mxu0 0
  %3930 = vmatpush1.bf16.msra.mxu0 0
  %3931 = vmatprep.subr.bf16.mxu0 0
  %3932 = vmatpush1.bf16.msra.mxu0 0
  %3933 = vmatprep.subr.bf16.mxu0 0
  %3934 = vmatpush1.bf16.msra.mxu0 0
  %3935 = vmatprep.subr.bf16.mxu0 0
  %3936 = vmatpush1.bf16.msra.mxu0 0
  %3937 = vmatprep.subr.bf16.mxu0 0
  %3938 = vmatpush1.bf16.msra.mxu0 0
  %3939 = vmatprep.subr.bf16.mxu0 0
  %3940 = vmatpush1.bf16.msra.mxu0 0
  %3941 = vmatprep.subr.bf16.mxu0 0
  %3942 = vmatpush1.bf16.msra.mxu0 0
  %3943 = vmatprep.mubr.bf16.mxu0 0
  %3944 = vmatmul.mubr.bf16.gmra.mrb[0].mxu0 %v3861
  %v3945 = vpop.f32.mrb[0].mxu0
  %v3946 = vadd.f32 0.0, %v3945
  %v3947 = vpop.f32.mrb[0].mxu0
  %v3948 = vpop.f32.mrb[0].mxu0
  %v3949 = vadd.f32 0.0, %v3948
  %v3950 = vpop.f32.mrb[0].mxu0
  %3951 = vmatprep.mubr.bf16.mxu0 0
  %3952 = vmatmul.mubr.bf16.gmra.mrb[0].mxu0 %v3864
  %v3953 = vpop.f32.mrb[0].mxu0
  %v3954 = vadd.f32 0.0, %v3953
  %v3955 = vpop.f32.mrb[0].mxu0
  %v3956 = vpop.f32.mrb[0].mxu0
  %v3957 = vadd.f32 0.0, %v3956
  %v3958 = vpop.f32.mrb[0].mxu0
  %3959 = vmatprep.mubr.bf16.mxu0 0
  %3960 = vmatmul.mubr.bf16.gmra.mrb[0].mxu0 %v3867
  %v3961 = vpop.f32.mrb[0].mxu0
  %v3962 = vadd.f32 0.0, %v3961
  %v3963 = vpop.f32.mrb[0].mxu0
  %v3964 = vpop.f32.mrb[0].mxu0
  %v3965 = vadd.f32 0.0, %v3964
  %v3966 = vpop.f32.mrb[0].mxu0
  %3967 = vmatprep.mubr.bf16.mxu0 0
  %3968 = vmatmul.mubr.bf16.gmra.mrb[0].mxu0 %v3870
  %v3969 = vpop.f32.mrb[0].mxu0
  %v3970 = vadd.f32 0.0, %v3969
  %v3971 = vpop.f32.mrb[0].mxu0
  %v3972 = vpop.f32.mrb[0].mxu0
  %v3973 = vadd.f32 0.0, %v3972
  %v3974 = vpop.f32.mrb[0].mxu0
  %3975 = vmatprep.mubr.bf16.mxu0 0
  %3976 = vmatmul.mubr.bf16.gmra.mrb[0].mxu0 %v3873
  %v3977 = vpop.f32.mrb[0].mxu0
  %v3978 = vadd.f32 0.0, %v3977
  %v3979 = vpop.f32.mrb[0].mxu0
  %v3980 = vpop.f32.mrb[0].mxu0
  %v3981 = vadd.f32 0.0, %v3980
  %v3982 = vpop.f32.mrb[0].mxu0
  %3983 = vmatprep.mubr.bf16.mxu0 0
  %3984 = vmatmul.mubr.bf16.gmra.mrb[0].mxu0 %v3876
  %v3985 = vpop.f32.mrb[0].mxu0
  %v3986 = vadd.f32 0.0, %v3985
  %v3987 = vpop.f32.mrb[0].mxu0
  %v3988 = vpop.f32.mrb[0].mxu0
  %v3989 = vadd.f32 0.0, %v3988
  %v3990 = vpop.f32.mrb[0].mxu0
  %3991 = vmatprep.mubr.bf16.mxu0 0
  %3992 = vmatmul.mubr.bf16.gmra.mrb[0].mxu0 %v3879
  %v3993 = vpop.f32.mrb[0].mxu0
  %v3994 = vadd.f32 0.0, %v3993
  %v3995 = vpop.f32.mrb[0].mxu0
  %v3996 = vpop.f32.mrb[0].mxu0
  %v3997 = vadd.f32 0.0, %v3996
  %v3998 = vpop.f32.mrb[0].mxu0
  %3999 = vmatprep.mubr.bf16.mxu0 0
  %4000 = vmatmul.mubr.bf16.gmra.mrb[0].mxu0 %v3882
  %v4001 = vpop.f32.mrb[0].mxu0
  %v4002 = vadd.f32 0.0, %v4001
  %v4003 = vpop.f32.mrb[0].mxu0
  %v4004 = vpop.f32.mrb[0].mxu0
  %v4005 = vadd.f32 0.0, %v4004
  %v4006 = vpop.f32.mrb[0].mxu0
  %4007 = vmatprep.mubr.bf16.mxu0 0
  %4008 = vmatmul.mubr.bf16.gmra.mrb[0].mxu0 %v3885
  %v4009 = vpop.f32.mrb[0].mxu0
  %v4010 = vadd.f32 0.0, %v4009
  %v4011 = vpop.f32.mrb[0].mxu0
  %v4012 = vpop.f32.mrb[0].mxu0
  %v4013 = vadd.f32 0.0, %v4012
  %v4014 = vpop.f32.mrb[0].mxu0
  %4015 = vmatprep.mubr.bf16.mxu0 0
  %4016 = vmatmul.mubr.bf16.gmra.mrb[0].mxu0 %v3888
  %v4017 = vpop.f32.mrb[0].mxu0
  %v4018 = vadd.f32 0.0, %v4017
  %v4019 = vpop.f32.mrb[0].mxu0
  %v4020 = vpop.f32.mrb[0].mxu0
  %v4021 = vadd.f32 0.0, %v4020
  %v4022 = vpop.f32.mrb[0].mxu0
  %4023 = vmatprep.mubr.bf16.mxu0 0
  %4024 = vmatmul.mubr.bf16.gmra.mrb[0].mxu0 %v3891
  %v4025 = vpop.f32.mrb[0].mxu0
  %v4026 = vadd.f32 0.0, %v4025
  %v4027 = vpop.f32.mrb[0].mxu0
  %v4028 = vpop.f32.mrb[0].mxu0
  %v4029 = vadd.f32 0.0, %v4028
  %v4030 = vpop.f32.mrb[0].mxu0
  %4031 = vmatprep.mubr.bf16.mxu0 0
  %4032 = vmatmul.mubr.bf16.gmra.mrb[0].mxu0 %v3894
  %v4033 = vpop.f32.mrb[0].mxu0
  %v4034 = vadd.f32 0.0, %v4033
  %v4035 = vpop.f32.mrb[0].mxu0
  %v4036 = vpop.f32.mrb[0].mxu0
  %v4037 = vadd.f32 0.0, %v4036
  %v4038 = vpop.f32.mrb[0].mxu0
  %4039 = vmatprep.mubr.bf16.mxu0 0
  %4040 = vmatmul.mubr.bf16.gmra.mrb[0].mxu0 %v3897
  %v4041 = vpop.f32.mrb[0].mxu0
  %v4042 = vadd.f32 0.0, %v4041
  %v4043 = vpop.f32.mrb[0].mxu0
  %v4044 = vpop.f32.mrb[0].mxu0
  %v4045 = vadd.f32 0.0, %v4044
  %v4046 = vpop.f32.mrb[0].mxu0
  %4047 = vmatprep.mubr.bf16.mxu0 0
  %4048 = vmatmul.mubr.bf16.gmra.mrb[0].mxu0 %v3900
  %v4049 = vpop.f32.mrb[0].mxu0
  %v4050 = vadd.f32 0.0, %v4049
  %v4051 = vpop.f32.mrb[0].mxu0
  %v4052 = vpop.f32.mrb[0].mxu0
  %v4053 = vadd.f32 0.0, %v4052
  %v4054 = vpop.f32.mrb[0].mxu0
  %4055 = vmatprep.mubr.bf16.mxu0 0
  %4056 = vmatmul.mubr.bf16.gmra.mrb[0].mxu0 %v3903
  %v4057 = vpop.f32.mrb[0].mxu0
  %v4058 = vadd.f32 0.0, %v4057
  %v4059 = vpop.f32.mrb[0].mxu0
  %v4060 = vpop.f32.mrb[0].mxu0
  %v4061 = vadd.f32 0.0, %v4060
  %v4062 = vpop.f32.mrb[0].mxu0
  %4063 = vmatprep.mubr.bf16.mxu0 0
  %4064 = vmatmul.mubr.bf16.gmra.mrb[0].mxu0 %v3906
  %v4065 = vpop.f32.mrb[0].mxu0
  %v4066 = vadd.f32 0.0, %v4065
  %v4067 = vpop.f32.mrb[0].mxu0
  %v4068 = vpop.f32.mrb[0].mxu0
  %v4069 = vadd.f32 0.0, %v4068
  %v4070 = vpop.f32.mrb[0].mxu0
  %4071 = vdwg.mxu0
  %v4072 = vadd.f32 %v3779, %v3946
  %v4073 = vadd.f32 %v3780, %v3949
  %v4074 = vadd.f32 %v3781, %v3954
  %v4075 = vadd.f32 %v3782, %v3957
  %v4076 = vadd.f32 %v3783, %v3962
  %v4077 = vadd.f32 %v3784, %v3965
  %v4078 = vadd.f32 %v3785, %v3970
  %v4079 = vadd.f32 %v3786, %v3973
  %v4080 = vadd.f32 %v3787, %v3978
  %v4081 = vadd.f32 %v3788, %v3981
  %v4082 = vadd.f32 %v3789, %v3986
  %v4083 = vadd.f32 %v3790, %v3989
  %v4084 = vadd.f32 %v3791, %v3994
  %v4085 = vadd.f32 %v3792, %v3997
  %v4086 = vadd.f32 %v3793, %v4002
  %v4087 = vadd.f32 %v3794, %v4005
  %v4088 = vadd.f32 %v3795, %v4010
  %v4089 = vadd.f32 %v3796, %v4013
  %v4090 = vadd.f32 %v3797, %v4018
  %v4091 = vadd.f32 %v3798, %v4021
  %v4092 = vadd.f32 %v3799, %v4026
  %v4093 = vadd.f32 %v3800, %v4029
  %v4094 = vadd.f32 %v3801, %v4034
  %v4095 = vadd.f32 %v3802, %v4037
  %v4096 = vadd.f32 %v3803, %v4042
  %v4097 = vadd.f32 %v3804, %v4045
  %v4098 = vadd.f32 %v3805, %v4050
  %v4099 = vadd.f32 %v3806, %v4053
  %v4100 = vadd.f32 %v3807, %v4058
  %v4101 = vadd.f32 %v3808, %v4061
  %v4102 = vadd.f32 %v3809, %v4066
  %v4103 = vadd.f32 %v3810, %v4069
  %v4104 = vld [vmem:[%s2702 + $0x12] sm:$0xff]
  %v4105 = vld [vmem:[%s2702 + $0x1a] sm:$0xff]
  %v4106 = vld [vmem:[%s2702 + $0x22] sm:$0xff]
  %v4107 = vld [vmem:[%s2702 + $0x2a] sm:$0xff]
  %v4108 = vld [vmem:[%s2702 + $0x32] sm:$0xff]
  %v4109 = vld [vmem:[%s2702 + $0x3a] sm:$0xff]
  %v4110 = vld [vmem:[%s2702 + $0x42] sm:$0xff]
  %v4111 = vld [vmem:[%s2702 + $0x4a] sm:$0xff]
  %v4112 = vld [vmem:[%s2702 + $0x52] sm:$0xff]
  %v4113 = vld [vmem:[%s2702 + $0x5a] sm:$0xff]
  %v4114 = vld [vmem:[%s2702 + $0x62] sm:$0xff]
  %v4115 = vld [vmem:[%s2702 + $0x6a] sm:$0xff]
  %v4116 = vld [vmem:[%s2702 + $0x72] sm:$0xff]
  %v4117 = vld [vmem:[%s2702 + $0x7a] sm:$0xff]
  %v4118 = vld [vmem:[%s2702 + $0x82] sm:$0xff]
  %v4119 = vld [vmem:[%s2702 + $0x8a] sm:$0xff]
  %v4120 = vld [vmem:[%s2702 + $0x92] sm:$0xff]
  %v4121 = vld [vmem:[%s2702 + $0x9a] sm:$0xff]
  %v4122 = vld [vmem:[%s2702 + $0xa2] sm:$0xff]
  %v4123 = vld [vmem:[%s2702 + $0xaa] sm:$0xff]
  %v4124 = vld [vmem:[%s2702 + $0xb2] sm:$0xff]
  %v4125 = vld [vmem:[%s2702 + $0xba] sm:$0xff]
  %v4126 = vld [vmem:[%s2702 + $0xc2] sm:$0xff]
  %v4127 = vld [vmem:[%s2702 + $0xca] sm:$0xff]
  %v4128 = vld [vmem:[%s2702 + $0xd2] sm:$0xff]
  %v4129 = vld [vmem:[%s2702 + $0xda] sm:$0xff]
  %v4130 = vld [vmem:[%s2702 + $0xe2] sm:$0xff]
  %v4131 = vld [vmem:[%s2702 + $0xea] sm:$0xff]
  %v4132 = vld [vmem:[%s2702 + $0xf2] sm:$0xff]
  %v4133 = vld [vmem:[%s2702 + $0xfa] sm:$0xff]
  %v4134 = vld [vmem:[%s2702 + $0x102] sm:$0xff]
  %v4135 = vld [vmem:[%s2702 + $0x10a] sm:$0xff]
  %v4136 = vpack.c.bf16 %v4105, %v4104
  %v4137 = vpack.c.bf16 %v4107, %v4106
  %v4138 = vpack.c.bf16 %v4109, %v4108
  %v4139 = vpack.c.bf16 %v4111, %v4110
  %v4140 = vpack.c.bf16 %v4113, %v4112
  %v4141 = vpack.c.bf16 %v4115, %v4114
  %v4142 = vpack.c.bf16 %v4117, %v4116
  %v4143 = vpack.c.bf16 %v4119, %v4118
  %v4144 = vpack.c.bf16 %v4121, %v4120
  %v4145 = vpack.c.bf16 %v4123, %v4122
  %v4146 = vpack.c.bf16 %v4125, %v4124
  %v4147 = vpack.c.bf16 %v4127, %v4126
  %v4148 = vpack.c.bf16 %v4129, %v4128
  %v4149 = vpack.c.bf16 %v4131, %v4130
  %v4150 = vpack.c.bf16 %v4133, %v4132
  %v4151 = vpack.c.bf16 %v4135, %v4134
  %v4152 = vld [vmem:[%s1471] sm:$0x3]
  %v4154 = vsel %vm115, %v4136, 0
  %v4157 = vsel %vm115, %v4137, 0
  %v4160 = vsel %vm115, %v4138, 0
  %v4163 = vsel %vm115, %v4139, 0
  %v4166 = vsel %vm115, %v4140, 0
  %v4169 = vsel %vm115, %v4141, 0
  %v4172 = vsel %vm115, %v4142, 0
  %v4175 = vsel %vm115, %v4143, 0
  %v4178 = vsel %vm115, %v4144, 0
  %v4181 = vsel %vm115, %v4145, 0
  %v4184 = vsel %vm115, %v4146, 0
  %v4187 = vsel %vm115, %v4147, 0
  %v4190 = vsel %vm115, %v4148, 0
  %v4193 = vsel %vm115, %v4149, 0
  %v4196 = vsel %vm115, %v4150, 0
  %v4199 = vsel %vm115, %v4151, 0
  %v4202 = vsel %vm164, %v4152, 0
  %4204 = vmatprep.subr.bf16.mxu0 0
  %4205 = vmatpush1.bf16.msra.mxu0 %v4202
  %4206 = vmatprep.subr.bf16.mxu0 0
  %4207 = vmatpush1.bf16.msra.mxu0 0
  %4208 = vmatprep.subr.bf16.mxu0 0
  %4209 = vmatpush1.bf16.msra.mxu0 0
  %4210 = vmatprep.subr.bf16.mxu0 0
  %4211 = vmatpush1.bf16.msra.mxu0 0
  %4212 = vmatprep.subr.bf16.mxu0 0
  %4213 = vmatpush1.bf16.msra.mxu0 0
  %4214 = vmatprep.subr.bf16.mxu0 0
  %4215 = vmatpush1.bf16.msra.mxu0 0
  %4216 = vmatprep.subr.bf16.mxu0 0
  %4217 = vmatpush1.bf16.msra.mxu0 0
  %4218 = vmatprep.subr.bf16.mxu0 0
  %4219 = vmatpush1.bf16.msra.mxu0 0
  %4220 = vmatprep.subr.bf16.mxu0 0
  %4221 = vmatpush1.bf16.msra.mxu0 0
  %4222 = vmatprep.subr.bf16.mxu0 0
  %4223 = vmatpush1.bf16.msra.mxu0 0
  %4224 = vmatprep.subr.bf16.mxu0 0
  %4225 = vmatpush1.bf16.msra.mxu0 0
  %4226 = vmatprep.subr.bf16.mxu0 0
  %4227 = vmatpush1.bf16.msra.mxu0 0
  %4228 = vmatprep.subr.bf16.mxu0 0
  %4229 = vmatpush1.bf16.msra.mxu0 0
  %4230 = vmatprep.subr.bf16.mxu0 0
  %4231 = vmatpush1.bf16.msra.mxu0 0
  %4232 = vmatprep.subr.bf16.mxu0 0
  %4233 = vmatpush1.bf16.msra.mxu0 0
  %4234 = vmatprep.subr.bf16.mxu0 0
  %4235 = vmatpush1.bf16.msra.mxu0 0
  %4236 = vmatprep.mubr.bf16.mxu0 0
  %4237 = vmatmul.mubr.bf16.gmra.mrb[0].mxu0 %v4154
  %v4238 = vpop.f32.mrb[0].mxu0
  %v4239 = vadd.f32 0.0, %v4238
  %v4240 = vpop.f32.mrb[0].mxu0
  %v4241 = vpop.f32.mrb[0].mxu0
  %v4242 = vadd.f32 0.0, %v4241
  %v4243 = vpop.f32.mrb[0].mxu0
  %4244 = vmatprep.mubr.bf16.mxu0 0
  %4245 = vmatmul.mubr.bf16.gmra.mrb[0].mxu0 %v4157
  %v4246 = vpop.f32.mrb[0].mxu0
  %v4247 = vadd.f32 0.0, %v4246
  %v4248 = vpop.f32.mrb[0].mxu0
  %v4249 = vpop.f32.mrb[0].mxu0
  %v4250 = vadd.f32 0.0, %v4249
  %v4251 = vpop.f32.mrb[0].mxu0
  %4252 = vmatprep.mubr.bf16.mxu0 0
  %4253 = vmatmul.mubr.bf16.gmra.mrb[0].mxu0 %v4160
  %v4254 = vpop.f32.mrb[0].mxu0
  %v4255 = vadd.f32 0.0, %v4254
  %v4256 = vpop.f32.mrb[0].mxu0
  %v4257 = vpop.f32.mrb[0].mxu0
  %v4258 = vadd.f32 0.0, %v4257
  %v4259 = vpop.f32.mrb[0].mxu0
  %4260 = vmatprep.mubr.bf16.mxu0 0
  %4261 = vmatmul.mubr.bf16.gmra.mrb[0].mxu0 %v4163
  %v4262 = vpop.f32.mrb[0].mxu0
  %v4263 = vadd.f32 0.0, %v4262
  %v4264 = vpop.f32.mrb[0].mxu0
  %v4265 = vpop.f32.mrb[0].mxu0
  %v4266 = vadd.f32 0.0, %v4265
  %v4267 = vpop.f32.mrb[0].mxu0
  %4268 = vmatprep.mubr.bf16.mxu0 0
  %4269 = vmatmul.mubr.bf16.gmra.mrb[0].mxu0 %v4166
  %v4270 = vpop.f32.mrb[0].mxu0
  %v4271 = vadd.f32 0.0, %v4270
  %v4272 = vpop.f32.mrb[0].mxu0
  %v4273 = vpop.f32.mrb[0].mxu0
  %v4274 = vadd.f32 0.0, %v4273
  %v4275 = vpop.f32.mrb[0].mxu0
  %4276 = vmatprep.mubr.bf16.mxu0 0
  %4277 = vmatmul.mubr.bf16.gmra.mrb[0].mxu0 %v4169
  %v4278 = vpop.f32.mrb[0].mxu0
  %v4279 = vadd.f32 0.0, %v4278
  %v4280 = vpop.f32.mrb[0].mxu0
  %v4281 = vpop.f32.mrb[0].mxu0
  %v4282 = vadd.f32 0.0, %v4281
  %v4283 = vpop.f32.mrb[0].mxu0
  %4284 = vmatprep.mubr.bf16.mxu0 0
  %4285 = vmatmul.mubr.bf16.gmra.mrb[0].mxu0 %v4172
  %v4286 = vpop.f32.mrb[0].mxu0
  %v4287 = vadd.f32 0.0, %v4286
  %v4288 = vpop.f32.mrb[0].mxu0
  %v4289 = vpop.f32.mrb[0].mxu0
  %v4290 = vadd.f32 0.0, %v4289
  %v4291 = vpop.f32.mrb[0].mxu0
  %4292 = vmatprep.mubr.bf16.mxu0 0
  %4293 = vmatmul.mubr.bf16.gmra.mrb[0].mxu0 %v4175
  %v4294 = vpop.f32.mrb[0].mxu0
  %v4295 = vadd.f32 0.0, %v4294
  %v4296 = vpop.f32.mrb[0].mxu0
  %v4297 = vpop.f32.mrb[0].mxu0
  %v4298 = vadd.f32 0.0, %v4297
  %v4299 = vpop.f32.mrb[0].mxu0
  %4300 = vmatprep.mubr.bf16.mxu0 0
  %4301 = vmatmul.mubr.bf16.gmra.mrb[0].mxu0 %v4178
  %v4302 = vpop.f32.mrb[0].mxu0
  %v4303 = vadd.f32 0.0, %v4302
  %v4304 = vpop.f32.mrb[0].mxu0
  %v4305 = vpop.f32.mrb[0].mxu0
  %v4306 = vadd.f32 0.0, %v4305
  %v4307 = vpop.f32.mrb[0].mxu0
  %4308 = vmatprep.mubr.bf16.mxu0 0
  %4309 = vmatmul.mubr.bf16.gmra.mrb[0].mxu0 %v4181
  %v4310 = vpop.f32.mrb[0].mxu0
  %v4311 = vadd.f32 0.0, %v4310
  %v4312 = vpop.f32.mrb[0].mxu0
  %v4313 = vpop.f32.mrb[0].mxu0
  %v4314 = vadd.f32 0.0, %v4313
  %v4315 = vpop.f32.mrb[0].mxu0
  %4316 = vmatprep.mubr.bf16.mxu0 0
  %4317 = vmatmul.mubr.bf16.gmra.mrb[0].mxu0 %v4184
  %v4318 = vpop.f32.mrb[0].mxu0
  %v4319 = vadd.f32 0.0, %v4318
  %v4320 = vpop.f32.mrb[0].mxu0
  %v4321 = vpop.f32.mrb[0].mxu0
  %v4322 = vadd.f32 0.0, %v4321
  %v4323 = vpop.f32.mrb[0].mxu0
  %4324 = vmatprep.mubr.bf16.mxu0 0
  %4325 = vmatmul.mubr.bf16.gmra.mrb[0].mxu0 %v4187
  %v4326 = vpop.f32.mrb[0].mxu0
  %v4327 = vadd.f32 0.0, %v4326
  %v4328 = vpop.f32.mrb[0].mxu0
  %v4329 = vpop.f32.mrb[0].mxu0
  %v4330 = vadd.f32 0.0, %v4329
  %v4331 = vpop.f32.mrb[0].mxu0
  %4332 = vmatprep.mubr.bf16.mxu0 0
  %4333 = vmatmul.mubr.bf16.gmra.mrb[0].mxu0 %v4190
  %v4334 = vpop.f32.mrb[0].mxu0
  %v4335 = vadd.f32 0.0, %v4334
  %v4336 = vpop.f32.mrb[0].mxu0
  %v4337 = vpop.f32.mrb[0].mxu0
  %v4338 = vadd.f32 0.0, %v4337
  %v4339 = vpop.f32.mrb[0].mxu0
  %4340 = vmatprep.mubr.bf16.mxu0 0
  %4341 = vmatmul.mubr.bf16.gmra.mrb[0].mxu0 %v4193
  %v4342 = vpop.f32.mrb[0].mxu0
  %v4343 = vadd.f32 0.0, %v4342
  %v4344 = vpop.f32.mrb[0].mxu0
  %v4345 = vpop.f32.mrb[0].mxu0
  %v4346 = vadd.f32 0.0, %v4345
  %v4347 = vpop.f32.mrb[0].mxu0
  %4348 = vmatprep.mubr.bf16.mxu0 0
  %4349 = vmatmul.mubr.bf16.gmra.mrb[0].mxu0 %v4196
  %v4350 = vpop.f32.mrb[0].mxu0
  %v4351 = vadd.f32 0.0, %v4350
  %v4352 = vpop.f32.mrb[0].mxu0
  %v4353 = vpop.f32.mrb[0].mxu0
  %v4354 = vadd.f32 0.0, %v4353
  %v4355 = vpop.f32.mrb[0].mxu0
  %4356 = vmatprep.mubr.bf16.mxu0 0
  %4357 = vmatmul.mubr.bf16.gmra.mrb[0].mxu0 %v4199
  %v4358 = vpop.f32.mrb[0].mxu0
  %v4359 = vadd.f32 0.0, %v4358
  %v4360 = vpop.f32.mrb[0].mxu0
  %v4361 = vpop.f32.mrb[0].mxu0
  %v4362 = vadd.f32 0.0, %v4361
  %v4363 = vpop.f32.mrb[0].mxu0
  %4364 = vdwg.mxu0
  %v4365 = vadd.f32 %v4072, %v4239
  %v4366 = vadd.f32 %v4073, %v4242
  %v4367 = vadd.f32 %v4074, %v4247
  %v4368 = vadd.f32 %v4075, %v4250
  %v4369 = vadd.f32 %v4076, %v4255
  %v4370 = vadd.f32 %v4077, %v4258
  %v4371 = vadd.f32 %v4078, %v4263
  %v4372 = vadd.f32 %v4079, %v4266
  %v4373 = vadd.f32 %v4080, %v4271
  %v4374 = vadd.f32 %v4081, %v4274
  %v4375 = vadd.f32 %v4082, %v4279
  %v4376 = vadd.f32 %v4083, %v4282
  %v4377 = vadd.f32 %v4084, %v4287
  %v4378 = vadd.f32 %v4085, %v4290
  %v4379 = vadd.f32 %v4086, %v4295
  %v4380 = vadd.f32 %v4087, %v4298
  %v4381 = vadd.f32 %v4088, %v4303
  %v4382 = vadd.f32 %v4089, %v4306
  %v4383 = vadd.f32 %v4090, %v4311
  %v4384 = vadd.f32 %v4091, %v4314
  %v4385 = vadd.f32 %v4092, %v4319
  %v4386 = vadd.f32 %v4093, %v4322
  %v4387 = vadd.f32 %v4094, %v4327
  %v4388 = vadd.f32 %v4095, %v4330
  %v4389 = vadd.f32 %v4096, %v4335
  %v4390 = vadd.f32 %v4097, %v4338
  %v4391 = vadd.f32 %v4098, %v4343
  %v4392 = vadd.f32 %v4099, %v4346
  %v4393 = vadd.f32 %v4100, %v4351
  %v4394 = vadd.f32 %v4101, %v4354
  %v4395 = vadd.f32 %v4102, %v4359
  %v4396 = vadd.f32 %v4103, %v4362
  %v4397 = vld [vmem:[%s2702 + $0x20] sm:$0xff]
  %v4398 = vld [vmem:[%s2702 + $0x28] sm:$0xff]
  %v4399 = vld [vmem:[%s2702 + $0x30] sm:$0xff]
  %v4400 = vld [vmem:[%s2702 + $0x38] sm:$0xff]
  %v4401 = vld [vmem:[%s2702 + $0x40] sm:$0xff]
  %v4402 = vld [vmem:[%s2702 + $0x48] sm:$0xff]
  %v4403 = vld [vmem:[%s2702 + $0x50] sm:$0xff]
  %v4404 = vld [vmem:[%s2702 + $0x58] sm:$0xff]
  %v4405 = vld [vmem:[%s2702 + $0x60] sm:$0xff]
  %v4406 = vld [vmem:[%s2702 + $0x68] sm:$0xff]
  %v4407 = vld [vmem:[%s2702 + $0x70] sm:$0xff]
  %v4408 = vld [vmem:[%s2702 + $0x78] sm:$0xff]
  %v4409 = vld [vmem:[%s2702 + $0x80] sm:$0xff]
  %v4410 = vld [vmem:[%s2702 + $0x88] sm:$0xff]
  %v4411 = vld [vmem:[%s2702 + $0x90] sm:$0xff]
  %v4412 = vld [vmem:[%s2702 + $0x98] sm:$0xff]
  %v4413 = vld [vmem:[%s2702 + $0xa0] sm:$0xff]
  %v4414 = vld [vmem:[%s2702 + $0xa8] sm:$0xff]
  %v4415 = vld [vmem:[%s2702 + $0xb0] sm:$0xff]
  %v4416 = vld [vmem:[%s2702 + $0xb8] sm:$0xff]
  %v4417 = vld [vmem:[%s2702 + $0xc0] sm:$0xff]
  %v4418 = vld [vmem:[%s2702 + $0xc8] sm:$0xff]
  %v4419 = vld [vmem:[%s2702 + $0xd0] sm:$0xff]
  %v4420 = vld [vmem:[%s2702 + $0xd8] sm:$0xff]
  %v4421 = vld [vmem:[%s2702 + $0xe0] sm:$0xff]
  %v4422 = vld [vmem:[%s2702 + $0xe8] sm:$0xff]
  %v4423 = vld [vmem:[%s2702 + $0xf0] sm:$0xff]
  %v4424 = vld [vmem:[%s2702 + $0xf8] sm:$0xff]
  %v4425 = vld [vmem:[%s2702 + $0x100] sm:$0xff]
  %v4426 = vld [vmem:[%s2702 + $0x108] sm:$0xff]
  %v4427 = vld [vmem:[%s2702 + $0x110] sm:$0xff]
  %v4428 = vld [vmem:[%s2702 + $0x118] sm:$0xff]
  %v4429 = vpack.c.bf16 %v4398, %v4397
  %v4430 = vpack.c.bf16 %v4400, %v4399
  %v4431 = vpack.c.bf16 %v4402, %v4401
  %v4432 = vpack.c.bf16 %v4404, %v4403
  %v4433 = vpack.c.bf16 %v4406, %v4405
  %v4434 = vpack.c.bf16 %v4408, %v4407
  %v4435 = vpack.c.bf16 %v4410, %v4409
  %v4436 = vpack.c.bf16 %v4412, %v4411
  %v4437 = vpack.c.bf16 %v4414, %v4413
  %v4438 = vpack.c.bf16 %v4416, %v4415
  %v4439 = vpack.c.bf16 %v4418, %v4417
  %v4440 = vpack.c.bf16 %v4420, %v4419
  %v4441 = vpack.c.bf16 %v4422, %v4421
  %v4442 = vpack.c.bf16 %v4424, %v4423
  %v4443 = vpack.c.bf16 %v4426, %v4425
  %v4444 = vpack.c.bf16 %v4428, %v4427
  %v4445 = vld [vmem:[%s1765] sm:$0x3]
  %v4447 = vsel %vm115, %v4429, 0
  %v4450 = vsel %vm115, %v4430, 0
  %v4453 = vsel %vm115, %v4431, 0
  %v4456 = vsel %vm115, %v4432, 0
  %v4459 = vsel %vm115, %v4433, 0
  %v4462 = vsel %vm115, %v4434, 0
  %v4465 = vsel %vm115, %v4435, 0
  %v4468 = vsel %vm115, %v4436, 0
  %v4471 = vsel %vm115, %v4437, 0
  %v4474 = vsel %vm115, %v4438, 0
  %v4477 = vsel %vm115, %v4439, 0
  %v4480 = vsel %vm115, %v4440, 0
  %v4483 = vsel %vm115, %v4441, 0
  %v4486 = vsel %vm115, %v4442, 0
  %v4489 = vsel %vm115, %v4443, 0
  %v4492 = vsel %vm115, %v4444, 0
  %v4495 = vsel %vm164, %v4445, 0
  %4497 = vmatprep.subr.bf16.mxu0 0
  %4498 = vmatpush1.bf16.msra.mxu0 %v4495
  %4499 = vmatprep.subr.bf16.mxu0 0
  %4500 = vmatpush1.bf16.msra.mxu0 0
  %4501 = vmatprep.subr.bf16.mxu0 0
  %4502 = vmatpush1.bf16.msra.mxu0 0
  %4503 = vmatprep.subr.bf16.mxu0 0
  %4504 = vmatpush1.bf16.msra.mxu0 0
  %4505 = vmatprep.subr.bf16.mxu0 0
  %4506 = vmatpush1.bf16.msra.mxu0 0
  %4507 = vmatprep.subr.bf16.mxu0 0
  %4508 = vmatpush1.bf16.msra.mxu0 0
  %4509 = vmatprep.subr.bf16.mxu0 0
  %4510 = vmatpush1.bf16.msra.mxu0 0
  %4511 = vmatprep.subr.bf16.mxu0 0
  %4512 = vmatpush1.bf16.msra.mxu0 0
  %4513 = vmatprep.subr.bf16.mxu0 0
  %4514 = vmatpush1.bf16.msra.mxu0 0
  %4515 = vmatprep.subr.bf16.mxu0 0
  %4516 = vmatpush1.bf16.msra.mxu0 0
  %4517 = vmatprep.subr.bf16.mxu0 0
  %4518 = vmatpush1.bf16.msra.mxu0 0
  %4519 = vmatprep.subr.bf16.mxu0 0
  %4520 = vmatpush1.bf16.msra.mxu0 0
  %4521 = vmatprep.subr.bf16.mxu0 0
  %4522 = vmatpush1.bf16.msra.mxu0 0
  %4523 = vmatprep.subr.bf16.mxu0 0
  %4524 = vmatpush1.bf16.msra.mxu0 0
  %4525 = vmatprep.subr.bf16.mxu0 0
  %4526 = vmatpush1.bf16.msra.mxu0 0
  %4527 = vmatprep.subr.bf16.mxu0 0
  %4528 = vmatpush1.bf16.msra.mxu0 0
  %4529 = vmatprep.mubr.bf16.mxu0 0
  %4530 = vmatmul.mubr.bf16.gmra.mrb[0].mxu0 %v4447
  %v4531 = vpop.f32.mrb[0].mxu0
  %v4532 = vadd.f32 0.0, %v4531
  %v4533 = vpop.f32.mrb[0].mxu0
  %v4534 = vpop.f32.mrb[0].mxu0
  %v4535 = vadd.f32 0.0, %v4534
  %v4536 = vpop.f32.mrb[0].mxu0
  %4537 = vmatprep.mubr.bf16.mxu0 0
  %4538 = vmatmul.mubr.bf16.gmra.mrb[0].mxu0 %v4450
  %v4539 = vpop.f32.mrb[0].mxu0
  %v4540 = vadd.f32 0.0, %v4539
  %v4541 = vpop.f32.mrb[0].mxu0
  %v4542 = vpop.f32.mrb[0].mxu0
  %v4543 = vadd.f32 0.0, %v4542
  %v4544 = vpop.f32.mrb[0].mxu0
  %4545 = vmatprep.mubr.bf16.mxu0 0
  %4546 = vmatmul.mubr.bf16.gmra.mrb[0].mxu0 %v4453
  %v4547 = vpop.f32.mrb[0].mxu0
  %v4548 = vadd.f32 0.0, %v4547
  %v4549 = vpop.f32.mrb[0].mxu0
  %v4550 = vpop.f32.mrb[0].mxu0
  %v4551 = vadd.f32 0.0, %v4550
  %v4552 = vpop.f32.mrb[0].mxu0
  %4553 = vmatprep.mubr.bf16.mxu0 0
  %4554 = vmatmul.mubr.bf16.gmra.mrb[0].mxu0 %v4456
  %v4555 = vpop.f32.mrb[0].mxu0
  %v4556 = vadd.f32 0.0, %v4555
  %v4557 = vpop.f32.mrb[0].mxu0
  %v4558 = vpop.f32.mrb[0].mxu0
  %v4559 = vadd.f32 0.0, %v4558
  %v4560 = vpop.f32.mrb[0].mxu0
  %4561 = vmatprep.mubr.bf16.mxu0 0
  %4562 = vmatmul.mubr.bf16.gmra.mrb[0].mxu0 %v4459
  %v4563 = vpop.f32.mrb[0].mxu0
  %v4564 = vadd.f32 0.0, %v4563
  %v4565 = vpop.f32.mrb[0].mxu0
  %v4566 = vpop.f32.mrb[0].mxu0
  %v4567 = vadd.f32 0.0, %v4566
  %v4568 = vpop.f32.mrb[0].mxu0
  %4569 = vmatprep.mubr.bf16.mxu0 0
  %4570 = vmatmul.mubr.bf16.gmra.mrb[0].mxu0 %v4462
  %v4571 = vpop.f32.mrb[0].mxu0
  %v4572 = vadd.f32 0.0, %v4571
  %v4573 = vpop.f32.mrb[0].mxu0
  %v4574 = vpop.f32.mrb[0].mxu0
  %v4575 = vadd.f32 0.0, %v4574
  %v4576 = vpop.f32.mrb[0].mxu0
  %4577 = vmatprep.mubr.bf16.mxu0 0
  %4578 = vmatmul.mubr.bf16.gmra.mrb[0].mxu0 %v4465
  %v4579 = vpop.f32.mrb[0].mxu0
  %v4580 = vadd.f32 0.0, %v4579
  %v4581 = vpop.f32.mrb[0].mxu0
  %v4582 = vpop.f32.mrb[0].mxu0
  %v4583 = vadd.f32 0.0, %v4582
  %v4584 = vpop.f32.mrb[0].mxu0
  %4585 = vmatprep.mubr.bf16.mxu0 0
  %4586 = vmatmul.mubr.bf16.gmra.mrb[0].mxu0 %v4468
  %v4587 = vpop.f32.mrb[0].mxu0
  %v4588 = vadd.f32 0.0, %v4587
  %v4589 = vpop.f32.mrb[0].mxu0
  %v4590 = vpop.f32.mrb[0].mxu0
  %v4591 = vadd.f32 0.0, %v4590
  %v4592 = vpop.f32.mrb[0].mxu0
  %4593 = vmatprep.mubr.bf16.mxu0 0
  %4594 = vmatmul.mubr.bf16.gmra.mrb[0].mxu0 %v4471
  %v4595 = vpop.f32.mrb[0].mxu0
  %v4596 = vadd.f32 0.0, %v4595
  %v4597 = vpop.f32.mrb[0].mxu0
  %v4598 = vpop.f32.mrb[0].mxu0
  %v4599 = vadd.f32 0.0, %v4598
  %v4600 = vpop.f32.mrb[0].mxu0
  %4601 = vmatprep.mubr.bf16.mxu0 0
  %4602 = vmatmul.mubr.bf16.gmra.mrb[0].mxu0 %v4474
  %v4603 = vpop.f32.mrb[0].mxu0
  %v4604 = vadd.f32 0.0, %v4603
  %v4605 = vpop.f32.mrb[0].mxu0
  %v4606 = vpop.f32.mrb[0].mxu0
  %v4607 = vadd.f32 0.0, %v4606
  %v4608 = vpop.f32.mrb[0].mxu0
  %4609 = vmatprep.mubr.bf16.mxu0 0
  %4610 = vmatmul.mubr.bf16.gmra.mrb[0].mxu0 %v4477
  %v4611 = vpop.f32.mrb[0].mxu0
  %v4612 = vadd.f32 0.0, %v4611
  %v4613 = vpop.f32.mrb[0].mxu0
  %v4614 = vpop.f32.mrb[0].mxu0
  %v4615 = vadd.f32 0.0, %v4614
  %v4616 = vpop.f32.mrb[0].mxu0
  %4617 = vmatprep.mubr.bf16.mxu0 0
  %4618 = vmatmul.mubr.bf16.gmra.mrb[0].mxu0 %v4480
  %v4619 = vpop.f32.mrb[0].mxu0
  %v4620 = vadd.f32 0.0, %v4619
  %v4621 = vpop.f32.mrb[0].mxu0
  %v4622 = vpop.f32.mrb[0].mxu0
  %v4623 = vadd.f32 0.0, %v4622
  %v4624 = vpop.f32.mrb[0].mxu0
  %4625 = vmatprep.mubr.bf16.mxu0 0
  %4626 = vmatmul.mubr.bf16.gmra.mrb[0].mxu0 %v4483
  %v4627 = vpop.f32.mrb[0].mxu0
  %v4628 = vadd.f32 0.0, %v4627
  %v4629 = vpop.f32.mrb[0].mxu0
  %v4630 = vpop.f32.mrb[0].mxu0
  %v4631 = vadd.f32 0.0, %v4630
  %v4632 = vpop.f32.mrb[0].mxu0
  %4633 = vmatprep.mubr.bf16.mxu0 0
  %4634 = vmatmul.mubr.bf16.gmra.mrb[0].mxu0 %v4486
  %v4635 = vpop.f32.mrb[0].mxu0
  %v4636 = vadd.f32 0.0, %v4635
  %v4637 = vpop.f32.mrb[0].mxu0
  %v4638 = vpop.f32.mrb[0].mxu0
  %v4639 = vadd.f32 0.0, %v4638
  %v4640 = vpop.f32.mrb[0].mxu0
  %4641 = vmatprep.mubr.bf16.mxu0 0
  %4642 = vmatmul.mubr.bf16.gmra.mrb[0].mxu0 %v4489
  %v4643 = vpop.f32.mrb[0].mxu0
  %v4644 = vadd.f32 0.0, %v4643
  %v4645 = vpop.f32.mrb[0].mxu0
  %v4646 = vpop.f32.mrb[0].mxu0
  %v4647 = vadd.f32 0.0, %v4646
  %v4648 = vpop.f32.mrb[0].mxu0
  %4649 = vmatprep.mubr.bf16.mxu0 0
  %4650 = vmatmul.mubr.bf16.gmra.mrb[0].mxu0 %v4492
  %v4651 = vpop.f32.mrb[0].mxu0
  %v4652 = vadd.f32 0.0, %v4651
  %v4653 = vpop.f32.mrb[0].mxu0
  %v4654 = vpop.f32.mrb[0].mxu0
  %v4655 = vadd.f32 0.0, %v4654
  %v4656 = vpop.f32.mrb[0].mxu0
  %4657 = vdwg.mxu0
  %v4658 = vadd.f32 %v4365, %v4532
  %v4659 = vadd.f32 %v4366, %v4535
  %v4660 = vadd.f32 %v4367, %v4540
  %v4661 = vadd.f32 %v4368, %v4543
  %v4662 = vadd.f32 %v4369, %v4548
  %v4663 = vadd.f32 %v4370, %v4551
  %v4664 = vadd.f32 %v4371, %v4556
  %v4665 = vadd.f32 %v4372, %v4559
  %v4666 = vadd.f32 %v4373, %v4564
  %v4667 = vadd.f32 %v4374, %v4567
  %v4668 = vadd.f32 %v4375, %v4572
  %v4669 = vadd.f32 %v4376, %v4575
  %v4670 = vadd.f32 %v4377, %v4580
  %v4671 = vadd.f32 %v4378, %v4583
  %v4672 = vadd.f32 %v4379, %v4588
  %v4673 = vadd.f32 %v4380, %v4591
  %v4674 = vadd.f32 %v4381, %v4596
  %v4675 = vadd.f32 %v4382, %v4599
  %v4676 = vadd.f32 %v4383, %v4604
  %v4677 = vadd.f32 %v4384, %v4607
  %v4678 = vadd.f32 %v4385, %v4612
  %v4679 = vadd.f32 %v4386, %v4615
  %v4680 = vadd.f32 %v4387, %v4620
  %v4681 = vadd.f32 %v4388, %v4623
  %v4682 = vadd.f32 %v4389, %v4628
  %v4683 = vadd.f32 %v4390, %v4631
  %v4684 = vadd.f32 %v4391, %v4636
  %v4685 = vadd.f32 %v4392, %v4639
  %v4686 = vadd.f32 %v4393, %v4644
  %v4687 = vadd.f32 %v4394, %v4647
  %v4688 = vadd.f32 %v4395, %v4652
  %v4689 = vadd.f32 %v4396, %v4655
  %v4690 = vld [vmem:[%s2702 + $0x21] sm:$0xff]
  %v4691 = vld [vmem:[%s2702 + $0x29] sm:$0xff]
  %v4692 = vld [vmem:[%s2702 + $0x31] sm:$0xff]
  %v4693 = vld [vmem:[%s2702 + $0x39] sm:$0xff]
  %v4694 = vld [vmem:[%s2702 + $0x41] sm:$0xff]
  %v4695 = vld [vmem:[%s2702 + $0x49] sm:$0xff]
  %v4696 = vld [vmem:[%s2702 + $0x51] sm:$0xff]
  %v4697 = vld [vmem:[%s2702 + $0x59] sm:$0xff]
  %v4698 = vld [vmem:[%s2702 + $0x61] sm:$0xff]
  %v4699 = vld [vmem:[%s2702 + $0x69] sm:$0xff]
  %v4700 = vld [vmem:[%s2702 + $0x71] sm:$0xff]
  %v4701 = vld [vmem:[%s2702 + $0x79] sm:$0xff]
  %v4702 = vld [vmem:[%s2702 + $0x81] sm:$0xff]
  %v4703 = vld [vmem:[%s2702 + $0x89] sm:$0xff]
  %v4704 = vld [vmem:[%s2702 + $0x91] sm:$0xff]
  %v4705 = vld [vmem:[%s2702 + $0x99] sm:$0xff]
  %v4706 = vld [vmem:[%s2702 + $0xa1] sm:$0xff]
  %v4707 = vld [vmem:[%s2702 + $0xa9] sm:$0xff]
  %v4708 = vld [vmem:[%s2702 + $0xb1] sm:$0xff]
  %v4709 = vld [vmem:[%s2702 + $0xb9] sm:$0xff]
  %v4710 = vld [vmem:[%s2702 + $0xc1] sm:$0xff]
  %v4711 = vld [vmem:[%s2702 + $0xc9] sm:$0xff]
  %v4712 = vld [vmem:[%s2702 + $0xd1] sm:$0xff]
  %v4713 = vld [vmem:[%s2702 + $0xd9] sm:$0xff]
  %v4714 = vld [vmem:[%s2702 + $0xe1] sm:$0xff]
  %v4715 = vld [vmem:[%s2702 + $0xe9] sm:$0xff]
  %v4716 = vld [vmem:[%s2702 + $0xf1] sm:$0xff]
  %v4717 = vld [vmem:[%s2702 + $0xf9] sm:$0xff]
  %v4718 = vld [vmem:[%s2702 + $0x101] sm:$0xff]
  %v4719 = vld [vmem:[%s2702 + $0x109] sm:$0xff]
  %v4720 = vld [vmem:[%s2702 + $0x111] sm:$0xff]
  %v4721 = vld [vmem:[%s2702 + $0x119] sm:$0xff]
  %v4722 = vpack.c.bf16 %v4691, %v4690
  %v4723 = vpack.c.bf16 %v4693, %v4692
  %v4724 = vpack.c.bf16 %v4695, %v4694
  %v4725 = vpack.c.bf16 %v4697, %v4696
  %v4726 = vpack.c.bf16 %v4699, %v4698
  %v4727 = vpack.c.bf16 %v4701, %v4700
  %v4728 = vpack.c.bf16 %v4703, %v4702
  %v4729 = vpack.c.bf16 %v4705, %v4704
  %v4730 = vpack.c.bf16 %v4707, %v4706
  %v4731 = vpack.c.bf16 %v4709, %v4708
  %v4732 = vpack.c.bf16 %v4711, %v4710
  %v4733 = vpack.c.bf16 %v4713, %v4712
  %v4734 = vpack.c.bf16 %v4715, %v4714
  %v4735 = vpack.c.bf16 %v4717, %v4716
  %v4736 = vpack.c.bf16 %v4719, %v4718
  %v4737 = vpack.c.bf16 %v4721, %v4720
  %v4738 = vld [vmem:[%s2059] sm:$0x3]
  %v4740 = vsel %vm115, %v4722, 0
  %v4743 = vsel %vm115, %v4723, 0
  %v4746 = vsel %vm115, %v4724, 0
  %v4749 = vsel %vm115, %v4725, 0
  %v4752 = vsel %vm115, %v4726, 0
  %v4755 = vsel %vm115, %v4727, 0
  %v4758 = vsel %vm115, %v4728, 0
  %v4761 = vsel %vm115, %v4729, 0
  %v4764 = vsel %vm115, %v4730, 0
  %v4767 = vsel %vm115, %v4731, 0
  %v4770 = vsel %vm115, %v4732, 0
  %v4773 = vsel %vm115, %v4733, 0
  %v4776 = vsel %vm115, %v4734, 0
  %v4779 = vsel %vm115, %v4735, 0
  %v4782 = vsel %vm115, %v4736, 0
  %v4785 = vsel %vm115, %v4737, 0
  %v4788 = vsel %vm164, %v4738, 0
  %4790 = vmatprep.subr.bf16.mxu0 0
  %4791 = vmatpush1.bf16.msra.mxu0 %v4788
  %4792 = vmatprep.subr.bf16.mxu0 0
  %4793 = vmatpush1.bf16.msra.mxu0 0
  %4794 = vmatprep.subr.bf16.mxu0 0
  %4795 = vmatpush1.bf16.msra.mxu0 0
  %4796 = vmatprep.subr.bf16.mxu0 0
  %4797 = vmatpush1.bf16.msra.mxu0 0
  %4798 = vmatprep.subr.bf16.mxu0 0
  %4799 = vmatpush1.bf16.msra.mxu0 0
  %4800 = vmatprep.subr.bf16.mxu0 0
  %4801 = vmatpush1.bf16.msra.mxu0 0
  %4802 = vmatprep.subr.bf16.mxu0 0
  %4803 = vmatpush1.bf16.msra.mxu0 0
  %4804 = vmatprep.subr.bf16.mxu0 0
  %4805 = vmatpush1.bf16.msra.mxu0 0
  %4806 = vmatprep.subr.bf16.mxu0 0
  %4807 = vmatpush1.bf16.msra.mxu0 0
  %4808 = vmatprep.subr.bf16.mxu0 0
  %4809 = vmatpush1.bf16.msra.mxu0 0
  %4810 = vmatprep.subr.bf16.mxu0 0
  %4811 = vmatpush1.bf16.msra.mxu0 0
  %4812 = vmatprep.subr.bf16.mxu0 0
  %4813 = vmatpush1.bf16.msra.mxu0 0
  %4814 = vmatprep.subr.bf16.mxu0 0
  %4815 = vmatpush1.bf16.msra.mxu0 0
  %4816 = vmatprep.subr.bf16.mxu0 0
  %4817 = vmatpush1.bf16.msra.mxu0 0
  %4818 = vmatprep.subr.bf16.mxu0 0
  %4819 = vmatpush1.bf16.msra.mxu0 0
  %4820 = vmatprep.subr.bf16.mxu0 0
  %4821 = vmatpush1.bf16.msra.mxu0 0
  %4822 = vmatprep.mubr.bf16.mxu0 0
  %4823 = vmatmul.mubr.bf16.gmra.mrb[0].mxu0 %v4740
  %v4824 = vpop.f32.mrb[0].mxu0
  %v4825 = vadd.f32 0.0, %v4824
  %v4826 = vpop.f32.mrb[0].mxu0
  %v4827 = vpop.f32.mrb[0].mxu0
  %v4828 = vadd.f32 0.0, %v4827
  %v4829 = vpop.f32.mrb[0].mxu0
  %4830 = vmatprep.mubr.bf16.mxu0 0
  %4831 = vmatmul.mubr.bf16.gmra.mrb[0].mxu0 %v4743
  %v4832 = vpop.f32.mrb[0].mxu0
  %v4833 = vadd.f32 0.0, %v4832
  %v4834 = vpop.f32.mrb[0].mxu0
  %v4835 = vpop.f32.mrb[0].mxu0
  %v4836 = vadd.f32 0.0, %v4835
  %v4837 = vpop.f32.mrb[0].mxu0
  %4838 = vmatprep.mubr.bf16.mxu0 0
  %4839 = vmatmul.mubr.bf16.gmra.mrb[0].mxu0 %v4746
  %v4840 = vpop.f32.mrb[0].mxu0
  %v4841 = vadd.f32 0.0, %v4840
  %v4842 = vpop.f32.mrb[0].mxu0
  %v4843 = vpop.f32.mrb[0].mxu0
  %v4844 = vadd.f32 0.0, %v4843
  %v4845 = vpop.f32.mrb[0].mxu0
  %4846 = vmatprep.mubr.bf16.mxu0 0
  %4847 = vmatmul.mubr.bf16.gmra.mrb[0].mxu0 %v4749
  %v4848 = vpop.f32.mrb[0].mxu0
  %v4849 = vadd.f32 0.0, %v4848
  %v4850 = vpop.f32.mrb[0].mxu0
  %v4851 = vpop.f32.mrb[0].mxu0
  %v4852 = vadd.f32 0.0, %v4851
  %v4853 = vpop.f32.mrb[0].mxu0
  %4854 = vmatprep.mubr.bf16.mxu0 0
  %4855 = vmatmul.mubr.bf16.gmra.mrb[0].mxu0 %v4752
  %v4856 = vpop.f32.mrb[0].mxu0
  %v4857 = vadd.f32 0.0, %v4856
  %v4858 = vpop.f32.mrb[0].mxu0
  %v4859 = vpop.f32.mrb[0].mxu0
  %v4860 = vadd.f32 0.0, %v4859
  %v4861 = vpop.f32.mrb[0].mxu0
  %4862 = vmatprep.mubr.bf16.mxu0 0
  %4863 = vmatmul.mubr.bf16.gmra.mrb[0].mxu0 %v4755
  %v4864 = vpop.f32.mrb[0].mxu0
  %v4865 = vadd.f32 0.0, %v4864
  %v4866 = vpop.f32.mrb[0].mxu0
  %v4867 = vpop.f32.mrb[0].mxu0
  %v4868 = vadd.f32 0.0, %v4867
  %v4869 = vpop.f32.mrb[0].mxu0
  %4870 = vmatprep.mubr.bf16.mxu0 0
  %4871 = vmatmul.mubr.bf16.gmra.mrb[0].mxu0 %v4758
  %v4872 = vpop.f32.mrb[0].mxu0
  %v4873 = vadd.f32 0.0, %v4872
  %v4874 = vpop.f32.mrb[0].mxu0
  %v4875 = vpop.f32.mrb[0].mxu0
  %v4876 = vadd.f32 0.0, %v4875
  %v4877 = vpop.f32.mrb[0].mxu0
  %4878 = vmatprep.mubr.bf16.mxu0 0
  %4879 = vmatmul.mubr.bf16.gmra.mrb[0].mxu0 %v4761
  %v4880 = vpop.f32.mrb[0].mxu0
  %v4881 = vadd.f32 0.0, %v4880
  %v4882 = vpop.f32.mrb[0].mxu0
  %v4883 = vpop.f32.mrb[0].mxu0
  %v4884 = vadd.f32 0.0, %v4883
  %v4885 = vpop.f32.mrb[0].mxu0
  %4886 = vmatprep.mubr.bf16.mxu0 0
  %4887 = vmatmul.mubr.bf16.gmra.mrb[0].mxu0 %v4764
  %v4888 = vpop.f32.mrb[0].mxu0
  %v4889 = vadd.f32 0.0, %v4888
  %v4890 = vpop.f32.mrb[0].mxu0
  %v4891 = vpop.f32.mrb[0].mxu0
  %v4892 = vadd.f32 0.0, %v4891
  %v4893 = vpop.f32.mrb[0].mxu0
  %4894 = vmatprep.mubr.bf16.mxu0 0
  %4895 = vmatmul.mubr.bf16.gmra.mrb[0].mxu0 %v4767
  %v4896 = vpop.f32.mrb[0].mxu0
  %v4897 = vadd.f32 0.0, %v4896
  %v4898 = vpop.f32.mrb[0].mxu0
  %v4899 = vpop.f32.mrb[0].mxu0
  %v4900 = vadd.f32 0.0, %v4899
  %v4901 = vpop.f32.mrb[0].mxu0
  %4902 = vmatprep.mubr.bf16.mxu0 0
  %4903 = vmatmul.mubr.bf16.gmra.mrb[0].mxu0 %v4770
  %v4904 = vpop.f32.mrb[0].mxu0
  %v4905 = vadd.f32 0.0, %v4904
  %v4906 = vpop.f32.mrb[0].mxu0
  %v4907 = vpop.f32.mrb[0].mxu0
  %v4908 = vadd.f32 0.0, %v4907
  %v4909 = vpop.f32.mrb[0].mxu0
  %4910 = vmatprep.mubr.bf16.mxu0 0
  %4911 = vmatmul.mubr.bf16.gmra.mrb[0].mxu0 %v4773
  %v4912 = vpop.f32.mrb[0].mxu0
  %v4913 = vadd.f32 0.0, %v4912
  %v4914 = vpop.f32.mrb[0].mxu0
  %v4915 = vpop.f32.mrb[0].mxu0
  %v4916 = vadd.f32 0.0, %v4915
  %v4917 = vpop.f32.mrb[0].mxu0
  %4918 = vmatprep.mubr.bf16.mxu0 0
  %4919 = vmatmul.mubr.bf16.gmra.mrb[0].mxu0 %v4776
  %v4920 = vpop.f32.mrb[0].mxu0
  %v4921 = vadd.f32 0.0, %v4920
  %v4922 = vpop.f32.mrb[0].mxu0
  %v4923 = vpop.f32.mrb[0].mxu0
  %v4924 = vadd.f32 0.0, %v4923
  %v4925 = vpop.f32.mrb[0].mxu0
  %4926 = vmatprep.mubr.bf16.mxu0 0
  %4927 = vmatmul.mubr.bf16.gmra.mrb[0].mxu0 %v4779
  %v4928 = vpop.f32.mrb[0].mxu0
  %v4929 = vadd.f32 0.0, %v4928
  %v4930 = vpop.f32.mrb[0].mxu0
  %v4931 = vpop.f32.mrb[0].mxu0
  %v4932 = vadd.f32 0.0, %v4931
  %v4933 = vpop.f32.mrb[0].mxu0
  %4934 = vmatprep.mubr.bf16.mxu0 0
  %4935 = vmatmul.mubr.bf16.gmra.mrb[0].mxu0 %v4782
  %v4936 = vpop.f32.mrb[0].mxu0
  %v4937 = vadd.f32 0.0, %v4936
  %v4938 = vpop.f32.mrb[0].mxu0
  %v4939 = vpop.f32.mrb[0].mxu0
  %v4940 = vadd.f32 0.0, %v4939
  %v4941 = vpop.f32.mrb[0].mxu0
  %4942 = vmatprep.mubr.bf16.mxu0 0
  %4943 = vmatmul.mubr.bf16.gmra.mrb[0].mxu0 %v4785
  %v4944 = vpop.f32.mrb[0].mxu0
  %v4945 = vadd.f32 0.0, %v4944
  %v4946 = vpop.f32.mrb[0].mxu0
  %v4947 = vpop.f32.mrb[0].mxu0
  %v4948 = vadd.f32 0.0, %v4947
  %v4949 = vpop.f32.mrb[0].mxu0
  %4950 = vdwg.mxu0
  %v4951 = vadd.f32 %v4658, %v4825
  %v4952 = vadd.f32 %v4659, %v4828
  %v4953 = vadd.f32 %v4660, %v4833
  %v4954 = vadd.f32 %v4661, %v4836
  %v4955 = vadd.f32 %v4662, %v4841
  %v4956 = vadd.f32 %v4663, %v4844
  %v4957 = vadd.f32 %v4664, %v4849
  %v4958 = vadd.f32 %v4665, %v4852
  %v4959 = vadd.f32 %v4666, %v4857
  %v4960 = vadd.f32 %v4667, %v4860
  %v4961 = vadd.f32 %v4668, %v4865
  %v4962 = vadd.f32 %v4669, %v4868
  %v4963 = vadd.f32 %v4670, %v4873
  %v4964 = vadd.f32 %v4671, %v4876
  %v4965 = vadd.f32 %v4672, %v4881
  %v4966 = vadd.f32 %v4673, %v4884
  %v4967 = vadd.f32 %v4674, %v4889
  %v4968 = vadd.f32 %v4675, %v4892
  %v4969 = vadd.f32 %v4676, %v4897
  %v4970 = vadd.f32 %v4677, %v4900
  %v4971 = vadd.f32 %v4678, %v4905
  %v4972 = vadd.f32 %v4679, %v4908
  %v4973 = vadd.f32 %v4680, %v4913
  %v4974 = vadd.f32 %v4681, %v4916
  %v4975 = vadd.f32 %v4682, %v4921
  %v4976 = vadd.f32 %v4683, %v4924
  %v4977 = vadd.f32 %v4684, %v4929
  %v4978 = vadd.f32 %v4685, %v4932
  %v4979 = vadd.f32 %v4686, %v4937
  %v4980 = vadd.f32 %v4687, %v4940
  %v4981 = vadd.f32 %v4688, %v4945
  %v4982 = vadd.f32 %v4689, %v4948
  %v4983 = vld [vmem:[%s2702 + $0x22] sm:$0xff]
  %v4984 = vld [vmem:[%s2702 + $0x2a] sm:$0xff]
  %v4985 = vld [vmem:[%s2702 + $0x32] sm:$0xff]
  %v4986 = vld [vmem:[%s2702 + $0x3a] sm:$0xff]
  %v4987 = vld [vmem:[%s2702 + $0x42] sm:$0xff]
  %v4988 = vld [vmem:[%s2702 + $0x4a] sm:$0xff]
  %v4989 = vld [vmem:[%s2702 + $0x52] sm:$0xff]
  %v4990 = vld [vmem:[%s2702 + $0x5a] sm:$0xff]
  %v4991 = vld [vmem:[%s2702 + $0x62] sm:$0xff]
  %v4992 = vld [vmem:[%s2702 + $0x6a] sm:$0xff]
  %v4993 = vld [vmem:[%s2702 + $0x72] sm:$0xff]
  %v4994 = vld [vmem:[%s2702 + $0x7a] sm:$0xff]
  %v4995 = vld [vmem:[%s2702 + $0x82] sm:$0xff]
  %v4996 = vld [vmem:[%s2702 + $0x8a] sm:$0xff]
  %v4997 = vld [vmem:[%s2702 + $0x92] sm:$0xff]
  %v4998 = vld [vmem:[%s2702 + $0x9a] sm:$0xff]
  %v4999 = vld [vmem:[%s2702 + $0xa2] sm:$0xff]
  %v5000 = vld [vmem:[%s2702 + $0xaa] sm:$0xff]
  %v5001 = vld [vmem:[%s2702 + $0xb2] sm:$0xff]
  %v5002 = vld [vmem:[%s2702 + $0xba] sm:$0xff]
  %v5003 = vld [vmem:[%s2702 + $0xc2] sm:$0xff]
  %v5004 = vld [vmem:[%s2702 + $0xca] sm:$0xff]
  %v5005 = vld [vmem:[%s2702 + $0xd2] sm:$0xff]
  %v5006 = vld [vmem:[%s2702 + $0xda] sm:$0xff]
  %v5007 = vld [vmem:[%s2702 + $0xe2] sm:$0xff]
  %v5008 = vld [vmem:[%s2702 + $0xea] sm:$0xff]
  %v5009 = vld [vmem:[%s2702 + $0xf2] sm:$0xff]
  %v5010 = vld [vmem:[%s2702 + $0xfa] sm:$0xff]
  %v5011 = vld [vmem:[%s2702 + $0x102] sm:$0xff]
  %v5012 = vld [vmem:[%s2702 + $0x10a] sm:$0xff]
  %v5013 = vld [vmem:[%s2702 + $0x112] sm:$0xff]
  %v5014 = vld [vmem:[%s2702 + $0x11a] sm:$0xff]
  %v5015 = vpack.c.bf16 %v4984, %v4983
  %v5016 = vpack.c.bf16 %v4986, %v4985
  %v5017 = vpack.c.bf16 %v4988, %v4987
  %v5018 = vpack.c.bf16 %v4990, %v4989
  %v5019 = vpack.c.bf16 %v4992, %v4991
  %v5020 = vpack.c.bf16 %v4994, %v4993
  %v5021 = vpack.c.bf16 %v4996, %v4995
  %v5022 = vpack.c.bf16 %v4998, %v4997
  %v5023 = vpack.c.bf16 %v5000, %v4999
  %v5024 = vpack.c.bf16 %v5002, %v5001
  %v5025 = vpack.c.bf16 %v5004, %v5003
  %v5026 = vpack.c.bf16 %v5006, %v5005
  %v5027 = vpack.c.bf16 %v5008, %v5007
  %v5028 = vpack.c.bf16 %v5010, %v5009
  %v5029 = vpack.c.bf16 %v5012, %v5011
  %v5030 = vpack.c.bf16 %v5014, %v5013
  %v5031 = vld [vmem:[%s2353] sm:$0x3]
  %v5033 = vsel %vm115, %v5015, 0
  %v5036 = vsel %vm115, %v5016, 0
  %v5039 = vsel %vm115, %v5017, 0
  %v5042 = vsel %vm115, %v5018, 0
  %v5045 = vsel %vm115, %v5019, 0
  %v5048 = vsel %vm115, %v5020, 0
  %v5051 = vsel %vm115, %v5021, 0
  %v5054 = vsel %vm115, %v5022, 0
  %v5057 = vsel %vm115, %v5023, 0
  %v5060 = vsel %vm115, %v5024, 0
  %v5063 = vsel %vm115, %v5025, 0
  %v5066 = vsel %vm115, %v5026, 0
  %v5069 = vsel %vm115, %v5027, 0
  %v5072 = vsel %vm115, %v5028, 0
  %v5075 = vsel %vm115, %v5029, 0
  %v5078 = vsel %vm115, %v5030, 0
  %v5081 = vsel %vm164, %v5031, 0
  %5083 = vmatprep.subr.bf16.mxu0 0
  %5084 = vmatpush1.bf16.msra.mxu0 %v5081
  %5085 = vmatprep.subr.bf16.mxu0 0
  %5086 = vmatpush1.bf16.msra.mxu0 0
  %5087 = vmatprep.subr.bf16.mxu0 0
  %5088 = vmatpush1.bf16.msra.mxu0 0
  %5089 = vmatprep.subr.bf16.mxu0 0
  %5090 = vmatpush1.bf16.msra.mxu0 0
  %5091 = vmatprep.subr.bf16.mxu0 0
  %5092 = vmatpush1.bf16.msra.mxu0 0
  %5093 = vmatprep.subr.bf16.mxu0 0
  %5094 = vmatpush1.bf16.msra.mxu0 0
  %5095 = vmatprep.subr.bf16.mxu0 0
  %5096 = vmatpush1.bf16.msra.mxu0 0
  %5097 = vmatprep.subr.bf16.mxu0 0
  %5098 = vmatpush1.bf16.msra.mxu0 0
  %5099 = vmatprep.subr.bf16.mxu0 0
  %5100 = vmatpush1.bf16.msra.mxu0 0
  %5101 = vmatprep.subr.bf16.mxu0 0
  %5102 = vmatpush1.bf16.msra.mxu0 0
  %5103 = vmatprep.subr.bf16.mxu0 0
  %5104 = vmatpush1.bf16.msra.mxu0 0
  %5105 = vmatprep.subr.bf16.mxu0 0
  %5106 = vmatpush1.bf16.msra.mxu0 0
  %5107 = vmatprep.subr.bf16.mxu0 0
  %5108 = vmatpush1.bf16.msra.mxu0 0
  %5109 = vmatprep.subr.bf16.mxu0 0
  %5110 = vmatpush1.bf16.msra.mxu0 0
  %5111 = vmatprep.subr.bf16.mxu0 0
  %5112 = vmatpush1.bf16.msra.mxu0 0
  %5113 = vmatprep.subr.bf16.mxu0 0
  %5114 = vmatpush1.bf16.msra.mxu0 0
  %5115 = vmatprep.mubr.bf16.mxu0 0
  %5116 = vmatmul.mubr.bf16.gmra.mrb[0].mxu0 %v5033
  %v5117 = vpop.f32.mrb[0].mxu0
  %v5118 = vadd.f32 0.0, %v5117
  %v5119 = vpop.f32.mrb[0].mxu0
  %v5120 = vpop.f32.mrb[0].mxu0
  %v5121 = vadd.f32 0.0, %v5120
  %v5122 = vpop.f32.mrb[0].mxu0
  %5123 = vmatprep.mubr.bf16.mxu0 0
  %5124 = vmatmul.mubr.bf16.gmra.mrb[0].mxu0 %v5036
  %v5125 = vpop.f32.mrb[0].mxu0
  %v5126 = vadd.f32 0.0, %v5125
  %v5127 = vpop.f32.mrb[0].mxu0
  %v5128 = vpop.f32.mrb[0].mxu0
  %v5129 = vadd.f32 0.0, %v5128
  %v5130 = vpop.f32.mrb[0].mxu0
  %5131 = vmatprep.mubr.bf16.mxu0 0
  %5132 = vmatmul.mubr.bf16.gmra.mrb[0].mxu0 %v5039
  %v5133 = vpop.f32.mrb[0].mxu0
  %v5134 = vadd.f32 0.0, %v5133
  %v5135 = vpop.f32.mrb[0].mxu0
  %v5136 = vpop.f32.mrb[0].mxu0
  %v5137 = vadd.f32 0.0, %v5136
  %v5138 = vpop.f32.mrb[0].mxu0
  %5139 = vmatprep.mubr.bf16.mxu0 0
  %5140 = vmatmul.mubr.bf16.gmra.mrb[0].mxu0 %v5042
  %v5141 = vpop.f32.mrb[0].mxu0
  %v5142 = vadd.f32 0.0, %v5141
  %v5143 = vpop.f32.mrb[0].mxu0
  %v5144 = vpop.f32.mrb[0].mxu0
  %v5145 = vadd.f32 0.0, %v5144
  %v5146 = vpop.f32.mrb[0].mxu0
  %5147 = vmatprep.mubr.bf16.mxu0 0
  %5148 = vmatmul.mubr.bf16.gmra.mrb[0].mxu0 %v5045
  %v5149 = vpop.f32.mrb[0].mxu0
  %v5150 = vadd.f32 0.0, %v5149
  %v5151 = vpop.f32.mrb[0].mxu0
  %v5152 = vpop.f32.mrb[0].mxu0
  %v5153 = vadd.f32 0.0, %v5152
  %v5154 = vpop.f32.mrb[0].mxu0
  %5155 = vmatprep.mubr.bf16.mxu0 0
  %5156 = vmatmul.mubr.bf16.gmra.mrb[0].mxu0 %v5048
  %v5157 = vpop.f32.mrb[0].mxu0
  %v5158 = vadd.f32 0.0, %v5157
  %v5159 = vpop.f32.mrb[0].mxu0
  %v5160 = vpop.f32.mrb[0].mxu0
  %v5161 = vadd.f32 0.0, %v5160
  %v5162 = vpop.f32.mrb[0].mxu0
  %5163 = vmatprep.mubr.bf16.mxu0 0
  %5164 = vmatmul.mubr.bf16.gmra.mrb[0].mxu0 %v5051
  %v5165 = vpop.f32.mrb[0].mxu0
  %v5166 = vadd.f32 0.0, %v5165
  %v5167 = vpop.f32.mrb[0].mxu0
  %v5168 = vpop.f32.mrb[0].mxu0
  %v5169 = vadd.f32 0.0, %v5168
  %v5170 = vpop.f32.mrb[0].mxu0
  %5171 = vmatprep.mubr.bf16.mxu0 0
  %5172 = vmatmul.mubr.bf16.gmra.mrb[0].mxu0 %v5054
  %v5173 = vpop.f32.mrb[0].mxu0
  %v5174 = vadd.f32 0.0, %v5173
  %v5175 = vpop.f32.mrb[0].mxu0
  %v5176 = vpop.f32.mrb[0].mxu0
  %v5177 = vadd.f32 0.0, %v5176
  %v5178 = vpop.f32.mrb[0].mxu0
  %5179 = vmatprep.mubr.bf16.mxu0 0
  %5180 = vmatmul.mubr.bf16.gmra.mrb[0].mxu0 %v5057
  %v5181 = vpop.f32.mrb[0].mxu0
  %v5182 = vadd.f32 0.0, %v5181
  %v5183 = vpop.f32.mrb[0].mxu0
  %v5184 = vpop.f32.mrb[0].mxu0
  %v5185 = vadd.f32 0.0, %v5184
  %v5186 = vpop.f32.mrb[0].mxu0
  %5187 = vmatprep.mubr.bf16.mxu0 0
  %5188 = vmatmul.mubr.bf16.gmra.mrb[0].mxu0 %v5060
  %v5189 = vpop.f32.mrb[0].mxu0
  %v5190 = vadd.f32 0.0, %v5189
  %v5191 = vpop.f32.mrb[0].mxu0
  %v5192 = vpop.f32.mrb[0].mxu0
  %v5193 = vadd.f32 0.0, %v5192
  %v5194 = vpop.f32.mrb[0].mxu0
  %5195 = vmatprep.mubr.bf16.mxu0 0
  %5196 = vmatmul.mubr.bf16.gmra.mrb[0].mxu0 %v5063
  %v5197 = vpop.f32.mrb[0].mxu0
  %v5198 = vadd.f32 0.0, %v5197
  %v5199 = vpop.f32.mrb[0].mxu0
  %v5200 = vpop.f32.mrb[0].mxu0
  %v5201 = vadd.f32 0.0, %v5200
  %v5202 = vpop.f32.mrb[0].mxu0
  %5203 = vmatprep.mubr.bf16.mxu0 0
  %5204 = vmatmul.mubr.bf16.gmra.mrb[0].mxu0 %v5066
  %v5205 = vpop.f32.mrb[0].mxu0
  %v5206 = vadd.f32 0.0, %v5205
  %v5207 = vpop.f32.mrb[0].mxu0
  %v5208 = vpop.f32.mrb[0].mxu0
  %v5209 = vadd.f32 0.0, %v5208
  %v5210 = vpop.f32.mrb[0].mxu0
  %5211 = vmatprep.mubr.bf16.mxu0 0
  %5212 = vmatmul.mubr.bf16.gmra.mrb[0].mxu0 %v5069
  %v5213 = vpop.f32.mrb[0].mxu0
  %v5214 = vadd.f32 0.0, %v5213
  %v5215 = vpop.f32.mrb[0].mxu0
  %v5216 = vpop.f32.mrb[0].mxu0
  %v5217 = vadd.f32 0.0, %v5216
  %v5218 = vpop.f32.mrb[0].mxu0
  %5219 = vmatprep.mubr.bf16.mxu0 0
  %5220 = vmatmul.mubr.bf16.gmra.mrb[0].mxu0 %v5072
  %v5221 = vpop.f32.mrb[0].mxu0
  %v5222 = vadd.f32 0.0, %v5221
  %v5223 = vpop.f32.mrb[0].mxu0
  %v5224 = vpop.f32.mrb[0].mxu0
  %v5225 = vadd.f32 0.0, %v5224
  %v5226 = vpop.f32.mrb[0].mxu0
  %5227 = vmatprep.mubr.bf16.mxu0 0
  %5228 = vmatmul.mubr.bf16.gmra.mrb[0].mxu0 %v5075
  %v5229 = vpop.f32.mrb[0].mxu0
  %v5230 = vadd.f32 0.0, %v5229
  %v5231 = vpop.f32.mrb[0].mxu0
  %v5232 = vpop.f32.mrb[0].mxu0
  %v5233 = vadd.f32 0.0, %v5232
  %v5234 = vpop.f32.mrb[0].mxu0
  %5235 = vmatprep.mubr.bf16.mxu0 0
  %5236 = vmatmul.mubr.bf16.gmra.mrb[0].mxu0 %v5078
  %v5237 = vpop.f32.mrb[0].mxu0
  %v5238 = vadd.f32 0.0, %v5237
  %v5239 = vpop.f32.mrb[0].mxu0
  %v5240 = vpop.f32.mrb[0].mxu0
  %v5241 = vadd.f32 0.0, %v5240
  %v5242 = vpop.f32.mrb[0].mxu0
  %5243 = vdwg.mxu0
  %v5244 = vadd.f32 %v4951, %v5118
  %v5245 = vadd.f32 %v4952, %v5121
  %v5246 = vadd.f32 %v4953, %v5126
  %v5247 = vadd.f32 %v4954, %v5129
  %v5248 = vadd.f32 %v4955, %v5134
  %v5249 = vadd.f32 %v4956, %v5137
  %v5250 = vadd.f32 %v4957, %v5142
  %v5251 = vadd.f32 %v4958, %v5145
  %v5252 = vadd.f32 %v4959, %v5150
  %v5253 = vadd.f32 %v4960, %v5153
  %v5254 = vadd.f32 %v4961, %v5158
  %v5255 = vadd.f32 %v4962, %v5161
  %v5256 = vadd.f32 %v4963, %v5166
  %v5257 = vadd.f32 %v4964, %v5169
  %v5258 = vadd.f32 %v4965, %v5174
  %v5259 = vadd.f32 %v4966, %v5177
  %v5260 = vadd.f32 %v4967, %v5182
  %v5261 = vadd.f32 %v4968, %v5185
  %v5262 = vadd.f32 %v4969, %v5190
  %v5263 = vadd.f32 %v4970, %v5193
  %v5264 = vadd.f32 %v4971, %v5198
  %v5265 = vadd.f32 %v4972, %v5201
  %v5266 = vadd.f32 %v4973, %v5206
  %v5267 = vadd.f32 %v4974, %v5209
  %v5268 = vadd.f32 %v4975, %v5214
  %v5269 = vadd.f32 %v4976, %v5217
  %v5270 = vadd.f32 %v4977, %v5222
  %v5271 = vadd.f32 %v4978, %v5225
  %v5272 = vadd.f32 %v4979, %v5230
  %v5273 = vadd.f32 %v4980, %v5233
  %v5274 = vadd.f32 %v4981, %v5238
  %v5275 = vadd.f32 %v4982, %v5241
  %v5276 = vadd.f32 %v5244, %v2603
  %v5277 = vadd.f32 %v5245, %v2603
  %v5278 = vadd.f32 %v5246, %v2603
  %v5279 = vadd.f32 %v5247, %v2603
  %v5280 = vadd.f32 %v5248, %v2603
  %v5281 = vadd.f32 %v5249, %v2603
  %v5282 = vadd.f32 %v5250, %v2603
  %v5283 = vadd.f32 %v5251, %v2603
  %v5284 = vadd.f32 %v5252, %v2603
  %v5285 = vadd.f32 %v5253, %v2603
  %v5286 = vadd.f32 %v5254, %v2603
  %v5287 = vadd.f32 %v5255, %v2603
  %v5288 = vadd.f32 %v5256, %v2603
  %v5289 = vadd.f32 %v5257, %v2603
  %v5290 = vadd.f32 %v5258, %v2603
  %v5291 = vadd.f32 %v5259, %v2603
  %v5292 = vadd.f32 %v5260, %v2603
  %v5293 = vadd.f32 %v5261, %v2603
  %v5294 = vadd.f32 %v5262, %v2603
  %v5295 = vadd.f32 %v5263, %v2603
  %v5296 = vadd.f32 %v5264, %v2603
  %v5297 = vadd.f32 %v5265, %v2603
  %v5298 = vadd.f32 %v5266, %v2603
  %v5299 = vadd.f32 %v5267, %v2603
  %v5300 = vadd.f32 %v5268, %v2603
  %v5301 = vadd.f32 %v5269, %v2603
  %v5302 = vadd.f32 %v5270, %v2603
  %v5303 = vadd.f32 %v5271, %v2603
  %v5304 = vadd.f32 %v5272, %v2603
  %v5305 = vadd.f32 %v5273, %v2603
  %v5306 = vadd.f32 %v5274, %v2603
  %v5307 = vadd.f32 %v5275, %v2603
  %v5308 = vmax.f32 %v5276, 0.0
  %v5309 = vmax.f32 %v5277, 0.0
  %v5310 = vmax.f32 %v5278, 0.0
  %v5311 = vmax.f32 %v5279, 0.0
  %v5312 = vmax.f32 %v5280, 0.0
  %v5313 = vmax.f32 %v5281, 0.0
  %v5314 = vmax.f32 %v5282, 0.0
  %v5315 = vmax.f32 %v5283, 0.0
  %v5316 = vmax.f32 %v5284, 0.0
  %v5317 = vmax.f32 %v5285, 0.0
  %v5318 = vmax.f32 %v5286, 0.0
  %v5319 = vmax.f32 %v5287, 0.0
  %v5320 = vmax.f32 %v5288, 0.0
  %v5321 = vmax.f32 %v5289, 0.0
  %v5322 = vmax.f32 %v5290, 0.0
  %v5323 = vmax.f32 %v5291, 0.0
  %v5324 = vmax.f32 %v5292, 0.0
  %v5325 = vmax.f32 %v5293, 0.0
  %v5326 = vmax.f32 %v5294, 0.0
  %v5327 = vmax.f32 %v5295, 0.0
  %v5328 = vmax.f32 %v5296, 0.0
  %v5329 = vmax.f32 %v5297, 0.0
  %v5330 = vmax.f32 %v5298, 0.0
  %v5331 = vmax.f32 %v5299, 0.0
  %v5332 = vmax.f32 %v5300, 0.0
  %v5333 = vmax.f32 %v5301, 0.0
  %v5334 = vmax.f32 %v5302, 0.0
  %v5335 = vmax.f32 %v5303, 0.0
  %v5336 = vmax.f32 %v5304, 0.0
  %v5337 = vmax.f32 %v5305, 0.0
  %v5338 = vmax.f32 %v5306, 0.0
  %v5339 = vmax.f32 %v5307, 0.0
  %s5340 = scalar_lea.vmem %s3, 256
  %5341 = vst.msk [vmem:[%s5340] sm:$0xff] %vm2669, %v5308
  %5342 = vst.msk [vmem:[%s5340 + $0x8] sm:$0xff] %vm2669, %v5309
  %5343 = vst.msk [vmem:[%s5340 + $0x10] sm:$0xff] %vm2669, %v5310
  %5344 = vst.msk [vmem:[%s5340 + $0x18] sm:$0xff] %vm2669, %v5311
  %5345 = vst.msk [vmem:[%s5340 + $0x20] sm:$0xff] %vm2669, %v5312
  %5346 = vst.msk [vmem:[%s5340 + $0x28] sm:$0xff] %vm2669, %v5313
  %5347 = vst.msk [vmem:[%s5340 + $0x30] sm:$0xff] %vm2669, %v5314
  %5348 = vst.msk [vmem:[%s5340 + $0x38] sm:$0xff] %vm2669, %v5315
  %5349 = vst.msk [vmem:[%s5340 + $0x40] sm:$0xff] %vm2669, %v5316
  %5350 = vst.msk [vmem:[%s5340 + $0x48] sm:$0xff] %vm2669, %v5317
  %5351 = vst.msk [vmem:[%s5340 + $0x50] sm:$0xff] %vm2669, %v5318
  %5352 = vst.msk [vmem:[%s5340 + $0x58] sm:$0xff] %vm2669, %v5319
  %5353 = vst.msk [vmem:[%s5340 + $0x60] sm:$0xff] %vm2669, %v5320
  %5354 = vst.msk [vmem:[%s5340 + $0x68] sm:$0xff] %vm2669, %v5321
  %5355 = vst.msk [vmem:[%s5340 + $0x70] sm:$0xff] %vm2669, %v5322
  %5356 = vst.msk [vmem:[%s5340 + $0x78] sm:$0xff] %vm2669, %v5323
  %5357 = vst.msk [vmem:[%s5340 + $0x80] sm:$0xff] %vm2669, %v5324
  %5358 = vst.msk [vmem:[%s5340 + $0x88] sm:$0xff] %vm2669, %v5325
  %5359 = vst.msk [vmem:[%s5340 + $0x90] sm:$0xff] %vm2669, %v5326
  %5360 = vst.msk [vmem:[%s5340 + $0x98] sm:$0xff] %vm2669, %v5327
  %5361 = vst.msk [vmem:[%s5340 + $0xa0] sm:$0xff] %vm2669, %v5328
  %5362 = vst.msk [vmem:[%s5340 + $0xa8] sm:$0xff] %vm2669, %v5329
  %5363 = vst.msk [vmem:[%s5340 + $0xb0] sm:$0xff] %vm2669, %v5330
  %5364 = vst.msk [vmem:[%s5340 + $0xb8] sm:$0xff] %vm2669, %v5331
  %5365 = vst.msk [vmem:[%s5340 + $0xc0] sm:$0xff] %vm2669, %v5332
  %5366 = vst.msk [vmem:[%s5340 + $0xc8] sm:$0xff] %vm2669, %v5333
  %5367 = vst.msk [vmem:[%s5340 + $0xd0] sm:$0xff] %vm2669, %v5334
  %5368 = vst.msk [vmem:[%s5340 + $0xd8] sm:$0xff] %vm2669, %v5335
  %5369 = vst.msk [vmem:[%s5340 + $0xe0] sm:$0xff] %vm2669, %v5336
  %5370 = vst.msk [vmem:[%s5340 + $0xe8] sm:$0xff] %vm2669, %v5337
  %5371 = vst.msk [vmem:[%s5340 + $0xf0] sm:$0xff] %vm2669, %v5338
  %5372 = vst.msk [vmem:[%s5340 + $0xf8] sm:$0xff] %vm2669, %v5339
  // Predicated region
  $region14: #{tpu_custom_call.1} parent=0 // pred_check
    _
  $region15: #{tpu_custom_call.1} parent=0 // pred_check_branch
    %5374 = sbr.rel (0) target = $region17
  $region16: #{tpu_custom_call.1} parent=0 // pred_region
    _
  $region17: #{tpu_custom_call.1} parent=0 // pred_fallthru
    _
  // Predicated region
  $region18: #{tpu_custom_call.1} parent=0 // pred_check
    _
  $region19: #{tpu_custom_call.1} parent=0 // pred_check_branch
    %5376 = sbr.rel (0) target = $region21
  $region20: #{tpu_custom_call.1} parent=0 // pred_region
    _
  $region21: #{tpu_custom_call.1} parent=0 // pred_fallthru
    _

</llo_original>
